<compile_context>
chip_gen: v7x
topology: tpu7x:2x2x1
jax: 0.10.0
libtpu: 0.0.40
codegen_flags: <defaults>
</compile_context>

<pallas_src>
import math

import jax
import jax.numpy as jnp
from jax import lax
from jax.experimental import pallas as pl
from jax.experimental.pallas import tpu as pltpu

# ---------------- problem dims (small but consistent with the module) --------
B = 2           # batch
C_IN = 4        # obs channels
H_IN = 21       # obs spatial (21 -> 10 -> 8 -> 6 -> 4 through the conv stack)
C = 32          # conv width (fixed by the module)
K = 3           # kernel size

S1 = (H_IN - K) // 2 + 1              # 10  (conv1 output, stride 2)
S2, S3, S4 = S1 - 2, S1 - 4, S1 - 6   # 8, 6, 4
REPR_DIM = C * S4 * S4                # per-image flattened feature dim (=512)
P4 = S4 * S4                          # 16 valid spatial positions per image

N1 = B * S1 * S1                      # canvas rows = layer-1 output rows (200)


def _valid_rows(s_out):
    # rows of the flattened [B, S1, S1] canvas needed to cover every valid
    # output position (b, i, j) with i, j < s_out
    return (B - 1) * S1 * S1 + (s_out - 1) * (S1 + 1) + 1


R2, R3, R4 = _valid_rows(S2), _valid_rows(S3), _valid_rows(S4)   # 178, 156, 134

# weight-slab row layout: [ conv1 (36 rows, padded to 48) | 3 * [288, 32] blocks ]
W1_ROWS = K * K * C_IN                # 36
W1_PAD = 48                           # multiple of 16 -> bf16-tile-aligned block starts
TAP = K * K * C                       # 288 rows per stride-1 layer block
SLAB_ROWS = W1_PAD + 3 * TAP          # 912


# ---------------------------------------------------------------------------
# Kernel
# ---------------------------------------------------------------------------
def encoder_kernel(p_ref, w_ref, b_ref, out_ref, canvas, xcol, tsc):
    f32, bf16 = jnp.float32, jnp.bfloat16
    dot = lambda a, b: jnp.dot(a, b, preferred_element_type=f32)

    # ---- layer 1: stride-2 conv as one patch matmul (norm folded into W1/b1) --
    y = dot(p_ref[...], w_ref[0:W1_PAD, :]) + b_ref[0:1, :]
    canvas[...] = jnp.maximum(y, 0.0)                          # [N1, C] f32

    # ---- layers 2..4: ONE deep [R, 288] @ [288, 32] matmul per layer ----------
    y_last = None
    for l, R in enumerate((R2, R3, R4)):
        # build the im2col slab from the 9 constant-row-shifted canvas views
        for t in range(K * K):
            dy, dx = divmod(t, K)
            off = dy * S1 + dx
            xcol[0:R, t * C:(t + 1) * C] = canvas[off:off + R, :]
        w0 = W1_PAD + l * TAP
        y = dot(xcol[0:R, :].astype(bf16), w_ref[w0:w0 + TAP, :]) + b_ref[l + 1:l + 2, :]
        y = jnp.maximum(y, 0.0)                                # [R, C] f32
        if l < 2:
            canvas[0:R, :] = y                                 # feed next layer
        else:
            y_last = y                                         # [R4, C]

    # ---- fused epilogue: valid-region gather + NCHW flatten, lane-dense out ---
    # tsc[b*16 + i*4 + j, c] = conv4 output at (b, c, i, j)
    tsc[...] = jnp.zeros_like(tsc)
    for b in range(B):
        for i in range(S4):
            r = b * S1 * S1 + i * S1
            dst = b * P4 + i * S4
            tsc[dst:dst + S4, 0:C] = y_last[r:r + S4, :]
    tt = tsc[...].T                                            # [128, B*P4]; rows 0..C-1 used
    # out[b, c*16 + p] = tsc[b*16 + p, c]  (PyTorch NCHW .view(B, -1) order)
    for b in range(B):
        for c in range(C):
            out_ref[b:b + 1, c * P4:(c + 1) * P4] = tt[c:c + 1, b * P4:(b + 1) * P4]


# ---------------------------------------------------------------------------
# Wrapper (layout-only work outside the kernel)
# ---------------------------------------------------------------------------
def _pack_params(ws, bs):
    """Pack PyTorch-layout conv weights [Cout,Cin,3,3] + biases into two slabs.

    Folds the obs/255 - 0.5 normalization into the conv1 block, and casts the
    weight slab to bf16 (f32 accumulation happens in the kernel).
    """
    w1 = jnp.transpose(ws[0], (2, 3, 1, 0)).reshape(W1_ROWS, C)     # row=(dy,dx,ci)
    slab = jnp.zeros((SLAB_ROWS, C), jnp.float32)
    slab = slab.at[:W1_ROWS].set(w1 / 255.0)                        # fold /255
    for l in range(3):
        wl = jnp.transpose(ws[l + 1], (2, 3, 1, 0)).reshape(TAP, C)
        slab = slab.at[W1_PAD + l * TAP: W1_PAD + (l + 1) * TAP].set(wl)
    b1 = bs[0] - 0.5 * jnp.sum(w1, axis=0)                          # fold -0.5
    b_slab = jnp.stack([b1, bs[1], bs[2], bs[3]], axis=0).astype(jnp.float32)
    return slab.astype(jnp.bfloat16), b_slab


def _extract_patches(obs):
    """[B, C_IN, H, W] raw pixels -> [B*S1*S1, W1_PAD] stride-2 patches (pure gather)."""
    taps = []
    for dy in range(K):
        for dx in range(K):
            s = obs[:, :, dy:dy + 2 * (S1 - 1) + 1:2, dx:dx + 2 * (S1 - 1) + 1:2]
            taps.append(jnp.transpose(s, (0, 2, 3, 1)))             # [B, S1, S1, C_IN]
    p = jnp.stack(taps, axis=3).reshape(B * S1 * S1, K * K * C_IN)  # col = t*C_IN + ci
    return jnp.pad(p, ((0, 0), (0, W1_PAD - W1_ROWS)))              # zero-padded K dim


@jax.jit
def encoder_forward(obs, w_slab, b_slab):
    patches = _extract_patches(obs).astype(jnp.bfloat16)            # raw pixels, bf16
    flops = 2 * (N1 * W1_PAD * C + (R2 + R3 + R4) * TAP * C)
    bytes_accessed = (patches.size * 2 + w_slab.size * 2 + b_slab.size * 4
                      + B * REPR_DIM * 4)

    return pl.pallas_call(
        encoder_kernel,
        out_shape=jax.ShapeDtypeStruct((B, REPR_DIM), jnp.float32),
        in_specs=[pl.BlockSpec(memory_space=pltpu.MemorySpace.VMEM)] * 3,
        out_specs=pl.BlockSpec(memory_space=pltpu.MemorySpace.VMEM),
        scratch_shapes=[
            pltpu.VMEM((N1, C), jnp.float32),             # activation canvas
            pltpu.VMEM((N1, K * K * C), jnp.float32),     # im2col slab
            pltpu.VMEM((B * P4, 128), jnp.float32),       # epilogue transpose buffer
        ],
        cost_estimate=pl.CostEstimate(flops=flops, transcendentals=0,
                                      bytes_accessed=bytes_accessed),
    )(patches, w_slab, b_slab)


# ---------------------------------------------------------------------------
# Pure-JAX reference (matches the PyTorch module's forward)
# ---------------------------------------------------------------------------
def encoder_ref(obs, ws, bs):
    x = obs.astype(jnp.float32) / 255.0 - 0.5
    strides = (2, 1, 1, 1)
    for i in range(4):
        x = lax.conv_general_dilated(x, ws[i], (strides[i], strides[i]), "VALID",
                                     dimension_numbers=("NCHW", "OIHW", "NCHW"))
        x = jnp.maximum(x + bs[i].reshape(1, -1, 1, 1), 0.0)
    return x.reshape(x.shape[0], -1)


if __name__ == "__main__":
    key = jax.random.PRNGKey(0)
    k_obs, *k_w = jax.random.split(key, 9)

    # pixel-valued observation [B, C_IN, H, W]
    obs = jax.random.uniform(k_obs, (B, C_IN, H_IN, H_IN), jnp.float32,
                             minval=0.0, maxval=255.0)

    # deterministic synthetic conv parameters in PyTorch layout [Cout, Cin, 3, 3]
    ws, bs = [], []
    cins = [C_IN, C, C, C]
    for i in range(4):
        fan_in = cins[i] * K * K
        w = jax.random.normal(k_w[2 * i], (C, cins[i], K, K),
                              jnp.float32) / math.sqrt(fan_in)
        b = 0.01 * jax.random.normal(k_w[2 * i + 1], (C,), jnp.float32)
        ws.append(w)
        bs.append(b)

    w_slab, b_slab = _pack_params(ws, bs)       # packing/folding done once, outside

    out = encoder_forward(obs, w_slab, b_slab)
    jax.block_until_ready(out)

    ref = encoder_ref(obs, ws, bs)
    assert out.shape == (B, REPR_DIM)
    assert bool(jnp.all(jnp.isfinite(out)))
    err = float(jnp.max(jnp.abs(out - ref)))
    scale = float(jnp.max(jnp.abs(ref))) + 1e-6
    assert err <= 5e-2 * max(1.0, scale), f"max abs err {err} (scale {scale})"
    print("KERNEL_OK")
</pallas_src>

<mosaic_0001>
module attributes {stable_mosaic.version = 11 : i64} {
  func.func @encoder_kernel(%arg0: memref<200x48xbf16, #tpu.memory_space<vmem>>, %arg1: memref<912x32xbf16, #tpu.memory_space<vmem>>, %arg2: memref<4x32xf32, #tpu.memory_space<vmem>>, %arg3: memref<2x512xf32, #tpu.memory_space<vmem>>, %arg4: memref<200x32xf32, #tpu.memory_space<vmem>>, %arg5: memref<200x288xf32, #tpu.memory_space<vmem>>, %arg6: memref<32x128xf32, #tpu.memory_space<vmem>>) attributes {dimension_semantics = [], scalar_prefetch = 0 : i64, scratch_operands = 3 : i64, tpu.core_type = #tpu.core_type<tc>} {
    %c0 = arith.constant 0 : index
    %c0_0 = arith.constant 0 : index
    %0 = vector.load %arg0[%c0, %c0_0] : memref<200x48xbf16, #tpu.memory_space<vmem>>, vector<200x48xbf16>
    %c0_1 = arith.constant 0 : index
    %c0_2 = arith.constant 0 : index
    %1 = vector.load %arg1[%c0_1, %c0_2] : memref<912x32xbf16, #tpu.memory_space<vmem>>, vector<48x32xbf16>
    %cst = arith.constant dense<0.000000e+00> : vector<200x32xf32>
    %2 = tpu.matmul %0, %1, %cst {dimension_numbers = #tpu.dot_dimension_numbers<[1], [0], [0], [1], [0, 0, 1, 1], [], []>} : vector<200x48xbf16>, vector<48x32xbf16>, vector<200x32xf32> -> vector<200x32xf32>
    %c0_3 = arith.constant 0 : index
    %c0_4 = arith.constant 0 : index
    %3 = vector.load %arg2[%c0_3, %c0_4] : memref<4x32xf32, #tpu.memory_space<vmem>>, vector<1x32xf32>
    %4 = vector.broadcast %3 : vector<1x32xf32> to vector<200x32xf32>
    %5 = arith.addf %2, %4 : vector<200x32xf32>
    %cst_5 = arith.constant 0.000000e+00 : f32
    %6 = vector.broadcast %cst_5 : f32 to vector<200x32xf32>
    %7 = arith.maximumf %5, %6 : vector<200x32xf32>
    %c0_6 = arith.constant 0 : index
    %c0_7 = arith.constant 0 : index
    %8 = vector.load %arg4[%c0_6, %c0_7] : memref<200x32xf32, #tpu.memory_space<vmem>>, vector<200x32xf32>
    tpu.vector_store %arg4[%c0_6, %c0_7], %7 {strides = array<i32>} : memref<200x32xf32, #tpu.memory_space<vmem>>, vector<200x32xf32>,
    %c0_8 = arith.constant 0 : index
    %c0_9 = arith.constant 0 : index
    %9 = vector.load %arg4[%c0_8, %c0_9] : memref<200x32xf32, #tpu.memory_space<vmem>>, vector<178x32xf32>
    %c0_10 = arith.constant 0 : index
    %c0_11 = arith.constant 0 : index
    %10 = vector.load %arg5[%c0_10, %c0_11] : memref<200x288xf32, #tpu.memory_space<vmem>>, vector<178x32xf32>
    tpu.vector_store %arg5[%c0_10, %c0_11], %9 {strides = array<i32>} : memref<200x288xf32, #tpu.memory_space<vmem>>, vector<178x32xf32>,
    %c1 = arith.constant 1 : index
    %c0_12 = arith.constant 0 : index
    %11 = vector.load %arg4[%c1, %c0_12] : memref<200x32xf32, #tpu.memory_space<vmem>>, vector<178x32xf32>
    %c0_13 = arith.constant 0 : index
    %c32 = arith.constant 32 : index
    %12 = vector.load %arg5[%c0_13, %c32] : memref<200x288xf32, #tpu.memory_space<vmem>>, vector<178x32xf32>
    tpu.vector_store %arg5[%c0_13, %c32], %11 {strides = array<i32>} : memref<200x288xf32, #tpu.memory_space<vmem>>, vector<178x32xf32>,
    %c2 = arith.constant 2 : index
    %c0_14 = arith.constant 0 : index
    %13 = vector.load %arg4[%c2, %c0_14] : memref<200x32xf32, #tpu.memory_space<vmem>>, vector<178x32xf32>
    %c0_15 = arith.constant 0 : index
    %c64 = arith.constant 64 : index
    %14 = vector.load %arg5[%c0_15, %c64] : memref<200x288xf32, #tpu.memory_space<vmem>>, vector<178x32xf32>
    tpu.vector_store %arg5[%c0_15, %c64], %13 {strides = array<i32>} : memref<200x288xf32, #tpu.memory_space<vmem>>, vector<178x32xf32>,
    %c10 = arith.constant 10 : index
    %c0_16 = arith.constant 0 : index
    %15 = vector.load %arg4[%c10, %c0_16] : memref<200x32xf32, #tpu.memory_space<vmem>>, vector<178x32xf32>
    %c0_17 = arith.constant 0 : index
    %c96 = arith.constant 96 : index
    %16 = vector.load %arg5[%c0_17, %c96] : memref<200x288xf32, #tpu.memory_space<vmem>>, vector<178x32xf32>
    tpu.vector_store %arg5[%c0_17, %c96], %15 {strides = array<i32>} : memref<200x288xf32, #tpu.memory_space<vmem>>, vector<178x32xf32>,
    %c11 = arith.constant 11 : index
    %c0_18 = arith.constant 0 : index
    %17 = vector.load %arg4[%c11, %c0_18] : memref<200x32xf32, #tpu.memory_space<vmem>>, vector<178x32xf32>
    %c0_19 = arith.constant 0 : index
    %c128 = arith.constant 128 : index
    %18 = vector.load %arg5[%c0_19, %c128] : memref<200x288xf32, #tpu.memory_space<vmem>>, vector<178x32xf32>
    tpu.vector_store %arg5[%c0_19, %c128], %17 {strides = array<i32>} : memref<200x288xf32, #tpu.memory_space<vmem>>, vector<178x32xf32>,
    %c12 = arith.constant 12 : index
    %c0_20 = arith.constant 0 : index
    %19 = vector.load %arg4[%c12, %c0_20] : memref<200x32xf32, #tpu.memory_space<vmem>>, vector<178x32xf32>
    %c0_21 = arith.constant 0 : index
    %c160 = arith.constant 160 : index
    %20 = vector.load %arg5[%c0_21, %c160] : memref<200x288xf32, #tpu.memory_space<vmem>>, vector<178x32xf32>
    tpu.vector_store %arg5[%c0_21, %c160], %19 {strides = array<i32>} : memref<200x288xf32, #tpu.memory_space<vmem>>, vector<178x32xf32>,
    %c20 = arith.constant 20 : index
    %c0_22 = arith.constant 0 : index
    %21 = vector.load %arg4[%c20, %c0_22] : memref<200x32xf32, #tpu.memory_space<vmem>>, vector<178x32xf32>
    %c0_23 = arith.constant 0 : index
    %c192 = arith.constant 192 : index
    %22 = vector.load %arg5[%c0_23, %c192] : memref<200x288xf32, #tpu.memory_space<vmem>>, vector<178x32xf32>
    tpu.vector_store %arg5[%c0_23, %c192], %21 {strides = array<i32>} : memref<200x288xf32, #tpu.memory_space<vmem>>, vector<178x32xf32>,
    %c21 = arith.constant 21 : index
    %c0_24 = arith.constant 0 : index
    %23 = vector.load %arg4[%c21, %c0_24] : memref<200x32xf32, #tpu.memory_space<vmem>>, vector<178x32xf32>
    %c0_25 = arith.constant 0 : index
    %c224 = arith.constant 224 : index
    %24 = vector.load %arg5[%c0_25, %c224] : memref<200x288xf32, #tpu.memory_space<vmem>>, vector<178x32xf32>
    tpu.vector_store %arg5[%c0_25, %c224], %23 {strides = array<i32>} : memref<200x288xf32, #tpu.memory_space<vmem>>, vector<178x32xf32>,
    %c22 = arith.constant 22 : index
    %c0_26 = arith.constant 0 : index
    %25 = vector.load %arg4[%c22, %c0_26] : memref<200x32xf32, #tpu.memory_space<vmem>>, vector<178x32xf32>
    %c0_27 = arith.constant 0 : index
    %c256 = arith.constant 256 : index
    %26 = vector.load %arg5[%c0_27, %c256] : memref<200x288xf32, #tpu.memory_space<vmem>>, vector<178x32xf32>
    tpu.vector_store %arg5[%c0_27, %c256], %25 {strides = array<i32>} : memref<200x288xf32, #tpu.memory_space<vmem>>, vector<178x32xf32>,
    %c0_28 = arith.constant 0 : index
    %c0_29 = arith.constant 0 : index
    %27 = vector.load %arg5[%c0_28, %c0_29] : memref<200x288xf32, #tpu.memory_space<vmem>>, vector<178x288xf32>
    %28 = arith.truncf %27 : vector<178x288xf32> to vector<178x288xbf16>
    %c48 = arith.constant 48 : index
    %c0_30 = arith.constant 0 : index
    %29 = vector.load %arg1[%c48, %c0_30] : memref<912x32xbf16, #tpu.memory_space<vmem>>, vector<288x32xbf16>
    %cst_31 = arith.constant dense<0.000000e+00> : vector<178x32xf32>
    %30 = tpu.matmul %28, %29, %cst_31 {dimension_numbers = #tpu.dot_dimension_numbers<[1], [0], [0], [1], [0, 0, 1, 1], [], []>} : vector<178x288xbf16>, vector<288x32xbf16>, vector<178x32xf32> -> vector<178x32xf32>
    %c1_32 = arith.constant 1 : index
    %c0_33 = arith.constant 0 : index
    %31 = vector.load %arg2[%c1_32, %c0_33] : memref<4x32xf32, #tpu.memory_space<vmem>>, vector<1x32xf32>
    %32 = vector.broadcast %31 : vector<1x32xf32> to vector<178x32xf32>
    %33 = arith.addf %30, %32 : vector<178x32xf32>
    %cst_34 = arith.constant 0.000000e+00 : f32
    %34 = vector.broadcast %cst_34 : f32 to vector<178x32xf32>
    %35 = arith.maximumf %33, %34 : vector<178x32xf32>
    %c0_35 = arith.constant 0 : index
    %c0_36 = arith.constant 0 : index
    %36 = vector.load %arg4[%c0_35, %c0_36] : memref<200x32xf32, #tpu.memory_space<vmem>>, vector<178x32xf32>
    tpu.vector_store %arg4[%c0_35, %c0_36], %35 {strides = array<i32>} : memref<200x32xf32, #tpu.memory_space<vmem>>, vector<178x32xf32>,
    %c0_37 = arith.constant 0 : index
    %c0_38 = arith.constant 0 : index
    %37 = vector.load %arg4[%c0_37, %c0_38] : memref<200x32xf32, #tpu.memory_space<vmem>>, vector<156x32xf32>
    %c0_39 = arith.constant 0 : index
    %c0_40 = arith.constant 0 : index
    %38 = vector.load %arg5[%c0_39, %c0_40] : memref<200x288xf32, #tpu.memory_space<vmem>>, vector<156x32xf32>
    tpu.vector_store %arg5[%c0_39, %c0_40], %37 {strides = array<i32>} : memref<200x288xf32, #tpu.memory_space<vmem>>, vector<156x32xf32>,
    %c1_41 = arith.constant 1 : index
    %c0_42 = arith.constant 0 : index
    %39 = vector.load %arg4[%c1_41, %c0_42] : memref<200x32xf32, #tpu.memory_space<vmem>>, vector<156x32xf32>
    %c0_43 = arith.constant 0 : index
    %c32_44 = arith.constant 32 : index
    %40 = vector.load %arg5[%c0_43, %c32_44] : memref<200x288xf32, #tpu.memory_space<vmem>>, vector<156x32xf32>
    tpu.vector_store %arg5[%c0_43, %c32_44], %39 {strides = array<i32>} : memref<200x288xf32, #tpu.memory_space<vmem>>, vector<156x32xf32>,
    %c2_45 = arith.constant 2 : index
    %c0_46 = arith.constant 0 : index
    %41 = vector.load %arg4[%c2_45, %c0_46] : memref<200x32xf32, #tpu.memory_space<vmem>>, vector<156x32xf32>
    %c0_47 = arith.constant 0 : index
    %c64_48 = arith.constant 64 : index
    %42 = vector.load %arg5[%c0_47, %c64_48] : memref<200x288xf32, #tpu.memory_space<vmem>>, vector<156x32xf32>
    tpu.vector_store %arg5[%c0_47, %c64_48], %41 {strides = array<i32>} : memref<200x288xf32, #tpu.memory_space<vmem>>, vector<156x32xf32>,
    %c10_49 = arith.constant 10 : index
    %c0_50 = arith.constant 0 : index
    %43 = vector.load %arg4[%c10_49, %c0_50] : memref<200x32xf32, #tpu.memory_space<vmem>>, vector<156x32xf32>
    %c0_51 = arith.constant 0 : index
    %c96_52 = arith.constant 96 : index
    %44 = vector.load %arg5[%c0_51, %c96_52] : memref<200x288xf32, #tpu.memory_space<vmem>>, vector<156x32xf32>
    tpu.vector_store %arg5[%c0_51, %c96_52], %43 {strides = array<i32>} : memref<200x288xf32, #tpu.memory_space<vmem>>, vector<156x32xf32>,
    %c11_53 = arith.constant 11 : index
    %c0_54 = arith.constant 0 : index
    %45 = vector.load %arg4[%c11_53, %c0_54] : memref<200x32xf32, #tpu.memory_space<vmem>>, vector<156x32xf32>
    %c0_55 = arith.constant 0 : index
    %c128_56 = arith.constant 128 : index
    %46 = vector.load %arg5[%c0_55, %c128_56] : memref<200x288xf32, #tpu.memory_space<vmem>>, vector<156x32xf32>
    tpu.vector_store %arg5[%c0_55, %c128_56], %45 {strides = array<i32>} : memref<200x288xf32, #tpu.memory_space<vmem>>, vector<156x32xf32>,
    %c12_57 = arith.constant 12 : index
    %c0_58 = arith.constant 0 : index
    %47 = vector.load %arg4[%c12_57, %c0_58] : memref<200x32xf32, #tpu.memory_space<vmem>>, vector<156x32xf32>
    %c0_59 = arith.constant 0 : index
    %c160_60 = arith.constant 160 : index
    %48 = vector.load %arg5[%c0_59, %c160_60] : memref<200x288xf32, #tpu.memory_space<vmem>>, vector<156x32xf32>
    tpu.vector_store %arg5[%c0_59, %c160_60], %47 {strides = array<i32>} : memref<200x288xf32, #tpu.memory_space<vmem>>, vector<156x32xf32>,
    %c20_61 = arith.constant 20 : index
    %c0_62 = arith.constant 0 : index
    %49 = vector.load %arg4[%c20_61, %c0_62] : memref<200x32xf32, #tpu.memory_space<vmem>>, vector<156x32xf32>
    %c0_63 = arith.constant 0 : index
    %c192_64 = arith.constant 192 : index
    %50 = vector.load %arg5[%c0_63, %c192_64] : memref<200x288xf32, #tpu.memory_space<vmem>>, vector<156x32xf32>
    tpu.vector_store %arg5[%c0_63, %c192_64], %49 {strides = array<i32>} : memref<200x288xf32, #tpu.memory_space<vmem>>, vector<156x32xf32>,
    %c21_65 = arith.constant 21 : index
    %c0_66 = arith.constant 0 : index
    %51 = vector.load %arg4[%c21_65, %c0_66] : memref<200x32xf32, #tpu.memory_space<vmem>>, vector<156x32xf32>
    %c0_67 = arith.constant 0 : index
    %c224_68 = arith.constant 224 : index
    %52 = vector.load %arg5[%c0_67, %c224_68] : memref<200x288xf32, #tpu.memory_space<vmem>>, vector<156x32xf32>
    tpu.vector_store %arg5[%c0_67, %c224_68], %51 {strides = array<i32>} : memref<200x288xf32, #tpu.memory_space<vmem>>, vector<156x32xf32>,
    %c22_69 = arith.constant 22 : index
    %c0_70 = arith.constant 0 : index
    %53 = vector.load %arg4[%c22_69, %c0_70] : memref<200x32xf32, #tpu.memory_space<vmem>>, vector<156x32xf32>
    %c0_71 = arith.constant 0 : index
    %c256_72 = arith.constant 256 : index
    %54 = vector.load %arg5[%c0_71, %c256_72] : memref<200x288xf32, #tpu.memory_space<vmem>>, vector<156x32xf32>
    tpu.vector_store %arg5[%c0_71, %c256_72], %53 {strides = array<i32>} : memref<200x288xf32, #tpu.memory_space<vmem>>, vector<156x32xf32>,
    %c0_73 = arith.constant 0 : index
    %c0_74 = arith.constant 0 : index
    %55 = vector.load %arg5[%c0_73, %c0_74] : memref<200x288xf32, #tpu.memory_space<vmem>>, vector<156x288xf32>
    %56 = arith.truncf %55 : vector<156x288xf32> to vector<156x288xbf16>
    %c336 = arith.constant 336 : index
    %c0_75 = arith.constant 0 : index
    %57 = vector.load %arg1[%c336, %c0_75] : memref<912x32xbf16, #tpu.memory_space<vmem>>, vector<288x32xbf16>
    %cst_76 = arith.constant dense<0.000000e+00> : vector<156x32xf32>
    %58 = tpu.matmul %56, %57, %cst_76 {dimension_numbers = #tpu.dot_dimension_numbers<[1], [0], [0], [1], [0, 0, 1, 1], [], []>} : vector<156x288xbf16>, vector<288x32xbf16>, vector<156x32xf32> -> vector<156x32xf32>
    %c2_77 = arith.constant 2 : index
    %c0_78 = arith.constant 0 : index
    %59 = vector.load %arg2[%c2_77, %c0_78] : memref<4x32xf32, #tpu.memory_space<vmem>>, vector<1x32xf32>
    %60 = vector.broadcast %59 : vector<1x32xf32> to vector<156x32xf32>
    %61 = arith.addf %58, %60 : vector<156x32xf32>
    %cst_79 = arith.constant 0.000000e+00 : f32
    %62 = vector.broadcast %cst_79 : f32 to vector<156x32xf32>
    %63 = arith.maximumf %61, %62 : vector<156x32xf32>
    %c0_80 = arith.constant 0 : index
    %c0_81 = arith.constant 0 : index
    %64 = vector.load %arg4[%c0_80, %c0_81] : memref<200x32xf32, #tpu.memory_space<vmem>>, vector<156x32xf32>
    tpu.vector_store %arg4[%c0_80, %c0_81], %63 {strides = array<i32>} : memref<200x32xf32, #tpu.memory_space<vmem>>, vector<156x32xf32>,
    %c0_82 = arith.constant 0 : index
    %c0_83 = arith.constant 0 : index
    %65 = vector.load %arg4[%c0_82, %c0_83] : memref<200x32xf32, #tpu.memory_space<vmem>>, vector<134x32xf32>
    %c0_84 = arith.constant 0 : index
    %c0_85 = arith.constant 0 : index
    %66 = vector.load %arg5[%c0_84, %c0_85] : memref<200x288xf32, #tpu.memory_space<vmem>>, vector<134x32xf32>
    tpu.vector_store %arg5[%c0_84, %c0_85], %65 {strides = array<i32>} : memref<200x288xf32, #tpu.memory_space<vmem>>, vector<134x32xf32>,
    %c1_86 = arith.constant 1 : index
    %c0_87 = arith.constant 0 : index
    %67 = vector.load %arg4[%c1_86, %c0_87] : memref<200x32xf32, #tpu.memory_space<vmem>>, vector<134x32xf32>
    %c0_88 = arith.constant 0 : index
    %c32_89 = arith.constant 32 : index
    %68 = vector.load %arg5[%c0_88, %c32_89] : memref<200x288xf32, #tpu.memory_space<vmem>>, vector<134x32xf32>
    tpu.vector_store %arg5[%c0_88, %c32_89], %67 {strides = array<i32>} : memref<200x288xf32, #tpu.memory_space<vmem>>, vector<134x32xf32>,
    %c2_90 = arith.constant 2 : index
    %c0_91 = arith.constant 0 : index
    %69 = vector.load %arg4[%c2_90, %c0_91] : memref<200x32xf32, #tpu.memory_space<vmem>>, vector<134x32xf32>
    %c0_92 = arith.constant 0 : index
    %c64_93 = arith.constant 64 : index
    %70 = vector.load %arg5[%c0_92, %c64_93] : memref<200x288xf32, #tpu.memory_space<vmem>>, vector<134x32xf32>
    tpu.vector_store %arg5[%c0_92, %c64_93], %69 {strides = array<i32>} : memref<200x288xf32, #tpu.memory_space<vmem>>, vector<134x32xf32>,
    %c10_94 = arith.constant 10 : index
    %c0_95 = arith.constant 0 : index
    %71 = vector.load %arg4[%c10_94, %c0_95] : memref<200x32xf32, #tpu.memory_space<vmem>>, vector<134x32xf32>
    %c0_96 = arith.constant 0 : index
    %c96_97 = arith.constant 96 : index
    %72 = vector.load %arg5[%c0_96, %c96_97] : memref<200x288xf32, #tpu.memory_space<vmem>>, vector<134x32xf32>
    tpu.vector_store %arg5[%c0_96, %c96_97], %71 {strides = array<i32>} : memref<200x288xf32, #tpu.memory_space<vmem>>, vector<134x32xf32>,
    %c11_98 = arith.constant 11 : index
    %c0_99 = arith.constant 0 : index
    %73 = vector.load %arg4[%c11_98, %c0_99] : memref<200x32xf32, #tpu.memory_space<vmem>>, vector<134x32xf32>
    %c0_100 = arith.constant 0 : index
    %c128_101 = arith.constant 128 : index
    %74 = vector.load %arg5[%c0_100, %c128_101] : memref<200x288xf32, #tpu.memory_space<vmem>>, vector<134x32xf32>
    tpu.vector_store %arg5[%c0_100, %c128_101], %73 {strides = array<i32>} : memref<200x288xf32, #tpu.memory_space<vmem>>, vector<134x32xf32>,
    %c12_102 = arith.constant 12 : index
    %c0_103 = arith.constant 0 : index
    %75 = vector.load %arg4[%c12_102, %c0_103] : memref<200x32xf32, #tpu.memory_space<vmem>>, vector<134x32xf32>
    %c0_104 = arith.constant 0 : index
    %c160_105 = arith.constant 160 : index
    %76 = vector.load %arg5[%c0_104, %c160_105] : memref<200x288xf32, #tpu.memory_space<vmem>>, vector<134x32xf32>
    tpu.vector_store %arg5[%c0_104, %c160_105], %75 {strides = array<i32>} : memref<200x288xf32, #tpu.memory_space<vmem>>, vector<134x32xf32>,
    %c20_106 = arith.constant 20 : index
    %c0_107 = arith.constant 0 : index
    %77 = vector.load %arg4[%c20_106, %c0_107] : memref<200x32xf32, #tpu.memory_space<vmem>>, vector<134x32xf32>
    %c0_108 = arith.constant 0 : index
    %c192_109 = arith.constant 192 : index
    %78 = vector.load %arg5[%c0_108, %c192_109] : memref<200x288xf32, #tpu.memory_space<vmem>>, vector<134x32xf32>
    tpu.vector_store %arg5[%c0_108, %c192_109], %77 {strides = array<i32>} : memref<200x288xf32, #tpu.memory_space<vmem>>, vector<134x32xf32>,
    %c21_110 = arith.constant 21 : index
    %c0_111 = arith.constant 0 : index
    %79 = vector.load %arg4[%c21_110, %c0_111] : memref<200x32xf32, #tpu.memory_space<vmem>>, vector<134x32xf32>
    %c0_112 = arith.constant 0 : index
    %c224_113 = arith.constant 224 : index
    %80 = vector.load %arg5[%c0_112, %c224_113] : memref<200x288xf32, #tpu.memory_space<vmem>>, vector<134x32xf32>
    tpu.vector_store %arg5[%c0_112, %c224_113], %79 {strides = array<i32>} : memref<200x288xf32, #tpu.memory_space<vmem>>, vector<134x32xf32>,
    %c22_114 = arith.constant 22 : index
    %c0_115 = arith.constant 0 : index
    %81 = vector.load %arg4[%c22_114, %c0_115] : memref<200x32xf32, #tpu.memory_space<vmem>>, vector<134x32xf32>
    %c0_116 = arith.constant 0 : index
    %c256_117 = arith.constant 256 : index
    %82 = vector.load %arg5[%c0_116, %c256_117] : memref<200x288xf32, #tpu.memory_space<vmem>>, vector<134x32xf32>
    tpu.vector_store %arg5[%c0_116, %c256_117], %81 {strides = array<i32>} : memref<200x288xf32, #tpu.memory_space<vmem>>, vector<134x32xf32>,
    %c0_118 = arith.constant 0 : index
    %c0_119 = arith.constant 0 : index
    %83 = vector.load %arg5[%c0_118, %c0_119] : memref<200x288xf32, #tpu.memory_space<vmem>>, vector<134x288xf32>
    %84 = arith.truncf %83 : vector<134x288xf32> to vector<134x288xbf16>
    %c624 = arith.constant 624 : index
    %c0_120 = arith.constant 0 : index
    %85 = vector.load %arg1[%c624, %c0_120] : memref<912x32xbf16, #tpu.memory_space<vmem>>, vector<288x32xbf16>
    %cst_121 = arith.constant dense<0.000000e+00> : vector<134x32xf32>
    %86 = tpu.matmul %84, %85, %cst_121 {dimension_numbers = #tpu.dot_dimension_numbers<[1], [0], [0], [1], [0, 0, 1, 1], [], []>} : vector<134x288xbf16>, vector<288x32xbf16>, vector<134x32xf32> -> vector<134x32xf32>
    %c3 = arith.constant 3 : index
    %c0_122 = arith.constant 0 : index
    %87 = vector.load %arg2[%c3, %c0_122] : memref<4x32xf32, #tpu.memory_space<vmem>>, vector<1x32xf32>
    %88 = vector.broadcast %87 : vector<1x32xf32> to vector<134x32xf32>
    %89 = arith.addf %86, %88 : vector<134x32xf32>
    %cst_123 = arith.constant 0.000000e+00 : f32
    %90 = vector.broadcast %cst_123 : f32 to vector<134x32xf32>
    %91 = arith.maximumf %89, %90 : vector<134x32xf32>
    %cst_124 = arith.constant 0.000000e+00 : f32
    %92 = vector.broadcast %cst_124 : f32 to vector<32x128xf32>
    %c0_125 = arith.constant 0 : index
    %c0_126 = arith.constant 0 : index
    %93 = vector.load %arg6[%c0_125, %c0_126] : memref<32x128xf32, #tpu.memory_space<vmem>>, vector<32x128xf32>
    tpu.vector_store %arg6[%c0_125, %c0_126], %92 {strides = array<i32>} : memref<32x128xf32, #tpu.memory_space<vmem>>, vector<32x128xf32>,
    %94 = vector.extract_strided_slice %91 {offsets = [0, 0], sizes = [4, 32], strides = [1, 1]} : vector<134x32xf32> to vector<4x32xf32>
    %c0_127 = arith.constant 0 : index
    %c0_128 = arith.constant 0 : index
    %95 = vector.load %arg6[%c0_127, %c0_128] : memref<32x128xf32, #tpu.memory_space<vmem>>, vector<4x32xf32>
    tpu.vector_store %arg6[%c0_127, %c0_128], %94 {strides = array<i32>} : memref<32x128xf32, #tpu.memory_space<vmem>>, vector<4x32xf32>,
    %96 = vector.extract_strided_slice %91 {offsets = [10, 0], sizes = [4, 32], strides = [1, 1]} : vector<134x32xf32> to vector<4x32xf32>
    %c4 = arith.constant 4 : index
    %c0_129 = arith.constant 0 : index
    %97 = vector.load %arg6[%c4, %c0_129] : memref<32x128xf32, #tpu.memory_space<vmem>>, vector<4x32xf32>
    tpu.vector_store %arg6[%c4, %c0_129], %96 {strides = array<i32>} : memref<32x128xf32, #tpu.memory_space<vmem>>, vector<4x32xf32>,
    %98 = vector.extract_strided_slice %91 {offsets = [20, 0], sizes = [4, 32], strides = [1, 1]} : vector<134x32xf32> to vector<4x32xf32>
    %c8 = arith.constant 8 : index
    %c0_130 = arith.constant 0 : index
    %99 = vector.load %arg6[%c8, %c0_130] : memref<32x128xf32, #tpu.memory_space<vmem>>, vector<4x32xf32>
    tpu.vector_store %arg6[%c8, %c0_130], %98 {strides = array<i32>} : memref<32x128xf32, #tpu.memory_space<vmem>>, vector<4x32xf32>,
    %100 = vector.extract_strided_slice %91 {offsets = [30, 0], sizes = [4, 32], strides = [1, 1]} : vector<134x32xf32> to vector<4x32xf32>
    %c12_131 = arith.constant 12 : index
    %c0_132 = arith.constant 0 : index
    %101 = vector.load %arg6[%c12_131, %c0_132] : memref<32x128xf32, #tpu.memory_space<vmem>>, vector<4x32xf32>
    tpu.vector_store %arg6[%c12_131, %c0_132], %100 {strides = array<i32>} : memref<32x128xf32, #tpu.memory_space<vmem>>, vector<4x32xf32>,
    %102 = vector.extract_strided_slice %91 {offsets = [100, 0], sizes = [4, 32], strides = [1, 1]} : vector<134x32xf32> to vector<4x32xf32>
    %c16 = arith.constant 16 : index
    %c0_133 = arith.constant 0 : index
    %103 = vector.load %arg6[%c16, %c0_133] : memref<32x128xf32, #tpu.memory_space<vmem>>, vector<4x32xf32>
    tpu.vector_store %arg6[%c16, %c0_133], %102 {strides = array<i32>} : memref<32x128xf32, #tpu.memory_space<vmem>>, vector<4x32xf32>,
    %104 = vector.extract_strided_slice %91 {offsets = [110, 0], sizes = [4, 32], strides = [1, 1]} : vector<134x32xf32> to vector<4x32xf32>
    %c20_134 = arith.constant 20 : index
    %c0_135 = arith.constant 0 : index
    %105 = vector.load %arg6[%c20_134, %c0_135] : memref<32x128xf32, #tpu.memory_space<vmem>>, vector<4x32xf32>
    tpu.vector_store %arg6[%c20_134, %c0_135], %104 {strides = array<i32>} : memref<32x128xf32, #tpu.memory_space<vmem>>, vector<4x32xf32>,
    %106 = vector.extract_strided_slice %91 {offsets = [120, 0], sizes = [4, 32], strides = [1, 1]} : vector<134x32xf32> to vector<4x32xf32>
    %c24 = arith.constant 24 : index
    %c0_136 = arith.constant 0 : index
    %107 = vector.load %arg6[%c24, %c0_136] : memref<32x128xf32, #tpu.memory_space<vmem>>, vector<4x32xf32>
    tpu.vector_store %arg6[%c24, %c0_136], %106 {strides = array<i32>} : memref<32x128xf32, #tpu.memory_space<vmem>>, vector<4x32xf32>,
    %108 = vector.extract_strided_slice %91 {offsets = [130, 0], sizes = [4, 32], strides = [1, 1]} : vector<134x32xf32> to vector<4x32xf32>
    %c28 = arith.constant 28 : index
    %c0_137 = arith.constant 0 : index
    %109 = vector.load %arg6[%c28, %c0_137] : memref<32x128xf32, #tpu.memory_space<vmem>>, vector<4x32xf32>
    tpu.vector_store %arg6[%c28, %c0_137], %108 {strides = array<i32>} : memref<32x128xf32, #tpu.memory_space<vmem>>, vector<4x32xf32>,
    %c0_138 = arith.constant 0 : index
    %c0_139 = arith.constant 0 : index
    %110 = vector.load %arg6[%c0_138, %c0_139] : memref<32x128xf32, #tpu.memory_space<vmem>>, vector<32x128xf32>
    %111 = tpu.transpose %110, [1, 0] : vector<32x128xf32> -> vector<128x32xf32>
    %112 = vector.extract_strided_slice %111 {offsets = [0, 0], sizes = [1, 16], strides = [1, 1]} : vector<128x32xf32> to vector<1x16xf32>
    %c0_140 = arith.constant 0 : index
    %c0_141 = arith.constant 0 : index
    %113 = vector.load %arg3[%c0_140, %c0_141] : memref<2x512xf32, #tpu.memory_space<vmem>>, vector<1x16xf32>
    tpu.vector_store %arg3[%c0_140, %c0_141], %112 {strides = array<i32>} : memref<2x512xf32, #tpu.memory_space<vmem>>, vector<1x16xf32>,
    %114 = vector.extract_strided_slice %111 {offsets = [1, 0], sizes = [1, 16], strides = [1, 1]} : vector<128x32xf32> to vector<1x16xf32>
    %c0_142 = arith.constant 0 : index
    %c16_143 = arith.constant 16 : index
    %115 = vector.load %arg3[%c0_142, %c16_143] : memref<2x512xf32, #tpu.memory_space<vmem>>, vector<1x16xf32>
    tpu.vector_store %arg3[%c0_142, %c16_143], %114 {strides = array<i32>} : memref<2x512xf32, #tpu.memory_space<vmem>>, vector<1x16xf32>,
    %116 = vector.extract_strided_slice %111 {offsets = [2, 0], sizes = [1, 16], strides = [1, 1]} : vector<128x32xf32> to vector<1x16xf32>
    %c0_144 = arith.constant 0 : index
    %c32_145 = arith.constant 32 : index
    %117 = vector.load %arg3[%c0_144, %c32_145] : memref<2x512xf32, #tpu.memory_space<vmem>>, vector<1x16xf32>
    tpu.vector_store %arg3[%c0_144, %c32_145], %116 {strides = array<i32>} : memref<2x512xf32, #tpu.memory_space<vmem>>, vector<1x16xf32>,
    %118 = vector.extract_strided_slice %111 {offsets = [3, 0], sizes = [1, 16], strides = [1, 1]} : vector<128x32xf32> to vector<1x16xf32>
    %c0_146 = arith.constant 0 : index
    %c48_147 = arith.constant 48 : index
    %119 = vector.load %arg3[%c0_146, %c48_147] : memref<2x512xf32, #tpu.memory_space<vmem>>, vector<1x16xf32>
    tpu.vector_store %arg3[%c0_146, %c48_147], %118 {strides = array<i32>} : memref<2x512xf32, #tpu.memory_space<vmem>>, vector<1x16xf32>,
    %120 = vector.extract_strided_slice %111 {offsets = [4, 0], sizes = [1, 16], strides = [1, 1]} : vector<128x32xf32> to vector<1x16xf32>
    %c0_148 = arith.constant 0 : index
    %c64_149 = arith.constant 64 : index
    %121 = vector.load %arg3[%c0_148, %c64_149] : memref<2x512xf32, #tpu.memory_space<vmem>>, vector<1x16xf32>
    tpu.vector_store %arg3[%c0_148, %c64_149], %120 {strides = array<i32>} : memref<2x512xf32, #tpu.memory_space<vmem>>, vector<1x16xf32>,
    %122 = vector.extract_strided_slice %111 {offsets = [5, 0], sizes = [1, 16], strides = [1, 1]} : vector<128x32xf32> to vector<1x16xf32>
    %c0_150 = arith.constant 0 : index
    %c80 = arith.constant 80 : index
    %123 = vector.load %arg3[%c0_150, %c80] : memref<2x512xf32, #tpu.memory_space<vmem>>, vector<1x16xf32>
    tpu.vector_store %arg3[%c0_150, %c80], %122 {strides = array<i32>} : memref<2x512xf32, #tpu.memory_space<vmem>>, vector<1x16xf32>,
    %124 = vector.extract_strided_slice %111 {offsets = [6, 0], sizes = [1, 16], strides = [1, 1]} : vector<128x32xf32> to vector<1x16xf32>
    %c0_151 = arith.constant 0 : index
    %c96_152 = arith.constant 96 : index
    %125 = vector.load %arg3[%c0_151, %c96_152] : memref<2x512xf32, #tpu.memory_space<vmem>>, vector<1x16xf32>
    tpu.vector_store %arg3[%c0_151, %c96_152], %124 {strides = array<i32>} : memref<2x512xf32, #tpu.memory_space<vmem>>, vector<1x16xf32>,
    %126 = vector.extract_strided_slice %111 {offsets = [7, 0], sizes = [1, 16], strides = [1, 1]} : vector<128x32xf32> to vector<1x16xf32>
    %c0_153 = arith.constant 0 : index
    %c112 = arith.constant 112 : index
    %127 = vector.load %arg3[%c0_153, %c112] : memref<2x512xf32, #tpu.memory_space<vmem>>, vector<1x16xf32>
    tpu.vector_store %arg3[%c0_153, %c112], %126 {strides = array<i32>} : memref<2x512xf32, #tpu.memory_space<vmem>>, vector<1x16xf32>,
    %128 = vector.extract_strided_slice %111 {offsets = [8, 0], sizes = [1, 16], strides = [1, 1]} : vector<128x32xf32> to vector<1x16xf32>
    %c0_154 = arith.constant 0 : index
    %c128_155 = arith.constant 128 : index
    %129 = vector.load %arg3[%c0_154, %c128_155] : memref<2x512xf32, #tpu.memory_space<vmem>>, vector<1x16xf32>
    tpu.vector_store %arg3[%c0_154, %c128_155], %128 {strides = array<i32>} : memref<2x512xf32, #tpu.memory_space<vmem>>, vector<1x16xf32>,
    %130 = vector.extract_strided_slice %111 {offsets = [9, 0], sizes = [1, 16], strides = [1, 1]} : vector<128x32xf32> to vector<1x16xf32>
    %c0_156 = arith.constant 0 : index
    %c144 = arith.constant 144 : index
    %131 = vector.load %arg3[%c0_156, %c144] : memref<2x512xf32, #tpu.memory_space<vmem>>, vector<1x16xf32>
    tpu.vector_store %arg3[%c0_156, %c144], %130 {strides = array<i32>} : memref<2x512xf32, #tpu.memory_space<vmem>>, vector<1x16xf32>,
    %132 = vector.extract_strided_slice %111 {offsets = [10, 0], sizes = [1, 16], strides = [1, 1]} : vector<128x32xf32> to vector<1x16xf32>
    %c0_157 = arith.constant 0 : index
    %c160_158 = arith.constant 160 : index
    %133 = vector.load %arg3[%c0_157, %c160_158] : memref<2x512xf32, #tpu.memory_space<vmem>>, vector<1x16xf32>
    tpu.vector_store %arg3[%c0_157, %c160_158], %132 {strides = array<i32>} : memref<2x512xf32, #tpu.memory_space<vmem>>, vector<1x16xf32>,
    %134 = vector.extract_strided_slice %111 {offsets = [11, 0], sizes = [1, 16], strides = [1, 1]} : vector<128x32xf32> to vector<1x16xf32>
    %c0_159 = arith.constant 0 : index
    %c176 = arith.constant 176 : index
    %135 = vector.load %arg3[%c0_159, %c176] : memref<2x512xf32, #tpu.memory_space<vmem>>, vector<1x16xf32>
    tpu.vector_store %arg3[%c0_159, %c176], %134 {strides = array<i32>} : memref<2x512xf32, #tpu.memory_space<vmem>>, vector<1x16xf32>,
    %136 = vector.extract_strided_slice %111 {offsets = [12, 0], sizes = [1, 16], strides = [1, 1]} : vector<128x32xf32> to vector<1x16xf32>
    %c0_160 = arith.constant 0 : index
    %c192_161 = arith.constant 192 : index
    %137 = vector.load %arg3[%c0_160, %c192_161] : memref<2x512xf32, #tpu.memory_space<vmem>>, vector<1x16xf32>
    tpu.vector_store %arg3[%c0_160, %c192_161], %136 {strides = array<i32>} : memref<2x512xf32, #tpu.memory_space<vmem>>, vector<1x16xf32>,
    %138 = vector.extract_strided_slice %111 {offsets = [13, 0], sizes = [1, 16], strides = [1, 1]} : vector<128x32xf32> to vector<1x16xf32>
    %c0_162 = arith.constant 0 : index
    %c208 = arith.constant 208 : index
    %139 = vector.load %arg3[%c0_162, %c208] : memref<2x512xf32, #tpu.memory_space<vmem>>, vector<1x16xf32>
    tpu.vector_store %arg3[%c0_162, %c208], %138 {strides = array<i32>} : memref<2x512xf32, #tpu.memory_space<vmem>>, vector<1x16xf32>,
    %140 = vector.extract_strided_slice %111 {offsets = [14, 0], sizes = [1, 16], strides = [1, 1]} : vector<128x32xf32> to vector<1x16xf32>
    %c0_163 = arith.constant 0 : index
    %c224_164 = arith.constant 224 : index
    %141 = vector.load %arg3[%c0_163, %c224_164] : memref<2x512xf32, #tpu.memory_space<vmem>>, vector<1x16xf32>
    tpu.vector_store %arg3[%c0_163, %c224_164], %140 {strides = array<i32>} : memref<2x512xf32, #tpu.memory_space<vmem>>, vector<1x16xf32>,
    %142 = vector.extract_strided_slice %111 {offsets = [15, 0], sizes = [1, 16], strides = [1, 1]} : vector<128x32xf32> to vector<1x16xf32>
    %c0_165 = arith.constant 0 : index
    %c240 = arith.constant 240 : index
    %143 = vector.load %arg3[%c0_165, %c240] : memref<2x512xf32, #tpu.memory_space<vmem>>, vector<1x16xf32>
    tpu.vector_store %arg3[%c0_165, %c240], %142 {strides = array<i32>} : memref<2x512xf32, #tpu.memory_space<vmem>>, vector<1x16xf32>,
    %144 = vector.extract_strided_slice %111 {offsets = [16, 0], sizes = [1, 16], strides = [1, 1]} : vector<128x32xf32> to vector<1x16xf32>
    %c0_166 = arith.constant 0 : index
    %c256_167 = arith.constant 256 : index
    %145 = vector.load %arg3[%c0_166, %c256_167] : memref<2x512xf32, #tpu.memory_space<vmem>>, vector<1x16xf32>
    tpu.vector_store %arg3[%c0_166, %c256_167], %144 {strides = array<i32>} : memref<2x512xf32, #tpu.memory_space<vmem>>, vector<1x16xf32>,
    %146 = vector.extract_strided_slice %111 {offsets = [17, 0], sizes = [1, 16], strides = [1, 1]} : vector<128x32xf32> to vector<1x16xf32>
    %c0_168 = arith.constant 0 : index
    %c272 = arith.constant 272 : index
    %147 = vector.load %arg3[%c0_168, %c272] : memref<2x512xf32, #tpu.memory_space<vmem>>, vector<1x16xf32>
    tpu.vector_store %arg3[%c0_168, %c272], %146 {strides = array<i32>} : memref<2x512xf32, #tpu.memory_space<vmem>>, vector<1x16xf32>,
    %148 = vector.extract_strided_slice %111 {offsets = [18, 0], sizes = [1, 16], strides = [1, 1]} : vector<128x32xf32> to vector<1x16xf32>
    %c0_169 = arith.constant 0 : index
    %c288 = arith.constant 288 : index
    %149 = vector.load %arg3[%c0_169, %c288] : memref<2x512xf32, #tpu.memory_space<vmem>>, vector<1x16xf32>
    tpu.vector_store %arg3[%c0_169, %c288], %148 {strides = array<i32>} : memref<2x512xf32, #tpu.memory_space<vmem>>, vector<1x16xf32>,
    %150 = vector.extract_strided_slice %111 {offsets = [19, 0], sizes = [1, 16], strides = [1, 1]} : vector<128x32xf32> to vector<1x16xf32>
    %c0_170 = arith.constant 0 : index
    %c304 = arith.constant 304 : index
    %151 = vector.load %arg3[%c0_170, %c304] : memref<2x512xf32, #tpu.memory_space<vmem>>, vector<1x16xf32>
    tpu.vector_store %arg3[%c0_170, %c304], %150 {strides = array<i32>} : memref<2x512xf32, #tpu.memory_space<vmem>>, vector<1x16xf32>,
    %152 = vector.extract_strided_slice %111 {offsets = [20, 0], sizes = [1, 16], strides = [1, 1]} : vector<128x32xf32> to vector<1x16xf32>
    %c0_171 = arith.constant 0 : index
    %c320 = arith.constant 320 : index
    %153 = vector.load %arg3[%c0_171, %c320] : memref<2x512xf32, #tpu.memory_space<vmem>>, vector<1x16xf32>
    tpu.vector_store %arg3[%c0_171, %c320], %152 {strides = array<i32>} : memref<2x512xf32, #tpu.memory_space<vmem>>, vector<1x16xf32>,
    %154 = vector.extract_strided_slice %111 {offsets = [21, 0], sizes = [1, 16], strides = [1, 1]} : vector<128x32xf32> to vector<1x16xf32>
    %c0_172 = arith.constant 0 : index
    %c336_173 = arith.constant 336 : index
    %155 = vector.load %arg3[%c0_172, %c336_173] : memref<2x512xf32, #tpu.memory_space<vmem>>, vector<1x16xf32>
    tpu.vector_store %arg3[%c0_172, %c336_173], %154 {strides = array<i32>} : memref<2x512xf32, #tpu.memory_space<vmem>>, vector<1x16xf32>,
    %156 = vector.extract_strided_slice %111 {offsets = [22, 0], sizes = [1, 16], strides = [1, 1]} : vector<128x32xf32> to vector<1x16xf32>
    %c0_174 = arith.constant 0 : index
    %c352 = arith.constant 352 : index
    %157 = vector.load %arg3[%c0_174, %c352] : memref<2x512xf32, #tpu.memory_space<vmem>>, vector<1x16xf32>
    tpu.vector_store %arg3[%c0_174, %c352], %156 {strides = array<i32>} : memref<2x512xf32, #tpu.memory_space<vmem>>, vector<1x16xf32>,
    %158 = vector.extract_strided_slice %111 {offsets = [23, 0], sizes = [1, 16], strides = [1, 1]} : vector<128x32xf32> to vector<1x16xf32>
    %c0_175 = arith.constant 0 : index
    %c368 = arith.constant 368 : index
    %159 = vector.load %arg3[%c0_175, %c368] : memref<2x512xf32, #tpu.memory_space<vmem>>, vector<1x16xf32>
    tpu.vector_store %arg3[%c0_175, %c368], %158 {strides = array<i32>} : memref<2x512xf32, #tpu.memory_space<vmem>>, vector<1x16xf32>,
    %160 = vector.extract_strided_slice %111 {offsets = [24, 0], sizes = [1, 16], strides = [1, 1]} : vector<128x32xf32> to vector<1x16xf32>
    %c0_176 = arith.constant 0 : index
    %c384 = arith.constant 384 : index
    %161 = vector.load %arg3[%c0_176, %c384] : memref<2x512xf32, #tpu.memory_space<vmem>>, vector<1x16xf32>
    tpu.vector_store %arg3[%c0_176, %c384], %160 {strides = array<i32>} : memref<2x512xf32, #tpu.memory_space<vmem>>, vector<1x16xf32>,
    %162 = vector.extract_strided_slice %111 {offsets = [25, 0], sizes = [1, 16], strides = [1, 1]} : vector<128x32xf32> to vector<1x16xf32>
    %c0_177 = arith.constant 0 : index
    %c400 = arith.constant 400 : index
    %163 = vector.load %arg3[%c0_177, %c400] : memref<2x512xf32, #tpu.memory_space<vmem>>, vector<1x16xf32>
    tpu.vector_store %arg3[%c0_177, %c400], %162 {strides = array<i32>} : memref<2x512xf32, #tpu.memory_space<vmem>>, vector<1x16xf32>,
    %164 = vector.extract_strided_slice %111 {offsets = [26, 0], sizes = [1, 16], strides = [1, 1]} : vector<128x32xf32> to vector<1x16xf32>
    %c0_178 = arith.constant 0 : index
    %c416 = arith.constant 416 : index
    %165 = vector.load %arg3[%c0_178, %c416] : memref<2x512xf32, #tpu.memory_space<vmem>>, vector<1x16xf32>
    tpu.vector_store %arg3[%c0_178, %c416], %164 {strides = array<i32>} : memref<2x512xf32, #tpu.memory_space<vmem>>, vector<1x16xf32>,
    %166 = vector.extract_strided_slice %111 {offsets = [27, 0], sizes = [1, 16], strides = [1, 1]} : vector<128x32xf32> to vector<1x16xf32>
    %c0_179 = arith.constant 0 : index
    %c432 = arith.constant 432 : index
    %167 = vector.load %arg3[%c0_179, %c432] : memref<2x512xf32, #tpu.memory_space<vmem>>, vector<1x16xf32>
    tpu.vector_store %arg3[%c0_179, %c432], %166 {strides = array<i32>} : memref<2x512xf32, #tpu.memory_space<vmem>>, vector<1x16xf32>,
    %168 = vector.extract_strided_slice %111 {offsets = [28, 0], sizes = [1, 16], strides = [1, 1]} : vector<128x32xf32> to vector<1x16xf32>
    %c0_180 = arith.constant 0 : index
    %c448 = arith.constant 448 : index
    %169 = vector.load %arg3[%c0_180, %c448] : memref<2x512xf32, #tpu.memory_space<vmem>>, vector<1x16xf32>
    tpu.vector_store %arg3[%c0_180, %c448], %168 {strides = array<i32>} : memref<2x512xf32, #tpu.memory_space<vmem>>, vector<1x16xf32>,
    %170 = vector.extract_strided_slice %111 {offsets = [29, 0], sizes = [1, 16], strides = [1, 1]} : vector<128x32xf32> to vector<1x16xf32>
    %c0_181 = arith.constant 0 : index
    %c464 = arith.constant 464 : index
    %171 = vector.load %arg3[%c0_181, %c464] : memref<2x512xf32, #tpu.memory_space<vmem>>, vector<1x16xf32>
    tpu.vector_store %arg3[%c0_181, %c464], %170 {strides = array<i32>} : memref<2x512xf32, #tpu.memory_space<vmem>>, vector<1x16xf32>,
    %172 = vector.extract_strided_slice %111 {offsets = [30, 0], sizes = [1, 16], strides = [1, 1]} : vector<128x32xf32> to vector<1x16xf32>
    %c0_182 = arith.constant 0 : index
    %c480 = arith.constant 480 : index
    %173 = vector.load %arg3[%c0_182, %c480] : memref<2x512xf32, #tpu.memory_space<vmem>>, vector<1x16xf32>
    tpu.vector_store %arg3[%c0_182, %c480], %172 {strides = array<i32>} : memref<2x512xf32, #tpu.memory_space<vmem>>, vector<1x16xf32>,
    %174 = vector.extract_strided_slice %111 {offsets = [31, 0], sizes = [1, 16], strides = [1, 1]} : vector<128x32xf32> to vector<1x16xf32>
    %c0_183 = arith.constant 0 : index
    %c496 = arith.constant 496 : index
    %175 = vector.load %arg3[%c0_183, %c496] : memref<2x512xf32, #tpu.memory_space<vmem>>, vector<1x16xf32>
    tpu.vector_store %arg3[%c0_183, %c496], %174 {strides = array<i32>} : memref<2x512xf32, #tpu.memory_space<vmem>>, vector<1x16xf32>,
    %176 = vector.extract_strided_slice %111 {offsets = [0, 16], sizes = [1, 16], strides = [1, 1]} : vector<128x32xf32> to vector<1x16xf32>
    %c1_184 = arith.constant 1 : index
    %c0_185 = arith.constant 0 : index
    %177 = vector.load %arg3[%c1_184, %c0_185] : memref<2x512xf32, #tpu.memory_space<vmem>>, vector<1x16xf32>
    tpu.vector_store %arg3[%c1_184, %c0_185], %176 {strides = array<i32>} : memref<2x512xf32, #tpu.memory_space<vmem>>, vector<1x16xf32>,
    %178 = vector.extract_strided_slice %111 {offsets = [1, 16], sizes = [1, 16], strides = [1, 1]} : vector<128x32xf32> to vector<1x16xf32>
    %c1_186 = arith.constant 1 : index
    %c16_187 = arith.constant 16 : index
    %179 = vector.load %arg3[%c1_186, %c16_187] : memref<2x512xf32, #tpu.memory_space<vmem>>, vector<1x16xf32>
    tpu.vector_store %arg3[%c1_186, %c16_187], %178 {strides = array<i32>} : memref<2x512xf32, #tpu.memory_space<vmem>>, vector<1x16xf32>,
    %180 = vector.extract_strided_slice %111 {offsets = [2, 16], sizes = [1, 16], strides = [1, 1]} : vector<128x32xf32> to vector<1x16xf32>
    %c1_188 = arith.constant 1 : index
    %c32_189 = arith.constant 32 : index
    %181 = vector.load %arg3[%c1_188, %c32_189] : memref<2x512xf32, #tpu.memory_space<vmem>>, vector<1x16xf32>
    tpu.vector_store %arg3[%c1_188, %c32_189], %180 {strides = array<i32>} : memref<2x512xf32, #tpu.memory_space<vmem>>, vector<1x16xf32>,
    %182 = vector.extract_strided_slice %111 {offsets = [3, 16], sizes = [1, 16], strides = [1, 1]} : vector<128x32xf32> to vector<1x16xf32>
    %c1_190 = arith.constant 1 : index
    %c48_191 = arith.constant 48 : index
    %183 = vector.load %arg3[%c1_190, %c48_191] : memref<2x512xf32, #tpu.memory_space<vmem>>, vector<1x16xf32>
    tpu.vector_store %arg3[%c1_190, %c48_191], %182 {strides = array<i32>} : memref<2x512xf32, #tpu.memory_space<vmem>>, vector<1x16xf32>,
    %184 = vector.extract_strided_slice %111 {offsets = [4, 16], sizes = [1, 16], strides = [1, 1]} : vector<128x32xf32> to vector<1x16xf32>
    %c1_192 = arith.constant 1 : index
    %c64_193 = arith.constant 64 : index
    %185 = vector.load %arg3[%c1_192, %c64_193] : memref<2x512xf32, #tpu.memory_space<vmem>>, vector<1x16xf32>
    tpu.vector_store %arg3[%c1_192, %c64_193], %184 {strides = array<i32>} : memref<2x512xf32, #tpu.memory_space<vmem>>, vector<1x16xf32>,
    %186 = vector.extract_strided_slice %111 {offsets = [5, 16], sizes = [1, 16], strides = [1, 1]} : vector<128x32xf32> to vector<1x16xf32>
    %c1_194 = arith.constant 1 : index
    %c80_195 = arith.constant 80 : index
    %187 = vector.load %arg3[%c1_194, %c80_195] : memref<2x512xf32, #tpu.memory_space<vmem>>, vector<1x16xf32>
    tpu.vector_store %arg3[%c1_194, %c80_195], %186 {strides = array<i32>} : memref<2x512xf32, #tpu.memory_space<vmem>>, vector<1x16xf32>,
    %188 = vector.extract_strided_slice %111 {offsets = [6, 16], sizes = [1, 16], strides = [1, 1]} : vector<128x32xf32> to vector<1x16xf32>
    %c1_196 = arith.constant 1 : index
    %c96_197 = arith.constant 96 : index
    %189 = vector.load %arg3[%c1_196, %c96_197] : memref<2x512xf32, #tpu.memory_space<vmem>>, vector<1x16xf32>
    tpu.vector_store %arg3[%c1_196, %c96_197], %188 {strides = array<i32>} : memref<2x512xf32, #tpu.memory_space<vmem>>, vector<1x16xf32>,
    %190 = vector.extract_strided_slice %111 {offsets = [7, 16], sizes = [1, 16], strides = [1, 1]} : vector<128x32xf32> to vector<1x16xf32>
    %c1_198 = arith.constant 1 : index
    %c112_199 = arith.constant 112 : index
    %191 = vector.load %arg3[%c1_198, %c112_199] : memref<2x512xf32, #tpu.memory_space<vmem>>, vector<1x16xf32>
    tpu.vector_store %arg3[%c1_198, %c112_199], %190 {strides = array<i32>} : memref<2x512xf32, #tpu.memory_space<vmem>>, vector<1x16xf32>,
    %192 = vector.extract_strided_slice %111 {offsets = [8, 16], sizes = [1, 16], strides = [1, 1]} : vector<128x32xf32> to vector<1x16xf32>
    %c1_200 = arith.constant 1 : index
    %c128_201 = arith.constant 128 : index
    %193 = vector.load %arg3[%c1_200, %c128_201] : memref<2x512xf32, #tpu.memory_space<vmem>>, vector<1x16xf32>
    tpu.vector_store %arg3[%c1_200, %c128_201], %192 {strides = array<i32>} : memref<2x512xf32, #tpu.memory_space<vmem>>, vector<1x16xf32>,
    %194 = vector.extract_strided_slice %111 {offsets = [9, 16], sizes = [1, 16], strides = [1, 1]} : vector<128x32xf32> to vector<1x16xf32>
    %c1_202 = arith.constant 1 : index
    %c144_203 = arith.constant 144 : index
    %195 = vector.load %arg3[%c1_202, %c144_203] : memref<2x512xf32, #tpu.memory_space<vmem>>, vector<1x16xf32>
    tpu.vector_store %arg3[%c1_202, %c144_203], %194 {strides = array<i32>} : memref<2x512xf32, #tpu.memory_space<vmem>>, vector<1x16xf32>,
    %196 = vector.extract_strided_slice %111 {offsets = [10, 16], sizes = [1, 16], strides = [1, 1]} : vector<128x32xf32> to vector<1x16xf32>
    %c1_204 = arith.constant 1 : index
    %c160_205 = arith.constant 160 : index
    %197 = vector.load %arg3[%c1_204, %c160_205] : memref<2x512xf32, #tpu.memory_space<vmem>>, vector<1x16xf32>
    tpu.vector_store %arg3[%c1_204, %c160_205], %196 {strides = array<i32>} : memref<2x512xf32, #tpu.memory_space<vmem>>, vector<1x16xf32>,
    %198 = vector.extract_strided_slice %111 {offsets = [11, 16], sizes = [1, 16], strides = [1, 1]} : vector<128x32xf32> to vector<1x16xf32>
    %c1_206 = arith.constant 1 : index
    %c176_207 = arith.constant 176 : index
    %199 = vector.load %arg3[%c1_206, %c176_207] : memref<2x512xf32, #tpu.memory_space<vmem>>, vector<1x16xf32>
    tpu.vector_store %arg3[%c1_206, %c176_207], %198 {strides = array<i32>} : memref<2x512xf32, #tpu.memory_space<vmem>>, vector<1x16xf32>,
    %200 = vector.extract_strided_slice %111 {offsets = [12, 16], sizes = [1, 16], strides = [1, 1]} : vector<128x32xf32> to vector<1x16xf32>
    %c1_208 = arith.constant 1 : index
    %c192_209 = arith.constant 192 : index
    %201 = vector.load %arg3[%c1_208, %c192_209] : memref<2x512xf32, #tpu.memory_space<vmem>>, vector<1x16xf32>
    tpu.vector_store %arg3[%c1_208, %c192_209], %200 {strides = array<i32>} : memref<2x512xf32, #tpu.memory_space<vmem>>, vector<1x16xf32>,
    %202 = vector.extract_strided_slice %111 {offsets = [13, 16], sizes = [1, 16], strides = [1, 1]} : vector<128x32xf32> to vector<1x16xf32>
    %c1_210 = arith.constant 1 : index
    %c208_211 = arith.constant 208 : index
    %203 = vector.load %arg3[%c1_210, %c208_211] : memref<2x512xf32, #tpu.memory_space<vmem>>, vector<1x16xf32>
    tpu.vector_store %arg3[%c1_210, %c208_211], %202 {strides = array<i32>} : memref<2x512xf32, #tpu.memory_space<vmem>>, vector<1x16xf32>,
    %204 = vector.extract_strided_slice %111 {offsets = [14, 16], sizes = [1, 16], strides = [1, 1]} : vector<128x32xf32> to vector<1x16xf32>
    %c1_212 = arith.constant 1 : index
    %c224_213 = arith.constant 224 : index
    %205 = vector.load %arg3[%c1_212, %c224_213] : memref<2x512xf32, #tpu.memory_space<vmem>>, vector<1x16xf32>
    tpu.vector_store %arg3[%c1_212, %c224_213], %204 {strides = array<i32>} : memref<2x512xf32, #tpu.memory_space<vmem>>, vector<1x16xf32>,
    %206 = vector.extract_strided_slice %111 {offsets = [15, 16], sizes = [1, 16], strides = [1, 1]} : vector<128x32xf32> to vector<1x16xf32>
    %c1_214 = arith.constant 1 : index
    %c240_215 = arith.constant 240 : index
    %207 = vector.load %arg3[%c1_214, %c240_215] : memref<2x512xf32, #tpu.memory_space<vmem>>, vector<1x16xf32>
    tpu.vector_store %arg3[%c1_214, %c240_215], %206 {strides = array<i32>} : memref<2x512xf32, #tpu.memory_space<vmem>>, vector<1x16xf32>,
    %208 = vector.extract_strided_slice %111 {offsets = [16, 16], sizes = [1, 16], strides = [1, 1]} : vector<128x32xf32> to vector<1x16xf32>
    %c1_216 = arith.constant 1 : index
    %c256_217 = arith.constant 256 : index
    %209 = vector.load %arg3[%c1_216, %c256_217] : memref<2x512xf32, #tpu.memory_space<vmem>>, vector<1x16xf32>
    tpu.vector_store %arg3[%c1_216, %c256_217], %208 {strides = array<i32>} : memref<2x512xf32, #tpu.memory_space<vmem>>, vector<1x16xf32>,
    %210 = vector.extract_strided_slice %111 {offsets = [17, 16], sizes = [1, 16], strides = [1, 1]} : vector<128x32xf32> to vector<1x16xf32>
    %c1_218 = arith.constant 1 : index
    %c272_219 = arith.constant 272 : index
    %211 = vector.load %arg3[%c1_218, %c272_219] : memref<2x512xf32, #tpu.memory_space<vmem>>, vector<1x16xf32>
    tpu.vector_store %arg3[%c1_218, %c272_219], %210 {strides = array<i32>} : memref<2x512xf32, #tpu.memory_space<vmem>>, vector<1x16xf32>,
    %212 = vector.extract_strided_slice %111 {offsets = [18, 16], sizes = [1, 16], strides = [1, 1]} : vector<128x32xf32> to vector<1x16xf32>
    %c1_220 = arith.constant 1 : index
    %c288_221 = arith.constant 288 : index
    %213 = vector.load %arg3[%c1_220, %c288_221] : memref<2x512xf32, #tpu.memory_space<vmem>>, vector<1x16xf32>
    tpu.vector_store %arg3[%c1_220, %c288_221], %212 {strides = array<i32>} : memref<2x512xf32, #tpu.memory_space<vmem>>, vector<1x16xf32>,
    %214 = vector.extract_strided_slice %111 {offsets = [19, 16], sizes = [1, 16], strides = [1, 1]} : vector<128x32xf32> to vector<1x16xf32>
    %c1_222 = arith.constant 1 : index
    %c304_223 = arith.constant 304 : index
    %215 = vector.load %arg3[%c1_222, %c304_223] : memref<2x512xf32, #tpu.memory_space<vmem>>, vector<1x16xf32>
    tpu.vector_store %arg3[%c1_222, %c304_223], %214 {strides = array<i32>} : memref<2x512xf32, #tpu.memory_space<vmem>>, vector<1x16xf32>,
    %216 = vector.extract_strided_slice %111 {offsets = [20, 16], sizes = [1, 16], strides = [1, 1]} : vector<128x32xf32> to vector<1x16xf32>
    %c1_224 = arith.constant 1 : index
    %c320_225 = arith.constant 320 : index
    %217 = vector.load %arg3[%c1_224, %c320_225] : memref<2x512xf32, #tpu.memory_space<vmem>>, vector<1x16xf32>
    tpu.vector_store %arg3[%c1_224, %c320_225], %216 {strides = array<i32>} : memref<2x512xf32, #tpu.memory_space<vmem>>, vector<1x16xf32>,
    %218 = vector.extract_strided_slice %111 {offsets = [21, 16], sizes = [1, 16], strides = [1, 1]} : vector<128x32xf32> to vector<1x16xf32>
    %c1_226 = arith.constant 1 : index
    %c336_227 = arith.constant 336 : index
    %219 = vector.load %arg3[%c1_226, %c336_227] : memref<2x512xf32, #tpu.memory_space<vmem>>, vector<1x16xf32>
    tpu.vector_store %arg3[%c1_226, %c336_227], %218 {strides = array<i32>} : memref<2x512xf32, #tpu.memory_space<vmem>>, vector<1x16xf32>,
    %220 = vector.extract_strided_slice %111 {offsets = [22, 16], sizes = [1, 16], strides = [1, 1]} : vector<128x32xf32> to vector<1x16xf32>
    %c1_228 = arith.constant 1 : index
    %c352_229 = arith.constant 352 : index
    %221 = vector.load %arg3[%c1_228, %c352_229] : memref<2x512xf32, #tpu.memory_space<vmem>>, vector<1x16xf32>
    tpu.vector_store %arg3[%c1_228, %c352_229], %220 {strides = array<i32>} : memref<2x512xf32, #tpu.memory_space<vmem>>, vector<1x16xf32>,
    %222 = vector.extract_strided_slice %111 {offsets = [23, 16], sizes = [1, 16], strides = [1, 1]} : vector<128x32xf32> to vector<1x16xf32>
    %c1_230 = arith.constant 1 : index
    %c368_231 = arith.constant 368 : index
    %223 = vector.load %arg3[%c1_230, %c368_231] : memref<2x512xf32, #tpu.memory_space<vmem>>, vector<1x16xf32>
    tpu.vector_store %arg3[%c1_230, %c368_231], %222 {strides = array<i32>} : memref<2x512xf32, #tpu.memory_space<vmem>>, vector<1x16xf32>,
    %224 = vector.extract_strided_slice %111 {offsets = [24, 16], sizes = [1, 16], strides = [1, 1]} : vector<128x32xf32> to vector<1x16xf32>
    %c1_232 = arith.constant 1 : index
    %c384_233 = arith.constant 384 : index
    %225 = vector.load %arg3[%c1_232, %c384_233] : memref<2x512xf32, #tpu.memory_space<vmem>>, vector<1x16xf32>
    tpu.vector_store %arg3[%c1_232, %c384_233], %224 {strides = array<i32>} : memref<2x512xf32, #tpu.memory_space<vmem>>, vector<1x16xf32>,
    %226 = vector.extract_strided_slice %111 {offsets = [25, 16], sizes = [1, 16], strides = [1, 1]} : vector<128x32xf32> to vector<1x16xf32>
    %c1_234 = arith.constant 1 : index
    %c400_235 = arith.constant 400 : index
    %227 = vector.load %arg3[%c1_234, %c400_235] : memref<2x512xf32, #tpu.memory_space<vmem>>, vector<1x16xf32>
    tpu.vector_store %arg3[%c1_234, %c400_235], %226 {strides = array<i32>} : memref<2x512xf32, #tpu.memory_space<vmem>>, vector<1x16xf32>,
    %228 = vector.extract_strided_slice %111 {offsets = [26, 16], sizes = [1, 16], strides = [1, 1]} : vector<128x32xf32> to vector<1x16xf32>
    %c1_236 = arith.constant 1 : index
    %c416_237 = arith.constant 416 : index
    %229 = vector.load %arg3[%c1_236, %c416_237] : memref<2x512xf32, #tpu.memory_space<vmem>>, vector<1x16xf32>
    tpu.vector_store %arg3[%c1_236, %c416_237], %228 {strides = array<i32>} : memref<2x512xf32, #tpu.memory_space<vmem>>, vector<1x16xf32>,
    %230 = vector.extract_strided_slice %111 {offsets = [27, 16], sizes = [1, 16], strides = [1, 1]} : vector<128x32xf32> to vector<1x16xf32>
    %c1_238 = arith.constant 1 : index
    %c432_239 = arith.constant 432 : index
    %231 = vector.load %arg3[%c1_238, %c432_239] : memref<2x512xf32, #tpu.memory_space<vmem>>, vector<1x16xf32>
    tpu.vector_store %arg3[%c1_238, %c432_239], %230 {strides = array<i32>} : memref<2x512xf32, #tpu.memory_space<vmem>>, vector<1x16xf32>,
    %232 = vector.extract_strided_slice %111 {offsets = [28, 16], sizes = [1, 16], strides = [1, 1]} : vector<128x32xf32> to vector<1x16xf32>
    %c1_240 = arith.constant 1 : index
    %c448_241 = arith.constant 448 : index
    %233 = vector.load %arg3[%c1_240, %c448_241] : memref<2x512xf32, #tpu.memory_space<vmem>>, vector<1x16xf32>
    tpu.vector_store %arg3[%c1_240, %c448_241], %232 {strides = array<i32>} : memref<2x512xf32, #tpu.memory_space<vmem>>, vector<1x16xf32>,
    %234 = vector.extract_strided_slice %111 {offsets = [29, 16], sizes = [1, 16], strides = [1, 1]} : vector<128x32xf32> to vector<1x16xf32>
    %c1_242 = arith.constant 1 : index
    %c464_243 = arith.constant 464 : index
    %235 = vector.load %arg3[%c1_242, %c464_243] : memref<2x512xf32, #tpu.memory_space<vmem>>, vector<1x16xf32>
    tpu.vector_store %arg3[%c1_242, %c464_243], %234 {strides = array<i32>} : memref<2x512xf32, #tpu.memory_space<vmem>>, vector<1x16xf32>,
    %236 = vector.extract_strided_slice %111 {offsets = [30, 16], sizes = [1, 16], strides = [1, 1]} : vector<128x32xf32> to vector<1x16xf32>
    %c1_244 = arith.constant 1 : index
    %c480_245 = arith.constant 480 : index
    %237 = vector.load %arg3[%c1_244, %c480_245] : memref<2x512xf32, #tpu.memory_space<vmem>>, vector<1x16xf32>
    tpu.vector_store %arg3[%c1_244, %c480_245], %236 {strides = array<i32>} : memref<2x512xf32, #tpu.memory_space<vmem>>, vector<1x16xf32>,
    %238 = vector.extract_strided_slice %111 {offsets = [31, 16], sizes = [1, 16], strides = [1, 1]} : vector<128x32xf32> to vector<1x16xf32>
    %c1_246 = arith.constant 1 : index
    %c496_247 = arith.constant 496 : index
    %239 = vector.load %arg3[%c1_246, %c496_247] : memref<2x512xf32, #tpu.memory_space<vmem>>, vector<1x16xf32>
    tpu.vector_store %arg3[%c1_246, %c496_247], %238 {strides = array<i32>} : memref<2x512xf32, #tpu.memory_space<vmem>>, vector<1x16xf32>,
    return
  }
}

</mosaic_0001>

<llo_original>
// kernel: encoder_forward.1
$region0: #{encoder_forward.1}
  #allocation0 [shape = 'u32[]', space=smem, size = 0x4, offset = 0x4, fixed_abs, tag = 'smem constant byte address 0x4 - core index']
  #allocation1 [shape = 'u32[144,128]{1,0:T(1,128)}', space=vmem, size = 0x12000, scoped, tag = 'internal scratch']
  #allocation2 [shape = 'f32[200,32]{1,0:T(8,128)}', space=vmem, size = 0x19000, scoped, tag = 'scratch operand']
  #allocation3 [shape = 'f32[200,288]{1,0:T(8,128)}', space=vmem, size = 0x4b000, scoped, tag = 'scratch operand']
  #allocation4 [shape = 'f32[32,128]{1,0:T(8,128)}', space=vmem, size = 0x4000, scoped, tag = 'scratch operand']
  %s0 = inlined_call_operand.vmem [shape: bf16[200,48], index: 0, kind: input, shape index: {}]
  %s1 = inlined_call_operand.vmem [shape: bf16[912,32], index: 1, kind: input, shape index: {}]
  %s2 = inlined_call_operand.vmem [shape: f32[4,32], index: 2, kind: input, shape index: {}]
  %s3 = inlined_call_operand.hbm [shape: f32[2,512], index: 3, kind: output, shape index: {}]
  %s4 = sld [smem:[#allocation0]]
  $region22: #{encoder_forward.1} parent=0
    _
  %s6 = ssub.s32 1, %s4
  %s7 = scalar_select 0, %s6, %s4
  $region1: #{encoder_forward.1} parent=0
    #allocation5 [shape = 'u8[4096]{0}', space=vmem, size = 0x1000, scoped, tag = 'output window, operand 0, single buffered']
    #allocation6 [shape = 's32[1]{0}', space=sflag, size = 0x4, scoped, tag = 'scoped memory for encoder_forward.1']
    %8 = vsyncpa [#allocation6], 0
    // Predicated region
    $region2: #{encoder_forward.1} parent=1 // pred_check
      _
    $region3: #{encoder_forward.1} parent=1 // pred_check_branch
      %10 = sbr.rel (0) target = $region5
    $region4: #{encoder_forward.1} parent=1 // pred_region
      _
    $region5: #{encoder_forward.1} parent=1 // pred_fallthru
      _
    // Predicated region
    $region6: #{encoder_forward.1} parent=1 // pred_check
      _
    $region7: #{encoder_forward.1} parent=1 // pred_check_branch
      %12 = sbr.rel (0) target = $region9
    $region8: #{encoder_forward.1} parent=1 // pred_region
      _
    $region9: #{encoder_forward.1} parent=1 // pred_fallthru
      _
    // Predicated region
    $region10: #{encoder_forward.1} parent=1 // pred_check
      _
    $region11: #{encoder_forward.1} parent=1 // pred_check_branch
      %14 = sbr.rel (0) target = $region13
    $region12: #{encoder_forward.1} parent=1 // pred_region
      _
    $region13: #{encoder_forward.1} parent=1 // pred_fallthru
      _
    %v16 = vld [vmem:[%s0] sm:$0xf]
    %v17 = vld [vmem:[%s0 + $0x4] sm:$0xf]
    %v18 = vld [vmem:[%s0 + $0x8] sm:$0xf]
    %v19 = vld [vmem:[%s0 + $0xc] sm:$0xf]
    %v20 = vld [vmem:[%s0 + $0x10] sm:$0xf]
    %v21 = vld [vmem:[%s0 + $0x14] sm:$0xf]
    %v22 = vld [vmem:[%s0 + $0x18] sm:$0xf]
    %v23 = vld [vmem:[%s0 + $0x1c] sm:$0xf]
    %v24 = vld [vmem:[%s0 + $0x20] sm:$0xf]
    %v25 = vld [vmem:[%s0 + $0x24] sm:$0xf]
    %v26 = vld [vmem:[%s0 + $0x28] sm:$0xf]
    %v27 = vld [vmem:[%s0 + $0x2c] sm:$0xf]
    %v28 = vld [vmem:[%s0 + $0x30] sm:$0xf]
    %v29 = vld [vmem:[%s0 + $0x34] sm:$0xf]
    %v30 = vld [vmem:[%s0 + $0x38] sm:$0xf]
    %v31 = vld [vmem:[%s0 + $0x3c] sm:$0xf]
    %v32 = vld [vmem:[%s0 + $0x40] sm:$0xf]
    %v33 = vld [vmem:[%s0 + $0x44] sm:$0xf]
    %v34 = vld [vmem:[%s0 + $0x48] sm:$0xf]
    %v35 = vld [vmem:[%s0 + $0x4c] sm:$0xf]
    %v36 = vld [vmem:[%s0 + $0x50] sm:$0xf]
    %v37 = vld [vmem:[%s0 + $0x54] sm:$0xf]
    %v38 = vld [vmem:[%s0 + $0x58] sm:$0xf]
    %v39 = vld [vmem:[%s0 + $0x5c] sm:$0xf]
    %v40 = vld [vmem:[%s0 + $0x60] sm:$0xf]
    %v41 = vld [vmem:[%s1] sm:$0xf]
    %v42 = vld [vmem:[%s1 + $0x4] sm:$0xf]
    %v43 = vld [vmem:[%s1 + $0x8] sm:$0xf]
    %v44 = vld [vmem:[%s1 + $0xc] sm:$0xf]
    %v45 = vld [vmem:[%s1 + $0x10] sm:$0xf]
    %v46 = vld [vmem:[%s1 + $0x14] sm:$0xf]
    %v47 = vld [vmem:[%s2] sm:$0x1]
    %v48 = vlaneseq
    %v49 = vshrl.u32 %v48, 7
    %v50 = vsub.s32 0, %v49
    %v51 = vrot.slane %v47, %v50
    %v77 = vunpack.c.l.b16 %v16
    %v78 = vunpack.c.l.b16 %v17
    %v79 = vunpack.c.l.b16 %v18
    %v80 = vunpack.c.l.b16 %v19
    %v81 = vunpack.c.l.b16 %v20
    %v82 = vunpack.c.l.b16 %v21
    %v83 = vunpack.c.l.b16 %v22
    %v84 = vunpack.c.l.b16 %v23
    %v85 = vunpack.c.l.b16 %v24
    %v86 = vunpack.c.l.b16 %v25
    %v87 = vunpack.c.l.b16 %v26
    %v88 = vunpack.c.l.b16 %v27
    %v89 = vunpack.c.l.b16 %v28
    %v90 = vunpack.c.l.b16 %v29
    %v91 = vunpack.c.l.b16 %v30
    %v92 = vunpack.c.l.b16 %v31
    %v93 = vunpack.c.l.b16 %v32
    %v94 = vunpack.c.l.b16 %v33
    %v95 = vunpack.c.l.b16 %v34
    %v96 = vunpack.c.l.b16 %v35
    %v97 = vunpack.c.l.b16 %v36
    %v98 = vunpack.c.l.b16 %v37
    %v99 = vunpack.c.l.b16 %v38
    %v100 = vunpack.c.l.b16 %v39
    %v101 = vunpack.c.l.b16 %v40
    %v102 = vpack.c.b16 %v78, %v77
    %v103 = vpack.c.b16 %v80, %v79
    %v104 = vpack.c.b16 %v82, %v81
    %v105 = vpack.c.b16 %v84, %v83
    %v106 = vpack.c.b16 %v86, %v85
    %v107 = vpack.c.b16 %v88, %v87
    %v108 = vpack.c.b16 %v90, %v89
    %v109 = vpack.c.b16 %v92, %v91
    %v110 = vpack.c.b16 %v94, %v93
    %v111 = vpack.c.b16 %v96, %v95
    %v112 = vpack.c.b16 %v98, %v97
    %v113 = vpack.c.b16 %v100, %v99
    %v114 = vpack.c.b16 %v101, %v101
    %v121 = vunpack.c.l.b16 %v41
    %v122 = vunpack.c.l.b16 %v42
    %v123 = vunpack.c.l.b16 %v43
    %v124 = vunpack.c.l.b16 %v44
    %v125 = vunpack.c.l.b16 %v45
    %v126 = vunpack.c.l.b16 %v46
    %v127 = vpack.c.b16 %v122, %v121
    %v128 = vpack.c.b16 %v124, %v123
    %v129 = vpack.c.b16 %v126, %v125
    %vm133 = vcmask 392192
    %v135 = vsel %vm133, %v102, 0
    %v138 = vsel %vm133, %v103, 0
    %v141 = vsel %vm133, %v104, 0
    %v144 = vsel %vm133, %v105, 0
    %v147 = vsel %vm133, %v106, 0
    %v150 = vsel %vm133, %v107, 0
    %v153 = vsel %vm133, %v108, 0
    %v156 = vsel %vm133, %v109, 0
    %v159 = vsel %vm133, %v110, 0
    %v162 = vsel %vm133, %v111, 0
    %v165 = vsel %vm133, %v112, 0
    %v168 = vsel %vm133, %v113, 0
    %v171 = vsel %vm133, %v114, 0
    %173 = vmatprep.subr.bf16.mxu0 0
    %174 = vmatpush1.bf16.msra.mxu0 %v127
    %175 = vmatprep.subr.bf16.mxu0 0
    %176 = vmatpush1.bf16.msra.mxu0 %v128
    %177 = vmatprep.subr.bf16.mxu0 0
    %178 = vmatpush1.bf16.msra.mxu0 %v129
    %179 = vmatprep.subr.bf16.mxu0 0
    %180 = vmatpush1.bf16.msra.mxu0 0
    %181 = vmatprep.subr.bf16.mxu0 0
    %182 = vmatpush1.bf16.msra.mxu0 0
    %183 = vmatprep.subr.bf16.mxu0 0
    %184 = vmatpush1.bf16.msra.mxu0 0
    %185 = vmatprep.subr.bf16.mxu0 0
    %186 = vmatpush1.bf16.msra.mxu0 0
    %187 = vmatprep.subr.bf16.mxu0 0
    %188 = vmatpush1.bf16.msra.mxu0 0
    %189 = vmatprep.subr.bf16.mxu0 0
    %190 = vmatpush1.bf16.msra.mxu0 0
    %191 = vmatprep.subr.bf16.mxu0 0
    %192 = vmatpush1.bf16.msra.mxu0 0
    %193 = vmatprep.subr.bf16.mxu0 0
    %194 = vmatpush1.bf16.msra.mxu0 0
    %195 = vmatprep.subr.bf16.mxu0 0
    %196 = vmatpush1.bf16.msra.mxu0 0
    %197 = vmatprep.subr.bf16.mxu0 0
    %198 = vmatpush1.bf16.msra.mxu0 0
    %199 = vmatprep.subr.bf16.mxu0 0
    %200 = vmatpush1.bf16.msra.mxu0 0
    %201 = vmatprep.subr.bf16.mxu0 0
    %202 = vmatpush1.bf16.msra.mxu0 0
    %203 = vmatprep.subr.bf16.mxu0 0
    %204 = vmatpush1.bf16.msra.mxu0 0
    %205 = vmatprep.mubr.bf16.mxu0 0
    %206 = vmatmul.mubr.bf16.gmra.mrb[0].mxu0 %v135
    %v207 = vpop.f32.mrb[0].mxu0
    %v208 = vadd.f32 %v51, %v207
    %v209 = vpop.f32.mrb[0].mxu0
    %v210 = vpop.f32.mrb[0].mxu0
    %v211 = vadd.f32 %v51, %v210
    %v212 = vpop.f32.mrb[0].mxu0
    %213 = vmatprep.mubr.bf16.mxu0 0
    %214 = vmatmul.mubr.bf16.gmra.mrb[0].mxu0 %v138
    %v215 = vpop.f32.mrb[0].mxu0
    %v216 = vadd.f32 %v51, %v215
    %v217 = vpop.f32.mrb[0].mxu0
    %v218 = vpop.f32.mrb[0].mxu0
    %v219 = vadd.f32 %v51, %v218
    %v220 = vpop.f32.mrb[0].mxu0
    %221 = vmatprep.mubr.bf16.mxu0 0
    %222 = vmatmul.mubr.bf16.gmra.mrb[0].mxu0 %v141
    %v223 = vpop.f32.mrb[0].mxu0
    %v224 = vadd.f32 %v51, %v223
    %v225 = vpop.f32.mrb[0].mxu0
    %v226 = vpop.f32.mrb[0].mxu0
    %v227 = vadd.f32 %v51, %v226
    %v228 = vpop.f32.mrb[0].mxu0
    %229 = vmatprep.mubr.bf16.mxu0 0
    %230 = vmatmul.mubr.bf16.gmra.mrb[0].mxu0 %v144
    %v231 = vpop.f32.mrb[0].mxu0
    %v232 = vadd.f32 %v51, %v231
    %v233 = vpop.f32.mrb[0].mxu0
    %v234 = vpop.f32.mrb[0].mxu0
    %v235 = vadd.f32 %v51, %v234
    %v236 = vpop.f32.mrb[0].mxu0
    %237 = vmatprep.mubr.bf16.mxu0 0
    %238 = vmatmul.mubr.bf16.gmra.mrb[0].mxu0 %v147
    %v239 = vpop.f32.mrb[0].mxu0
    %v240 = vadd.f32 %v51, %v239
    %v241 = vpop.f32.mrb[0].mxu0
    %v242 = vpop.f32.mrb[0].mxu0
    %v243 = vadd.f32 %v51, %v242
    %v244 = vpop.f32.mrb[0].mxu0
    %245 = vmatprep.mubr.bf16.mxu0 0
    %246 = vmatmul.mubr.bf16.gmra.mrb[0].mxu0 %v150
    %v247 = vpop.f32.mrb[0].mxu0
    %v248 = vadd.f32 %v51, %v247
    %v249 = vpop.f32.mrb[0].mxu0
    %v250 = vpop.f32.mrb[0].mxu0
    %v251 = vadd.f32 %v51, %v250
    %v252 = vpop.f32.mrb[0].mxu0
    %253 = vmatprep.mubr.bf16.mxu0 0
    %254 = vmatmul.mubr.bf16.gmra.mrb[0].mxu0 %v153
    %v255 = vpop.f32.mrb[0].mxu0
    %v256 = vadd.f32 %v51, %v255
    %v257 = vpop.f32.mrb[0].mxu0
    %v258 = vpop.f32.mrb[0].mxu0
    %v259 = vadd.f32 %v51, %v258
    %v260 = vpop.f32.mrb[0].mxu0
    %261 = vmatprep.mubr.bf16.mxu0 0
    %262 = vmatmul.mubr.bf16.gmra.mrb[0].mxu0 %v156
    %v263 = vpop.f32.mrb[0].mxu0
    %v264 = vadd.f32 %v51, %v263
    %v265 = vpop.f32.mrb[0].mxu0
    %v266 = vpop.f32.mrb[0].mxu0
    %v267 = vadd.f32 %v51, %v266
    %v268 = vpop.f32.mrb[0].mxu0
    %269 = vmatprep.mubr.bf16.mxu0 0
    %270 = vmatmul.mubr.bf16.gmra.mrb[0].mxu0 %v159
    %v271 = vpop.f32.mrb[0].mxu0
    %v272 = vadd.f32 %v51, %v271
    %v273 = vpop.f32.mrb[0].mxu0
    %v274 = vpop.f32.mrb[0].mxu0
    %v275 = vadd.f32 %v51, %v274
    %v276 = vpop.f32.mrb[0].mxu0
    %277 = vmatprep.mubr.bf16.mxu0 0
    %278 = vmatmul.mubr.bf16.gmra.mrb[0].mxu0 %v162
    %v279 = vpop.f32.mrb[0].mxu0
    %v280 = vadd.f32 %v51, %v279
    %v281 = vpop.f32.mrb[0].mxu0
    %v282 = vpop.f32.mrb[0].mxu0
    %v283 = vadd.f32 %v51, %v282
    %v284 = vpop.f32.mrb[0].mxu0
    %285 = vmatprep.mubr.bf16.mxu0 0
    %286 = vmatmul.mubr.bf16.gmra.mrb[0].mxu0 %v165
    %v287 = vpop.f32.mrb[0].mxu0
    %v288 = vadd.f32 %v51, %v287
    %v289 = vpop.f32.mrb[0].mxu0
    %v290 = vpop.f32.mrb[0].mxu0
    %v291 = vadd.f32 %v51, %v290
    %v292 = vpop.f32.mrb[0].mxu0
    %293 = vmatprep.mubr.bf16.mxu0 0
    %294 = vmatmul.mubr.bf16.gmra.mrb[0].mxu0 %v168
    %v295 = vpop.f32.mrb[0].mxu0
    %v296 = vadd.f32 %v51, %v295
    %v297 = vpop.f32.mrb[0].mxu0
    %v298 = vpop.f32.mrb[0].mxu0
    %v299 = vadd.f32 %v51, %v298
    %v300 = vpop.f32.mrb[0].mxu0
    %301 = vmatprep.mubr.bf16.mxu0 0
    %302 = vmatmul.mubr.bf16.gmra.mrb[0].mxu0 %v171
    %v303 = vpop.f32.mrb[0].mxu0
    %v304 = vadd.f32 %v51, %v303
    %v305 = vpop.f32.mrb[0].mxu0
    %v306 = vpop.f32.mrb[0].mxu0
    %v307 = vpop.f32.mrb[0].mxu0
    %308 = vdwg.mxu0
    %v309 = vmax.f32 %v208, 0.0
    %v310 = vmax.f32 %v211, 0.0
    %v311 = vmax.f32 %v216, 0.0
    %v312 = vmax.f32 %v219, 0.0
    %v313 = vmax.f32 %v224, 0.0
    %v314 = vmax.f32 %v227, 0.0
    %v315 = vmax.f32 %v232, 0.0
    %v316 = vmax.f32 %v235, 0.0
    %v317 = vmax.f32 %v240, 0.0
    %v318 = vmax.f32 %v243, 0.0
    %v319 = vmax.f32 %v248, 0.0
    %v320 = vmax.f32 %v251, 0.0
    %v321 = vmax.f32 %v256, 0.0
    %v322 = vmax.f32 %v259, 0.0
    %v323 = vmax.f32 %v264, 0.0
    %v324 = vmax.f32 %v267, 0.0
    %v325 = vmax.f32 %v272, 0.0
    %v326 = vmax.f32 %v275, 0.0
    %v327 = vmax.f32 %v280, 0.0
    %v328 = vmax.f32 %v283, 0.0
    %v329 = vmax.f32 %v288, 0.0
    %v330 = vmax.f32 %v291, 0.0
    %v331 = vmax.f32 %v296, 0.0
    %v332 = vmax.f32 %v299, 0.0
    %v333 = vmax.f32 %v304, 0.0
    %vm334 = vcmask 261120
    %335 = vst.msk [vmem:[#allocation2] sm:$0xff] %vm334, %v309
    %336 = vst.msk [vmem:[#allocation2 + $0x8] sm:$0xff] %vm334, %v310
    %337 = vst.msk [vmem:[#allocation2 + $0x10] sm:$0xff] %vm334, %v311
    %338 = vst.msk [vmem:[#allocation2 + $0x18] sm:$0xff] %vm334, %v312
    %339 = vst.msk [vmem:[#allocation2 + $0x20] sm:$0xff] %vm334, %v313
    %340 = vst.msk [vmem:[#allocation2 + $0x28] sm:$0xff] %vm334, %v314
    %341 = vst.msk [vmem:[#allocation2 + $0x30] sm:$0xff] %vm334, %v315
    %342 = vst.msk [vmem:[#allocation2 + $0x38] sm:$0xff] %vm334, %v316
    %343 = vst.msk [vmem:[#allocation2 + $0x40] sm:$0xff] %vm334, %v317
    %344 = vst.msk [vmem:[#allocation2 + $0x48] sm:$0xff] %vm334, %v318
    %345 = vst.msk [vmem:[#allocation2 + $0x50] sm:$0xff] %vm334, %v319
    %346 = vst.msk [vmem:[#allocation2 + $0x58] sm:$0xff] %vm334, %v320
    %347 = vst.msk [vmem:[#allocation2 + $0x60] sm:$0xff] %vm334, %v321
    %348 = vst.msk [vmem:[#allocation2 + $0x68] sm:$0xff] %vm334, %v322
    %349 = vst.msk [vmem:[#allocation2 + $0x70] sm:$0xff] %vm334, %v323
    %350 = vst.msk [vmem:[#allocation2 + $0x78] sm:$0xff] %vm334, %v324
    %351 = vst.msk [vmem:[#allocation2 + $0x80] sm:$0xff] %vm334, %v325
    %352 = vst.msk [vmem:[#allocation2 + $0x88] sm:$0xff] %vm334, %v326
    %353 = vst.msk [vmem:[#allocation2 + $0x90] sm:$0xff] %vm334, %v327
    %354 = vst.msk [vmem:[#allocation2 + $0x98] sm:$0xff] %vm334, %v328
    %355 = vst.msk [vmem:[#allocation2 + $0xa0] sm:$0xff] %vm334, %v329
    %356 = vst.msk [vmem:[#allocation2 + $0xa8] sm:$0xff] %vm334, %v330
    %357 = vst.msk [vmem:[#allocation2 + $0xb0] sm:$0xff] %vm334, %v331
    %358 = vst.msk [vmem:[#allocation2 + $0xb8] sm:$0xff] %vm334, %v332
    %359 = vst.msk [vmem:[#allocation2 + $0xc0] sm:$0xff] %vm334, %v333
    %v360 = vld [vmem:[#allocation2] sm:$0xff]
    %v361 = vld [vmem:[#allocation2 + $0x8] sm:$0xff]
    %v362 = vld [vmem:[#allocation2 + $0x10] sm:$0xff]
    %v363 = vld [vmem:[#allocation2 + $0x18] sm:$0xff]
    %v364 = vld [vmem:[#allocation2 + $0x20] sm:$0xff]
    %v365 = vld [vmem:[#allocation2 + $0x28] sm:$0xff]
    %v366 = vld [vmem:[#allocation2 + $0x30] sm:$0xff]
    %v367 = vld [vmem:[#allocation2 + $0x38] sm:$0xff]
    %v368 = vld [vmem:[#allocation2 + $0x40] sm:$0xff]
    %v369 = vld [vmem:[#allocation2 + $0x48] sm:$0xff]
    %v370 = vld [vmem:[#allocation2 + $0x50] sm:$0xff]
    %v371 = vld [vmem:[#allocation2 + $0x58] sm:$0xff]
    %v372 = vld [vmem:[#allocation2 + $0x60] sm:$0xff]
    %v373 = vld [vmem:[#allocation2 + $0x68] sm:$0xff]
    %v374 = vld [vmem:[#allocation2 + $0x70] sm:$0xff]
    %v375 = vld [vmem:[#allocation2 + $0x78] sm:$0xff]
    %v376 = vld [vmem:[#allocation2 + $0x80] sm:$0xff]
    %v377 = vld [vmem:[#allocation2 + $0x88] sm:$0xff]
    %v378 = vld [vmem:[#allocation2 + $0x90] sm:$0xff]
    %v379 = vld [vmem:[#allocation2 + $0x98] sm:$0xff]
    %v380 = vld [vmem:[#allocation2 + $0xa0] sm:$0xff]
    %v381 = vld [vmem:[#allocation2 + $0xa8] sm:$0xff]
    %v382 = vld [vmem:[#allocation2 + $0xb0] sm:$0x3]
    %383 = vst.msk [vmem:[#allocation3] sm:$0xff] %vm334, %v360
    %384 = vst.msk [vmem:[#allocation3 + $0x18] sm:$0xff] %vm334, %v361
    %385 = vst.msk [vmem:[#allocation3 + $0x30] sm:$0xff] %vm334, %v362
    %386 = vst.msk [vmem:[#allocation3 + $0x48] sm:$0xff] %vm334, %v363
    %387 = vst.msk [vmem:[#allocation3 + $0x60] sm:$0xff] %vm334, %v364
    %388 = vst.msk [vmem:[#allocation3 + $0x78] sm:$0xff] %vm334, %v365
    %389 = vst.msk [vmem:[#allocation3 + $0x90] sm:$0xff] %vm334, %v366
    %390 = vst.msk [vmem:[#allocation3 + $0xa8] sm:$0xff] %vm334, %v367
    %391 = vst.msk [vmem:[#allocation3 + $0xc0] sm:$0xff] %vm334, %v368
    %392 = vst.msk [vmem:[#allocation3 + $0xd8] sm:$0xff] %vm334, %v369
    %393 = vst.msk [vmem:[#allocation3 + $0xf0] sm:$0xff] %vm334, %v370
    %394 = vst.msk [vmem:[#allocation3 + $0x108] sm:$0xff] %vm334, %v371
    %395 = vst.msk [vmem:[#allocation3 + $0x120] sm:$0xff] %vm334, %v372
    %396 = vst.msk [vmem:[#allocation3 + $0x138] sm:$0xff] %vm334, %v373
    %397 = vst.msk [vmem:[#allocation3 + $0x150] sm:$0xff] %vm334, %v374
    %398 = vst.msk [vmem:[#allocation3 + $0x168] sm:$0xff] %vm334, %v375
    %399 = vst.msk [vmem:[#allocation3 + $0x180] sm:$0xff] %vm334, %v376
    %400 = vst.msk [vmem:[#allocation3 + $0x198] sm:$0xff] %vm334, %v377
    %401 = vst.msk [vmem:[#allocation3 + $0x1b0] sm:$0xff] %vm334, %v378
    %402 = vst.msk [vmem:[#allocation3 + $0x1c8] sm:$0xff] %vm334, %v379
    %403 = vst.msk [vmem:[#allocation3 + $0x1e0] sm:$0xff] %vm334, %v380
    %404 = vst.msk [vmem:[#allocation3 + $0x1f8] sm:$0xff] %vm334, %v381
    %vm405 = vcmask 254976
    %406 = vst.msk [vmem:[#allocation3 + $0x210] sm:$0x3] %vm405, %v382
    %v407 = vld [vmem:[#allocation2 + $0x1] sm:$0xff]
    %v408 = vld [vmem:[#allocation2 + $0x9] sm:$0xff]
    %v409 = vld [vmem:[#allocation2 + $0x11] sm:$0xff]
    %v410 = vld [vmem:[#allocation2 + $0x19] sm:$0xff]
    %v411 = vld [vmem:[#allocation2 + $0x21] sm:$0xff]
    %v412 = vld [vmem:[#allocation2 + $0x29] sm:$0xff]
    %v413 = vld [vmem:[#allocation2 + $0x31] sm:$0xff]
    %v414 = vld [vmem:[#allocation2 + $0x39] sm:$0xff]
    %v415 = vld [vmem:[#allocation2 + $0x41] sm:$0xff]
    %v416 = vld [vmem:[#allocation2 + $0x49] sm:$0xff]
    %v417 = vld [vmem:[#allocation2 + $0x51] sm:$0xff]
    %v418 = vld [vmem:[#allocation2 + $0x59] sm:$0xff]
    %v419 = vld [vmem:[#allocation2 + $0x61] sm:$0xff]
    %v420 = vld [vmem:[#allocation2 + $0x69] sm:$0xff]
    %v421 = vld [vmem:[#allocation2 + $0x71] sm:$0xff]
    %v422 = vld [vmem:[#allocation2 + $0x79] sm:$0xff]
    %v423 = vld [vmem:[#allocation2 + $0x81] sm:$0xff]
    %v424 = vld [vmem:[#allocation2 + $0x89] sm:$0xff]
    %v425 = vld [vmem:[#allocation2 + $0x91] sm:$0xff]
    %v426 = vld [vmem:[#allocation2 + $0x99] sm:$0xff]
    %v427 = vld [vmem:[#allocation2 + $0xa1] sm:$0xff]
    %v428 = vld [vmem:[#allocation2 + $0xa9] sm:$0xff]
    %v429 = vld [vmem:[#allocation2 + $0xb1] sm:$0x3]
    %453 = vrot.lane.b32.xlu0 %v407, 32
    %v454 = vpop.permute.xlu0 %453
    %455 = vrot.lane.b32.xlu0 %v408, 32
    %v456 = vpop.permute.xlu0 %455
    %457 = vrot.lane.b32.xlu0 %v409, 32
    %v458 = vpop.permute.xlu0 %457
    %459 = vrot.lane.b32.xlu0 %v410, 32
    %v460 = vpop.permute.xlu0 %459
    %461 = vrot.lane.b32.xlu0 %v411, 32
    %v462 = vpop.permute.xlu0 %461
    %463 = vrot.lane.b32.xlu0 %v412, 32
    %v464 = vpop.permute.xlu0 %463
    %465 = vrot.lane.b32.xlu0 %v413, 32
    %v466 = vpop.permute.xlu0 %465
    %467 = vrot.lane.b32.xlu0 %v414, 32
    %v468 = vpop.permute.xlu0 %467
    %469 = vrot.lane.b32.xlu0 %v415, 32
    %v470 = vpop.permute.xlu0 %469
    %471 = vrot.lane.b32.xlu0 %v416, 32
    %v472 = vpop.permute.xlu0 %471
    %473 = vrot.lane.b32.xlu0 %v417, 32
    %v474 = vpop.permute.xlu0 %473
    %475 = vrot.lane.b32.xlu0 %v418, 32
    %v476 = vpop.permute.xlu0 %475
    %477 = vrot.lane.b32.xlu0 %v419, 32
    %v478 = vpop.permute.xlu0 %477
    %479 = vrot.lane.b32.xlu0 %v420, 32
    %v480 = vpop.permute.xlu0 %479
    %481 = vrot.lane.b32.xlu0 %v421, 32
    %v482 = vpop.permute.xlu0 %481
    %483 = vrot.lane.b32.xlu0 %v422, 32
    %v484 = vpop.permute.xlu0 %483
    %485 = vrot.lane.b32.xlu0 %v423, 32
    %v486 = vpop.permute.xlu0 %485
    %487 = vrot.lane.b32.xlu0 %v424, 32
    %v488 = vpop.permute.xlu0 %487
    %489 = vrot.lane.b32.xlu0 %v425, 32
    %v490 = vpop.permute.xlu0 %489
    %491 = vrot.lane.b32.xlu0 %v426, 32
    %v492 = vpop.permute.xlu0 %491
    %493 = vrot.lane.b32.xlu0 %v427, 32
    %v494 = vpop.permute.xlu0 %493
    %495 = vrot.lane.b32.xlu0 %v428, 32
    %v496 = vpop.permute.xlu0 %495
    %497 = vrot.lane.b32.xlu0 %v429, 32
    %v498 = vpop.permute.xlu0 %497
    %vm522 = vcmask 523520
    %523 = vst.msk [vmem:[#allocation3] sm:$0xff] %vm522, %v454
    %524 = vst.msk [vmem:[#allocation3 + $0x18] sm:$0xff] %vm522, %v456
    %525 = vst.msk [vmem:[#allocation3 + $0x30] sm:$0xff] %vm522, %v458
    %526 = vst.msk [vmem:[#allocation3 + $0x48] sm:$0xff] %vm522, %v460
    %527 = vst.msk [vmem:[#allocation3 + $0x60] sm:$0xff] %vm522, %v462
    %528 = vst.msk [vmem:[#allocation3 + $0x78] sm:$0xff] %vm522, %v464
    %529 = vst.msk [vmem:[#allocation3 + $0x90] sm:$0xff] %vm522, %v466
    %530 = vst.msk [vmem:[#allocation3 + $0xa8] sm:$0xff] %vm522, %v468
    %531 = vst.msk [vmem:[#allocation3 + $0xc0] sm:$0xff] %vm522, %v470
    %532 = vst.msk [vmem:[#allocation3 + $0xd8] sm:$0xff] %vm522, %v472
    %533 = vst.msk [vmem:[#allocation3 + $0xf0] sm:$0xff] %vm522, %v474
    %534 = vst.msk [vmem:[#allocation3 + $0x108] sm:$0xff] %vm522, %v476
    %535 = vst.msk [vmem:[#allocation3 + $0x120] sm:$0xff] %vm522, %v478
    %536 = vst.msk [vmem:[#allocation3 + $0x138] sm:$0xff] %vm522, %v480
    %537 = vst.msk [vmem:[#allocation3 + $0x150] sm:$0xff] %vm522, %v482
    %538 = vst.msk [vmem:[#allocation3 + $0x168] sm:$0xff] %vm522, %v484
    %539 = vst.msk [vmem:[#allocation3 + $0x180] sm:$0xff] %vm522, %v486
    %540 = vst.msk [vmem:[#allocation3 + $0x198] sm:$0xff] %vm522, %v488
    %541 = vst.msk [vmem:[#allocation3 + $0x1b0] sm:$0xff] %vm522, %v490
    %542 = vst.msk [vmem:[#allocation3 + $0x1c8] sm:$0xff] %vm522, %v492
    %543 = vst.msk [vmem:[#allocation3 + $0x1e0] sm:$0xff] %vm522, %v494
    %544 = vst.msk [vmem:[#allocation3 + $0x1f8] sm:$0xff] %vm522, %v496
    %vm545 = vcmask 517376
    %546 = vst.msk [vmem:[#allocation3 + $0x210] sm:$0x3] %vm545, %v498
    %v547 = vld [vmem:[#allocation2 + $0x2] sm:$0xff]
    %v548 = vld [vmem:[#allocation2 + $0xa] sm:$0xff]
    %v549 = vld [vmem:[#allocation2 + $0x12] sm:$0xff]
    %v550 = vld [vmem:[#allocation2 + $0x1a] sm:$0xff]
    %v551 = vld [vmem:[#allocation2 + $0x22] sm:$0xff]
    %v552 = vld [vmem:[#allocation2 + $0x2a] sm:$0xff]
    %v553 = vld [vmem:[#allocation2 + $0x32] sm:$0xff]
    %v554 = vld [vmem:[#allocation2 + $0x3a] sm:$0xff]
    %v555 = vld [vmem:[#allocation2 + $0x42] sm:$0xff]
    %v556 = vld [vmem:[#allocation2 + $0x4a] sm:$0xff]
    %v557 = vld [vmem:[#allocation2 + $0x52] sm:$0xff]
    %v558 = vld [vmem:[#allocation2 + $0x5a] sm:$0xff]
    %v559 = vld [vmem:[#allocation2 + $0x62] sm:$0xff]
    %v560 = vld [vmem:[#allocation2 + $0x6a] sm:$0xff]
    %v561 = vld [vmem:[#allocation2 + $0x72] sm:$0xff]
    %v562 = vld [vmem:[#allocation2 + $0x7a] sm:$0xff]
    %v563 = vld [vmem:[#allocation2 + $0x82] sm:$0xff]
    %v564 = vld [vmem:[#allocation2 + $0x8a] sm:$0xff]
    %v565 = vld [vmem:[#allocation2 + $0x92] sm:$0xff]
    %v566 = vld [vmem:[#allocation2 + $0x9a] sm:$0xff]
    %v567 = vld [vmem:[#allocation2 + $0xa2] sm:$0xff]
    %v568 = vld [vmem:[#allocation2 + $0xaa] sm:$0xff]
    %v569 = vld [vmem:[#allocation2 + $0xb2] sm:$0x3]
    %593 = vrot.lane.b32.xlu0 %v547, 64
    %v594 = vpop.permute.xlu0 %593
    %595 = vrot.lane.b32.xlu0 %v548, 64
    %v596 = vpop.permute.xlu0 %595
    %597 = vrot.lane.b32.xlu0 %v549, 64
    %v598 = vpop.permute.xlu0 %597
    %599 = vrot.lane.b32.xlu0 %v550, 64
    %v600 = vpop.permute.xlu0 %599
    %601 = vrot.lane.b32.xlu0 %v551, 64
    %v602 = vpop.permute.xlu0 %601
    %603 = vrot.lane.b32.xlu0 %v552, 64
    %v604 = vpop.permute.xlu0 %603
    %605 = vrot.lane.b32.xlu0 %v553, 64
    %v606 = vpop.permute.xlu0 %605
    %607 = vrot.lane.b32.xlu0 %v554, 64
    %v608 = vpop.permute.xlu0 %607
    %609 = vrot.lane.b32.xlu0 %v555, 64
    %v610 = vpop.permute.xlu0 %609
    %611 = vrot.lane.b32.xlu0 %v556, 64
    %v612 = vpop.permute.xlu0 %611
    %613 = vrot.lane.b32.xlu0 %v557, 64
    %v614 = vpop.permute.xlu0 %613
    %615 = vrot.lane.b32.xlu0 %v558, 64
    %v616 = vpop.permute.xlu0 %615
    %617 = vrot.lane.b32.xlu0 %v559, 64
    %v618 = vpop.permute.xlu0 %617
    %619 = vrot.lane.b32.xlu0 %v560, 64
    %v620 = vpop.permute.xlu0 %619
    %621 = vrot.lane.b32.xlu0 %v561, 64
    %v622 = vpop.permute.xlu0 %621
    %623 = vrot.lane.b32.xlu0 %v562, 64
    %v624 = vpop.permute.xlu0 %623
    %625 = vrot.lane.b32.xlu0 %v563, 64
    %v626 = vpop.permute.xlu0 %625
    %627 = vrot.lane.b32.xlu0 %v564, 64
    %v628 = vpop.permute.xlu0 %627
    %629 = vrot.lane.b32.xlu0 %v565, 64
    %v630 = vpop.permute.xlu0 %629
    %631 = vrot.lane.b32.xlu0 %v566, 64
    %v632 = vpop.permute.xlu0 %631
    %633 = vrot.lane.b32.xlu0 %v567, 64
    %v634 = vpop.permute.xlu0 %633
    %635 = vrot.lane.b32.xlu0 %v568, 64
    %v636 = vpop.permute.xlu0 %635
    %637 = vrot.lane.b32.xlu0 %v569, 64
    %v638 = vpop.permute.xlu0 %637
    %vm662 = vcmask 785920
    %663 = vst.msk [vmem:[#allocation3] sm:$0xff] %vm662, %v594
    %664 = vst.msk [vmem:[#allocation3 + $0x18] sm:$0xff] %vm662, %v596
    %665 = vst.msk [vmem:[#allocation3 + $0x30] sm:$0xff] %vm662, %v598
    %666 = vst.msk [vmem:[#allocation3 + $0x48] sm:$0xff] %vm662, %v600
    %667 = vst.msk [vmem:[#allocation3 + $0x60] sm:$0xff] %vm662, %v602
    %668 = vst.msk [vmem:[#allocation3 + $0x78] sm:$0xff] %vm662, %v604
    %669 = vst.msk [vmem:[#allocation3 + $0x90] sm:$0xff] %vm662, %v606
    %670 = vst.msk [vmem:[#allocation3 + $0xa8] sm:$0xff] %vm662, %v608
    %671 = vst.msk [vmem:[#allocation3 + $0xc0] sm:$0xff] %vm662, %v610
    %672 = vst.msk [vmem:[#allocation3 + $0xd8] sm:$0xff] %vm662, %v612
    %673 = vst.msk [vmem:[#allocation3 + $0xf0] sm:$0xff] %vm662, %v614
    %674 = vst.msk [vmem:[#allocation3 + $0x108] sm:$0xff] %vm662, %v616
    %675 = vst.msk [vmem:[#allocation3 + $0x120] sm:$0xff] %vm662, %v618
    %676 = vst.msk [vmem:[#allocation3 + $0x138] sm:$0xff] %vm662, %v620
    %677 = vst.msk [vmem:[#allocation3 + $0x150] sm:$0xff] %vm662, %v622
    %678 = vst.msk [vmem:[#allocation3 + $0x168] sm:$0xff] %vm662, %v624
    %679 = vst.msk [vmem:[#allocation3 + $0x180] sm:$0xff] %vm662, %v626
    %680 = vst.msk [vmem:[#allocation3 + $0x198] sm:$0xff] %vm662, %v628
    %681 = vst.msk [vmem:[#allocation3 + $0x1b0] sm:$0xff] %vm662, %v630
    %682 = vst.msk [vmem:[#allocation3 + $0x1c8] sm:$0xff] %vm662, %v632
    %683 = vst.msk [vmem:[#allocation3 + $0x1e0] sm:$0xff] %vm662, %v634
    %684 = vst.msk [vmem:[#allocation3 + $0x1f8] sm:$0xff] %vm662, %v636
    %vm685 = vcmask 779776
    %686 = vst.msk [vmem:[#allocation3 + $0x210] sm:$0x3] %vm685, %v638
    %v687 = vld [vmem:[#allocation2 + $0xa] sm:$0xff]
    %v688 = vld [vmem:[#allocation2 + $0x12] sm:$0xff]
    %v689 = vld [vmem:[#allocation2 + $0x1a] sm:$0xff]
    %v690 = vld [vmem:[#allocation2 + $0x22] sm:$0xff]
    %v691 = vld [vmem:[#allocation2 + $0x2a] sm:$0xff]
    %v692 = vld [vmem:[#allocation2 + $0x32] sm:$0xff]
    %v693 = vld [vmem:[#allocation2 + $0x3a] sm:$0xff]
    %v694 = vld [vmem:[#allocation2 + $0x42] sm:$0xff]
    %v695 = vld [vmem:[#allocation2 + $0x4a] sm:$0xff]
    %v696 = vld [vmem:[#allocation2 + $0x52] sm:$0xff]
    %v697 = vld [vmem:[#allocation2 + $0x5a] sm:$0xff]
    %v698 = vld [vmem:[#allocation2 + $0x62] sm:$0xff]
    %v699 = vld [vmem:[#allocation2 + $0x6a] sm:$0xff]
    %v700 = vld [vmem:[#allocation2 + $0x72] sm:$0xff]
    %v701 = vld [vmem:[#allocation2 + $0x7a] sm:$0xff]
    %v702 = vld [vmem:[#allocation2 + $0x82] sm:$0xff]
    %v703 = vld [vmem:[#allocation2 + $0x8a] sm:$0xff]
    %v704 = vld [vmem:[#allocation2 + $0x92] sm:$0xff]
    %v705 = vld [vmem:[#allocation2 + $0x9a] sm:$0xff]
    %v706 = vld [vmem:[#allocation2 + $0xa2] sm:$0xff]
    %v707 = vld [vmem:[#allocation2 + $0xaa] sm:$0xff]
    %v708 = vld [vmem:[#allocation2 + $0xb2] sm:$0xff]
    %v709 = vld [vmem:[#allocation2 + $0xba] sm:$0x3]
    %733 = vrot.lane.b32.xlu0 %v687, 96
    %v734 = vpop.permute.xlu0 %733
    %735 = vrot.lane.b32.xlu0 %v688, 96
    %v736 = vpop.permute.xlu0 %735
    %737 = vrot.lane.b32.xlu0 %v689, 96
    %v738 = vpop.permute.xlu0 %737
    %739 = vrot.lane.b32.xlu0 %v690, 96
    %v740 = vpop.permute.xlu0 %739
    %741 = vrot.lane.b32.xlu0 %v691, 96
    %v742 = vpop.permute.xlu0 %741
    %743 = vrot.lane.b32.xlu0 %v692, 96
    %v744 = vpop.permute.xlu0 %743
    %745 = vrot.lane.b32.xlu0 %v693, 96
    %v746 = vpop.permute.xlu0 %745
    %747 = vrot.lane.b32.xlu0 %v694, 96
    %v748 = vpop.permute.xlu0 %747
    %749 = vrot.lane.b32.xlu0 %v695, 96
    %v750 = vpop.permute.xlu0 %749
    %751 = vrot.lane.b32.xlu0 %v696, 96
    %v752 = vpop.permute.xlu0 %751
    %753 = vrot.lane.b32.xlu0 %v697, 96
    %v754 = vpop.permute.xlu0 %753
    %755 = vrot.lane.b32.xlu0 %v698, 96
    %v756 = vpop.permute.xlu0 %755
    %757 = vrot.lane.b32.xlu0 %v699, 96
    %v758 = vpop.permute.xlu0 %757
    %759 = vrot.lane.b32.xlu0 %v700, 96
    %v760 = vpop.permute.xlu0 %759
    %761 = vrot.lane.b32.xlu0 %v701, 96
    %v762 = vpop.permute.xlu0 %761
    %763 = vrot.lane.b32.xlu0 %v702, 96
    %v764 = vpop.permute.xlu0 %763
    %765 = vrot.lane.b32.xlu0 %v703, 96
    %v766 = vpop.permute.xlu0 %765
    %767 = vrot.lane.b32.xlu0 %v704, 96
    %v768 = vpop.permute.xlu0 %767
    %769 = vrot.lane.b32.xlu0 %v705, 96
    %v770 = vpop.permute.xlu0 %769
    %771 = vrot.lane.b32.xlu0 %v706, 96
    %v772 = vpop.permute.xlu0 %771
    %773 = vrot.lane.b32.xlu0 %v707, 96
    %v774 = vpop.permute.xlu0 %773
    %775 = vrot.lane.b32.xlu0 %v708, 96
    %v776 = vpop.permute.xlu0 %775
    %777 = vrot.lane.b32.xlu0 %v709, 96
    %v778 = vpop.permute.xlu0 %777
    %vm802 = vcmask 1048320
    %803 = vst.msk [vmem:[#allocation3] sm:$0xff] %vm802, %v734
    %804 = vst.msk [vmem:[#allocation3 + $0x18] sm:$0xff] %vm802, %v736
    %805 = vst.msk [vmem:[#allocation3 + $0x30] sm:$0xff] %vm802, %v738
    %806 = vst.msk [vmem:[#allocation3 + $0x48] sm:$0xff] %vm802, %v740
    %807 = vst.msk [vmem:[#allocation3 + $0x60] sm:$0xff] %vm802, %v742
    %808 = vst.msk [vmem:[#allocation3 + $0x78] sm:$0xff] %vm802, %v744
    %809 = vst.msk [vmem:[#allocation3 + $0x90] sm:$0xff] %vm802, %v746
    %810 = vst.msk [vmem:[#allocation3 + $0xa8] sm:$0xff] %vm802, %v748
    %811 = vst.msk [vmem:[#allocation3 + $0xc0] sm:$0xff] %vm802, %v750
    %812 = vst.msk [vmem:[#allocation3 + $0xd8] sm:$0xff] %vm802, %v752
    %813 = vst.msk [vmem:[#allocation3 + $0xf0] sm:$0xff] %vm802, %v754
    %814 = vst.msk [vmem:[#allocation3 + $0x108] sm:$0xff] %vm802, %v756
    %815 = vst.msk [vmem:[#allocation3 + $0x120] sm:$0xff] %vm802, %v758
    %816 = vst.msk [vmem:[#allocation3 + $0x138] sm:$0xff] %vm802, %v760
    %817 = vst.msk [vmem:[#allocation3 + $0x150] sm:$0xff] %vm802, %v762
    %818 = vst.msk [vmem:[#allocation3 + $0x168] sm:$0xff] %vm802, %v764
    %819 = vst.msk [vmem:[#allocation3 + $0x180] sm:$0xff] %vm802, %v766
    %820 = vst.msk [vmem:[#allocation3 + $0x198] sm:$0xff] %vm802, %v768
    %821 = vst.msk [vmem:[#allocation3 + $0x1b0] sm:$0xff] %vm802, %v770
    %822 = vst.msk [vmem:[#allocation3 + $0x1c8] sm:$0xff] %vm802, %v772
    %823 = vst.msk [vmem:[#allocation3 + $0x1e0] sm:$0xff] %vm802, %v774
    %824 = vst.msk [vmem:[#allocation3 + $0x1f8] sm:$0xff] %vm802, %v776
    %vm825 = vcmask 1042176
    %826 = vst.msk [vmem:[#allocation3 + $0x210] sm:$0x3] %vm825, %v778
    %v827 = vld [vmem:[#allocation2 + $0xb] sm:$0xff]
    %v828 = vld [vmem:[#allocation2 + $0x13] sm:$0xff]
    %v829 = vld [vmem:[#allocation2 + $0x1b] sm:$0xff]
    %v830 = vld [vmem:[#allocation2 + $0x23] sm:$0xff]
    %v831 = vld [vmem:[#allocation2 + $0x2b] sm:$0xff]
    %v832 = vld [vmem:[#allocation2 + $0x33] sm:$0xff]
    %v833 = vld [vmem:[#allocation2 + $0x3b] sm:$0xff]
    %v834 = vld [vmem:[#allocation2 + $0x43] sm:$0xff]
    %v835 = vld [vmem:[#allocation2 + $0x4b] sm:$0xff]
    %v836 = vld [vmem:[#allocation2 + $0x53] sm:$0xff]
    %v837 = vld [vmem:[#allocation2 + $0x5b] sm:$0xff]
    %v838 = vld [vmem:[#allocation2 + $0x63] sm:$0xff]
    %v839 = vld [vmem:[#allocation2 + $0x6b] sm:$0xff]
    %v840 = vld [vmem:[#allocation2 + $0x73] sm:$0xff]
    %v841 = vld [vmem:[#allocation2 + $0x7b] sm:$0xff]
    %v842 = vld [vmem:[#allocation2 + $0x83] sm:$0xff]
    %v843 = vld [vmem:[#allocation2 + $0x8b] sm:$0xff]
    %v844 = vld [vmem:[#allocation2 + $0x93] sm:$0xff]
    %v845 = vld [vmem:[#allocation2 + $0x9b] sm:$0xff]
    %v846 = vld [vmem:[#allocation2 + $0xa3] sm:$0xff]
    %v847 = vld [vmem:[#allocation2 + $0xab] sm:$0xff]
    %v848 = vld [vmem:[#allocation2 + $0xb3] sm:$0xff]
    %v849 = vld [vmem:[#allocation2 + $0xbb] sm:$0x3]
    %850 = vst.msk [vmem:[#allocation3 + $0x8] sm:$0xff] %vm334, %v827
    %851 = vst.msk [vmem:[#allocation3 + $0x20] sm:$0xff] %vm334, %v828
    %852 = vst.msk [vmem:[#allocation3 + $0x38] sm:$0xff] %vm334, %v829
    %853 = vst.msk [vmem:[#allocation3 + $0x50] sm:$0xff] %vm334, %v830
    %854 = vst.msk [vmem:[#allocation3 + $0x68] sm:$0xff] %vm334, %v831
    %855 = vst.msk [vmem:[#allocation3 + $0x80] sm:$0xff] %vm334, %v832
    %856 = vst.msk [vmem:[#allocation3 + $0x98] sm:$0xff] %vm334, %v833
    %857 = vst.msk [vmem:[#allocation3 + $0xb0] sm:$0xff] %vm334, %v834
    %858 = vst.msk [vmem:[#allocation3 + $0xc8] sm:$0xff] %vm334, %v835
    %859 = vst.msk [vmem:[#allocation3 + $0xe0] sm:$0xff] %vm334, %v836
    %860 = vst.msk [vmem:[#allocation3 + $0xf8] sm:$0xff] %vm334, %v837
    %861 = vst.msk [vmem:[#allocation3 + $0x110] sm:$0xff] %vm334, %v838
    %862 = vst.msk [vmem:[#allocation3 + $0x128] sm:$0xff] %vm334, %v839
    %863 = vst.msk [vmem:[#allocation3 + $0x140] sm:$0xff] %vm334, %v840
    %864 = vst.msk [vmem:[#allocation3 + $0x158] sm:$0xff] %vm334, %v841
    %865 = vst.msk [vmem:[#allocation3 + $0x170] sm:$0xff] %vm334, %v842
    %866 = vst.msk [vmem:[#allocation3 + $0x188] sm:$0xff] %vm334, %v843
    %867 = vst.msk [vmem:[#allocation3 + $0x1a0] sm:$0xff] %vm334, %v844
    %868 = vst.msk [vmem:[#allocation3 + $0x1b8] sm:$0xff] %vm334, %v845
    %869 = vst.msk [vmem:[#allocation3 + $0x1d0] sm:$0xff] %vm334, %v846
    %870 = vst.msk [vmem:[#allocation3 + $0x1e8] sm:$0xff] %vm334, %v847
    %871 = vst.msk [vmem:[#allocation3 + $0x200] sm:$0xff] %vm334, %v848
    %872 = vst.msk [vmem:[#allocation3 + $0x218] sm:$0x3] %vm405, %v849
    %v873 = vld [vmem:[#allocation2 + $0xc] sm:$0xff]
    %v874 = vld [vmem:[#allocation2 + $0x14] sm:$0xff]
    %v875 = vld [vmem:[#allocation2 + $0x1c] sm:$0xff]
    %v876 = vld [vmem:[#allocation2 + $0x24] sm:$0xff]
    %v877 = vld [vmem:[#allocation2 + $0x2c] sm:$0xff]
    %v878 = vld [vmem:[#allocation2 + $0x34] sm:$0xff]
    %v879 = vld [vmem:[#allocation2 + $0x3c] sm:$0xff]
    %v880 = vld [vmem:[#allocation2 + $0x44] sm:$0xff]
    %v881 = vld [vmem:[#allocation2 + $0x4c] sm:$0xff]
    %v882 = vld [vmem:[#allocation2 + $0x54] sm:$0xff]
    %v883 = vld [vmem:[#allocation2 + $0x5c] sm:$0xff]
    %v884 = vld [vmem:[#allocation2 + $0x64] sm:$0xff]
    %v885 = vld [vmem:[#allocation2 + $0x6c] sm:$0xff]
    %v886 = vld [vmem:[#allocation2 + $0x74] sm:$0xff]
    %v887 = vld [vmem:[#allocation2 + $0x7c] sm:$0xff]
    %v888 = vld [vmem:[#allocation2 + $0x84] sm:$0xff]
    %v889 = vld [vmem:[#allocation2 + $0x8c] sm:$0xff]
    %v890 = vld [vmem:[#allocation2 + $0x94] sm:$0xff]
    %v891 = vld [vmem:[#allocation2 + $0x9c] sm:$0xff]
    %v892 = vld [vmem:[#allocation2 + $0xa4] sm:$0xff]
    %v893 = vld [vmem:[#allocation2 + $0xac] sm:$0xff]
    %v894 = vld [vmem:[#allocation2 + $0xb4] sm:$0xff]
    %v895 = vld [vmem:[#allocation2 + $0xbc] sm:$0x3]
    %919 = vrot.lane.b32.xlu0 %v873, 32
    %v920 = vpop.permute.xlu0 %919
    %921 = vrot.lane.b32.xlu0 %v874, 32
    %v922 = vpop.permute.xlu0 %921
    %923 = vrot.lane.b32.xlu0 %v875, 32
    %v924 = vpop.permute.xlu0 %923
    %925 = vrot.lane.b32.xlu0 %v876, 32
    %v926 = vpop.permute.xlu0 %925
    %927 = vrot.lane.b32.xlu0 %v877, 32
    %v928 = vpop.permute.xlu0 %927
    %929 = vrot.lane.b32.xlu0 %v878, 32
    %v930 = vpop.permute.xlu0 %929
    %931 = vrot.lane.b32.xlu0 %v879, 32
    %v932 = vpop.permute.xlu0 %931
    %933 = vrot.lane.b32.xlu0 %v880, 32
    %v934 = vpop.permute.xlu0 %933
    %935 = vrot.lane.b32.xlu0 %v881, 32
    %v936 = vpop.permute.xlu0 %935
    %937 = vrot.lane.b32.xlu0 %v882, 32
    %v938 = vpop.permute.xlu0 %937
    %939 = vrot.lane.b32.xlu0 %v883, 32
    %v940 = vpop.permute.xlu0 %939
    %941 = vrot.lane.b32.xlu0 %v884, 32
    %v942 = vpop.permute.xlu0 %941
    %943 = vrot.lane.b32.xlu0 %v885, 32
    %v944 = vpop.permute.xlu0 %943
    %945 = vrot.lane.b32.xlu0 %v886, 32
    %v946 = vpop.permute.xlu0 %945
    %947 = vrot.lane.b32.xlu0 %v887, 32
    %v948 = vpop.permute.xlu0 %947
    %949 = vrot.lane.b32.xlu0 %v888, 32
    %v950 = vpop.permute.xlu0 %949
    %951 = vrot.lane.b32.xlu0 %v889, 32
    %v952 = vpop.permute.xlu0 %951
    %953 = vrot.lane.b32.xlu0 %v890, 32
    %v954 = vpop.permute.xlu0 %953
    %955 = vrot.lane.b32.xlu0 %v891, 32
    %v956 = vpop.permute.xlu0 %955
    %957 = vrot.lane.b32.xlu0 %v892, 32
    %v958 = vpop.permute.xlu0 %957
    %959 = vrot.lane.b32.xlu0 %v893, 32
    %v960 = vpop.permute.xlu0 %959
    %961 = vrot.lane.b32.xlu0 %v894, 32
    %v962 = vpop.permute.xlu0 %961
    %963 = vrot.lane.b32.xlu0 %v895, 32
    %v964 = vpop.permute.xlu0 %963
    %988 = vst.msk [vmem:[#allocation3 + $0x8] sm:$0xff] %vm522, %v920
    %989 = vst.msk [vmem:[#allocation3 + $0x20] sm:$0xff] %vm522, %v922
    %990 = vst.msk [vmem:[#allocation3 + $0x38] sm:$0xff] %vm522, %v924
    %991 = vst.msk [vmem:[#allocation3 + $0x50] sm:$0xff] %vm522, %v926
    %992 = vst.msk [vmem:[#allocation3 + $0x68] sm:$0xff] %vm522, %v928
    %993 = vst.msk [vmem:[#allocation3 + $0x80] sm:$0xff] %vm522, %v930
    %994 = vst.msk [vmem:[#allocation3 + $0x98] sm:$0xff] %vm522, %v932
    %995 = vst.msk [vmem:[#allocation3 + $0xb0] sm:$0xff] %vm522, %v934
    %996 = vst.msk [vmem:[#allocation3 + $0xc8] sm:$0xff] %vm522, %v936
    %997 = vst.msk [vmem:[#allocation3 + $0xe0] sm:$0xff] %vm522, %v938
    %998 = vst.msk [vmem:[#allocation3 + $0xf8] sm:$0xff] %vm522, %v940
    %999 = vst.msk [vmem:[#allocation3 + $0x110] sm:$0xff] %vm522, %v942
    %1000 = vst.msk [vmem:[#allocation3 + $0x128] sm:$0xff] %vm522, %v944
    %1001 = vst.msk [vmem:[#allocation3 + $0x140] sm:$0xff] %vm522, %v946
    %1002 = vst.msk [vmem:[#allocation3 + $0x158] sm:$0xff] %vm522, %v948
    %1003 = vst.msk [vmem:[#allocation3 + $0x170] sm:$0xff] %vm522, %v950
    %1004 = vst.msk [vmem:[#allocation3 + $0x188] sm:$0xff] %vm522, %v952
    %1005 = vst.msk [vmem:[#allocation3 + $0x1a0] sm:$0xff] %vm522, %v954
    %1006 = vst.msk [vmem:[#allocation3 + $0x1b8] sm:$0xff] %vm522, %v956
    %1007 = vst.msk [vmem:[#allocation3 + $0x1d0] sm:$0xff] %vm522, %v958
    %1008 = vst.msk [vmem:[#allocation3 + $0x1e8] sm:$0xff] %vm522, %v960
    %1009 = vst.msk [vmem:[#allocation3 + $0x200] sm:$0xff] %vm522, %v962
    %1010 = vst.msk [vmem:[#allocation3 + $0x218] sm:$0x3] %vm545, %v964
    %v1011 = vld [vmem:[#allocation2 + $0x14] sm:$0xff]
    %v1012 = vld [vmem:[#allocation2 + $0x1c] sm:$0xff]
    %v1013 = vld [vmem:[#allocation2 + $0x24] sm:$0xff]
    %v1014 = vld [vmem:[#allocation2 + $0x2c] sm:$0xff]
    %v1015 = vld [vmem:[#allocation2 + $0x34] sm:$0xff]
    %v1016 = vld [vmem:[#allocation2 + $0x3c] sm:$0xff]
    %v1017 = vld [vmem:[#allocation2 + $0x44] sm:$0xff]
    %v1018 = vld [vmem:[#allocation2 + $0x4c] sm:$0xff]
    %v1019 = vld [vmem:[#allocation2 + $0x54] sm:$0xff]
    %v1020 = vld [vmem:[#allocation2 + $0x5c] sm:$0xff]
    %v1021 = vld [vmem:[#allocation2 + $0x64] sm:$0xff]
    %v1022 = vld [vmem:[#allocation2 + $0x6c] sm:$0xff]
    %v1023 = vld [vmem:[#allocation2 + $0x74] sm:$0xff]
    %v1024 = vld [vmem:[#allocation2 + $0x7c] sm:$0xff]
    %v1025 = vld [vmem:[#allocation2 + $0x84] sm:$0xff]
    %v1026 = vld [vmem:[#allocation2 + $0x8c] sm:$0xff]
    %v1027 = vld [vmem:[#allocation2 + $0x94] sm:$0xff]
    %v1028 = vld [vmem:[#allocation2 + $0x9c] sm:$0xff]
    %v1029 = vld [vmem:[#allocation2 + $0xa4] sm:$0xff]
    %v1030 = vld [vmem:[#allocation2 + $0xac] sm:$0xff]
    %v1031 = vld [vmem:[#allocation2 + $0xb4] sm:$0xff]
    %v1032 = vld [vmem:[#allocation2 + $0xbc] sm:$0xff]
    %v1033 = vld [vmem:[#allocation2 + $0xc4] sm:$0x3]
    %1057 = vrot.lane.b32.xlu0 %v1011, 64
    %v1058 = vpop.permute.xlu0 %1057
    %1059 = vrot.lane.b32.xlu0 %v1012, 64
    %v1060 = vpop.permute.xlu0 %1059
    %1061 = vrot.lane.b32.xlu0 %v1013, 64
    %v1062 = vpop.permute.xlu0 %1061
    %1063 = vrot.lane.b32.xlu0 %v1014, 64
    %v1064 = vpop.permute.xlu0 %1063
    %1065 = vrot.lane.b32.xlu0 %v1015, 64
    %v1066 = vpop.permute.xlu0 %1065
    %1067 = vrot.lane.b32.xlu0 %v1016, 64
    %v1068 = vpop.permute.xlu0 %1067
    %1069 = vrot.lane.b32.xlu0 %v1017, 64
    %v1070 = vpop.permute.xlu0 %1069
    %1071 = vrot.lane.b32.xlu0 %v1018, 64
    %v1072 = vpop.permute.xlu0 %1071
    %1073 = vrot.lane.b32.xlu0 %v1019, 64
    %v1074 = vpop.permute.xlu0 %1073
    %1075 = vrot.lane.b32.xlu0 %v1020, 64
    %v1076 = vpop.permute.xlu0 %1075
    %1077 = vrot.lane.b32.xlu0 %v1021, 64
    %v1078 = vpop.permute.xlu0 %1077
    %1079 = vrot.lane.b32.xlu0 %v1022, 64
    %v1080 = vpop.permute.xlu0 %1079
    %1081 = vrot.lane.b32.xlu0 %v1023, 64
    %v1082 = vpop.permute.xlu0 %1081
    %1083 = vrot.lane.b32.xlu0 %v1024, 64
    %v1084 = vpop.permute.xlu0 %1083
    %1085 = vrot.lane.b32.xlu0 %v1025, 64
    %v1086 = vpop.permute.xlu0 %1085
    %1087 = vrot.lane.b32.xlu0 %v1026, 64
    %v1088 = vpop.permute.xlu0 %1087
    %1089 = vrot.lane.b32.xlu0 %v1027, 64
    %v1090 = vpop.permute.xlu0 %1089
    %1091 = vrot.lane.b32.xlu0 %v1028, 64
    %v1092 = vpop.permute.xlu0 %1091
    %1093 = vrot.lane.b32.xlu0 %v1029, 64
    %v1094 = vpop.permute.xlu0 %1093
    %1095 = vrot.lane.b32.xlu0 %v1030, 64
    %v1096 = vpop.permute.xlu0 %1095
    %1097 = vrot.lane.b32.xlu0 %v1031, 64
    %v1098 = vpop.permute.xlu0 %1097
    %1099 = vrot.lane.b32.xlu0 %v1032, 64
    %v1100 = vpop.permute.xlu0 %1099
    %1101 = vrot.lane.b32.xlu0 %v1033, 64
    %v1102 = vpop.permute.xlu0 %1101
    %1126 = vst.msk [vmem:[#allocation3 + $0x8] sm:$0xff] %vm662, %v1058
    %1127 = vst.msk [vmem:[#allocation3 + $0x20] sm:$0xff] %vm662, %v1060
    %1128 = vst.msk [vmem:[#allocation3 + $0x38] sm:$0xff] %vm662, %v1062
    %1129 = vst.msk [vmem:[#allocation3 + $0x50] sm:$0xff] %vm662, %v1064
    %1130 = vst.msk [vmem:[#allocation3 + $0x68] sm:$0xff] %vm662, %v1066
    %1131 = vst.msk [vmem:[#allocation3 + $0x80] sm:$0xff] %vm662, %v1068
    %1132 = vst.msk [vmem:[#allocation3 + $0x98] sm:$0xff] %vm662, %v1070
    %1133 = vst.msk [vmem:[#allocation3 + $0xb0] sm:$0xff] %vm662, %v1072
    %1134 = vst.msk [vmem:[#allocation3 + $0xc8] sm:$0xff] %vm662, %v1074
    %1135 = vst.msk [vmem:[#allocation3 + $0xe0] sm:$0xff] %vm662, %v1076
    %1136 = vst.msk [vmem:[#allocation3 + $0xf8] sm:$0xff] %vm662, %v1078
    %1137 = vst.msk [vmem:[#allocation3 + $0x110] sm:$0xff] %vm662, %v1080
    %1138 = vst.msk [vmem:[#allocation3 + $0x128] sm:$0xff] %vm662, %v1082
    %1139 = vst.msk [vmem:[#allocation3 + $0x140] sm:$0xff] %vm662, %v1084
    %1140 = vst.msk [vmem:[#allocation3 + $0x158] sm:$0xff] %vm662, %v1086
    %1141 = vst.msk [vmem:[#allocation3 + $0x170] sm:$0xff] %vm662, %v1088
    %1142 = vst.msk [vmem:[#allocation3 + $0x188] sm:$0xff] %vm662, %v1090
    %1143 = vst.msk [vmem:[#allocation3 + $0x1a0] sm:$0xff] %vm662, %v1092
    %1144 = vst.msk [vmem:[#allocation3 + $0x1b8] sm:$0xff] %vm662, %v1094
    %1145 = vst.msk [vmem:[#allocation3 + $0x1d0] sm:$0xff] %vm662, %v1096
    %1146 = vst.msk [vmem:[#allocation3 + $0x1e8] sm:$0xff] %vm662, %v1098
    %1147 = vst.msk [vmem:[#allocation3 + $0x200] sm:$0xff] %vm662, %v1100
    %1148 = vst.msk [vmem:[#allocation3 + $0x218] sm:$0x3] %vm685, %v1102
    %v1149 = vld [vmem:[#allocation2 + $0x15] sm:$0xff]
    %v1150 = vld [vmem:[#allocation2 + $0x1d] sm:$0xff]
    %v1151 = vld [vmem:[#allocation2 + $0x25] sm:$0xff]
    %v1152 = vld [vmem:[#allocation2 + $0x2d] sm:$0xff]
    %v1153 = vld [vmem:[#allocation2 + $0x35] sm:$0xff]
    %v1154 = vld [vmem:[#allocation2 + $0x3d] sm:$0xff]
    %v1155 = vld [vmem:[#allocation2 + $0x45] sm:$0xff]
    %v1156 = vld [vmem:[#allocation2 + $0x4d] sm:$0xff]
    %v1157 = vld [vmem:[#allocation2 + $0x55] sm:$0xff]
    %v1158 = vld [vmem:[#allocation2 + $0x5d] sm:$0xff]
    %v1159 = vld [vmem:[#allocation2 + $0x65] sm:$0xff]
    %v1160 = vld [vmem:[#allocation2 + $0x6d] sm:$0xff]
    %v1161 = vld [vmem:[#allocation2 + $0x75] sm:$0xff]
    %v1162 = vld [vmem:[#allocation2 + $0x7d] sm:$0xff]
    %v1163 = vld [vmem:[#allocation2 + $0x85] sm:$0xff]
    %v1164 = vld [vmem:[#allocation2 + $0x8d] sm:$0xff]
    %v1165 = vld [vmem:[#allocation2 + $0x95] sm:$0xff]
    %v1166 = vld [vmem:[#allocation2 + $0x9d] sm:$0xff]
    %v1167 = vld [vmem:[#allocation2 + $0xa5] sm:$0xff]
    %v1168 = vld [vmem:[#allocation2 + $0xad] sm:$0xff]
    %v1169 = vld [vmem:[#allocation2 + $0xb5] sm:$0xff]
    %v1170 = vld [vmem:[#allocation2 + $0xbd] sm:$0xff]
    %v1171 = vld [vmem:[#allocation2 + $0xc5] sm:$0x3]
    %1195 = vrot.lane.b32.xlu0 %v1149, 96
    %v1196 = vpop.permute.xlu0 %1195
    %1197 = vrot.lane.b32.xlu0 %v1150, 96
    %v1198 = vpop.permute.xlu0 %1197
    %1199 = vrot.lane.b32.xlu0 %v1151, 96
    %v1200 = vpop.permute.xlu0 %1199
    %1201 = vrot.lane.b32.xlu0 %v1152, 96
    %v1202 = vpop.permute.xlu0 %1201
    %1203 = vrot.lane.b32.xlu0 %v1153, 96
    %v1204 = vpop.permute.xlu0 %1203
    %1205 = vrot.lane.b32.xlu0 %v1154, 96
    %v1206 = vpop.permute.xlu0 %1205
    %1207 = vrot.lane.b32.xlu0 %v1155, 96
    %v1208 = vpop.permute.xlu0 %1207
    %1209 = vrot.lane.b32.xlu0 %v1156, 96
    %v1210 = vpop.permute.xlu0 %1209
    %1211 = vrot.lane.b32.xlu0 %v1157, 96
    %v1212 = vpop.permute.xlu0 %1211
    %1213 = vrot.lane.b32.xlu0 %v1158, 96
    %v1214 = vpop.permute.xlu0 %1213
    %1215 = vrot.lane.b32.xlu0 %v1159, 96
    %v1216 = vpop.permute.xlu0 %1215
    %1217 = vrot.lane.b32.xlu0 %v1160, 96
    %v1218 = vpop.permute.xlu0 %1217
    %1219 = vrot.lane.b32.xlu0 %v1161, 96
    %v1220 = vpop.permute.xlu0 %1219
    %1221 = vrot.lane.b32.xlu0 %v1162, 96
    %v1222 = vpop.permute.xlu0 %1221
    %1223 = vrot.lane.b32.xlu0 %v1163, 96
    %v1224 = vpop.permute.xlu0 %1223
    %1225 = vrot.lane.b32.xlu0 %v1164, 96
    %v1226 = vpop.permute.xlu0 %1225
    %1227 = vrot.lane.b32.xlu0 %v1165, 96
    %v1228 = vpop.permute.xlu0 %1227
    %1229 = vrot.lane.b32.xlu0 %v1166, 96
    %v1230 = vpop.permute.xlu0 %1229
    %1231 = vrot.lane.b32.xlu0 %v1167, 96
    %v1232 = vpop.permute.xlu0 %1231
    %1233 = vrot.lane.b32.xlu0 %v1168, 96
    %v1234 = vpop.permute.xlu0 %1233
    %1235 = vrot.lane.b32.xlu0 %v1169, 96
    %v1236 = vpop.permute.xlu0 %1235
    %1237 = vrot.lane.b32.xlu0 %v1170, 96
    %v1238 = vpop.permute.xlu0 %1237
    %1239 = vrot.lane.b32.xlu0 %v1171, 96
    %v1240 = vpop.permute.xlu0 %1239
    %1264 = vst.msk [vmem:[#allocation3 + $0x8] sm:$0xff] %vm802, %v1196
    %1265 = vst.msk [vmem:[#allocation3 + $0x20] sm:$0xff] %vm802, %v1198
    %1266 = vst.msk [vmem:[#allocation3 + $0x38] sm:$0xff] %vm802, %v1200
    %1267 = vst.msk [vmem:[#allocation3 + $0x50] sm:$0xff] %vm802, %v1202
    %1268 = vst.msk [vmem:[#allocation3 + $0x68] sm:$0xff] %vm802, %v1204
    %1269 = vst.msk [vmem:[#allocation3 + $0x80] sm:$0xff] %vm802, %v1206
    %1270 = vst.msk [vmem:[#allocation3 + $0x98] sm:$0xff] %vm802, %v1208
    %1271 = vst.msk [vmem:[#allocation3 + $0xb0] sm:$0xff] %vm802, %v1210
    %1272 = vst.msk [vmem:[#allocation3 + $0xc8] sm:$0xff] %vm802, %v1212
    %1273 = vst.msk [vmem:[#allocation3 + $0xe0] sm:$0xff] %vm802, %v1214
    %1274 = vst.msk [vmem:[#allocation3 + $0xf8] sm:$0xff] %vm802, %v1216
    %1275 = vst.msk [vmem:[#allocation3 + $0x110] sm:$0xff] %vm802, %v1218
    %1276 = vst.msk [vmem:[#allocation3 + $0x128] sm:$0xff] %vm802, %v1220
    %1277 = vst.msk [vmem:[#allocation3 + $0x140] sm:$0xff] %vm802, %v1222
    %1278 = vst.msk [vmem:[#allocation3 + $0x158] sm:$0xff] %vm802, %v1224
    %1279 = vst.msk [vmem:[#allocation3 + $0x170] sm:$0xff] %vm802, %v1226
    %1280 = vst.msk [vmem:[#allocation3 + $0x188] sm:$0xff] %vm802, %v1228
    %1281 = vst.msk [vmem:[#allocation3 + $0x1a0] sm:$0xff] %vm802, %v1230
    %1282 = vst.msk [vmem:[#allocation3 + $0x1b8] sm:$0xff] %vm802, %v1232
    %1283 = vst.msk [vmem:[#allocation3 + $0x1d0] sm:$0xff] %vm802, %v1234
    %1284 = vst.msk [vmem:[#allocation3 + $0x1e8] sm:$0xff] %vm802, %v1236
    %1285 = vst.msk [vmem:[#allocation3 + $0x200] sm:$0xff] %vm802, %v1238
    %1286 = vst.msk [vmem:[#allocation3 + $0x218] sm:$0x3] %vm825, %v1240
    %v1287 = vld [vmem:[#allocation2 + $0x16] sm:$0xff]
    %v1288 = vld [vmem:[#allocation2 + $0x1e] sm:$0xff]
    %v1289 = vld [vmem:[#allocation2 + $0x26] sm:$0xff]
    %v1290 = vld [vmem:[#allocation2 + $0x2e] sm:$0xff]
    %v1291 = vld [vmem:[#allocation2 + $0x36] sm:$0xff]
    %v1292 = vld [vmem:[#allocation2 + $0x3e] sm:$0xff]
    %v1293 = vld [vmem:[#allocation2 + $0x46] sm:$0xff]
    %v1294 = vld [vmem:[#allocation2 + $0x4e] sm:$0xff]
    %v1295 = vld [vmem:[#allocation2 + $0x56] sm:$0xff]
    %v1296 = vld [vmem:[#allocation2 + $0x5e] sm:$0xff]
    %v1297 = vld [vmem:[#allocation2 + $0x66] sm:$0xff]
    %v1298 = vld [vmem:[#allocation2 + $0x6e] sm:$0xff]
    %v1299 = vld [vmem:[#allocation2 + $0x76] sm:$0xff]
    %v1300 = vld [vmem:[#allocation2 + $0x7e] sm:$0xff]
    %v1301 = vld [vmem:[#allocation2 + $0x86] sm:$0xff]
    %v1302 = vld [vmem:[#allocation2 + $0x8e] sm:$0xff]
    %v1303 = vld [vmem:[#allocation2 + $0x96] sm:$0xff]
    %v1304 = vld [vmem:[#allocation2 + $0x9e] sm:$0xff]
    %v1305 = vld [vmem:[#allocation2 + $0xa6] sm:$0xff]
    %v1306 = vld [vmem:[#allocation2 + $0xae] sm:$0xff]
    %v1307 = vld [vmem:[#allocation2 + $0xb6] sm:$0xff]
    %v1308 = vld [vmem:[#allocation2 + $0xbe] sm:$0xff]
    %v1309 = vld [vmem:[#allocation2 + $0xc6] sm:$0x3]
    %1310 = vst.msk [vmem:[#allocation3 + $0x10] sm:$0xff] %vm334, %v1287
    %1311 = vst.msk [vmem:[#allocation3 + $0x28] sm:$0xff] %vm334, %v1288
    %1312 = vst.msk [vmem:[#allocation3 + $0x40] sm:$0xff] %vm334, %v1289
    %1313 = vst.msk [vmem:[#allocation3 + $0x58] sm:$0xff] %vm334, %v1290
    %1314 = vst.msk [vmem:[#allocation3 + $0x70] sm:$0xff] %vm334, %v1291
    %1315 = vst.msk [vmem:[#allocation3 + $0x88] sm:$0xff] %vm334, %v1292
    %1316 = vst.msk [vmem:[#allocation3 + $0xa0] sm:$0xff] %vm334, %v1293
    %1317 = vst.msk [vmem:[#allocation3 + $0xb8] sm:$0xff] %vm334, %v1294
    %1318 = vst.msk [vmem:[#allocation3 + $0xd0] sm:$0xff] %vm334, %v1295
    %1319 = vst.msk [vmem:[#allocation3 + $0xe8] sm:$0xff] %vm334, %v1296
    %1320 = vst.msk [vmem:[#allocation3 + $0x100] sm:$0xff] %vm334, %v1297
    %1321 = vst.msk [vmem:[#allocation3 + $0x118] sm:$0xff] %vm334, %v1298
    %1322 = vst.msk [vmem:[#allocation3 + $0x130] sm:$0xff] %vm334, %v1299
    %1323 = vst.msk [vmem:[#allocation3 + $0x148] sm:$0xff] %vm334, %v1300
    %1324 = vst.msk [vmem:[#allocation3 + $0x160] sm:$0xff] %vm334, %v1301
    %1325 = vst.msk [vmem:[#allocation3 + $0x178] sm:$0xff] %vm334, %v1302
    %1326 = vst.msk [vmem:[#allocation3 + $0x190] sm:$0xff] %vm334, %v1303
    %1327 = vst.msk [vmem:[#allocation3 + $0x1a8] sm:$0xff] %vm334, %v1304
    %1328 = vst.msk [vmem:[#allocation3 + $0x1c0] sm:$0xff] %vm334, %v1305
    %1329 = vst.msk [vmem:[#allocation3 + $0x1d8] sm:$0xff] %vm334, %v1306
    %1330 = vst.msk [vmem:[#allocation3 + $0x1f0] sm:$0xff] %vm334, %v1307
    %1331 = vst.msk [vmem:[#allocation3 + $0x208] sm:$0xff] %vm334, %v1308
    %1332 = vst.msk [vmem:[#allocation3 + $0x220] sm:$0x3] %vm405, %v1309
    %v1333 = vld [vmem:[#allocation3] sm:$0xff]
    %v1334 = vld [vmem:[#allocation3 + $0x8] sm:$0xff]
    %v1335 = vld [vmem:[#allocation3 + $0x10] sm:$0xff]
    %v1336 = vld [vmem:[#allocation3 + $0x18] sm:$0xff]
    %v1337 = vld [vmem:[#allocation3 + $0x20] sm:$0xff]
    %v1338 = vld [vmem:[#allocation3 + $0x28] sm:$0xff]
    %v1339 = vld [vmem:[#allocation3 + $0x30] sm:$0xff]
    %v1340 = vld [vmem:[#allocation3 + $0x38] sm:$0xff]
    %v1341 = vld [vmem:[#allocation3 + $0x40] sm:$0xff]
    %v1342 = vld [vmem:[#allocation3 + $0x48] sm:$0xff]
    %v1343 = vld [vmem:[#allocation3 + $0x50] sm:$0xff]
    %v1344 = vld [vmem:[#allocation3 + $0x58] sm:$0xff]
    %v1345 = vld [vmem:[#allocation3 + $0x60] sm:$0xff]
    %v1346 = vld [vmem:[#allocation3 + $0x68] sm:$0xff]
    %v1347 = vld [vmem:[#allocation3 + $0x70] sm:$0xff]
    %v1348 = vld [vmem:[#allocation3 + $0x78] sm:$0xff]
    %v1349 = vld [vmem:[#allocation3 + $0x80] sm:$0xff]
    %v1350 = vld [vmem:[#allocation3 + $0x88] sm:$0xff]
    %v1351 = vld [vmem:[#allocation3 + $0x90] sm:$0xff]
    %v1352 = vld [vmem:[#allocation3 + $0x98] sm:$0xff]
    %v1353 = vld [vmem:[#allocation3 + $0xa0] sm:$0xff]
    %v1354 = vld [vmem:[#allocation3 + $0xa8] sm:$0xff]
    %v1355 = vld [vmem:[#allocation3 + $0xb0] sm:$0xff]
    %v1356 = vld [vmem:[#allocation3 + $0xb8] sm:$0xff]
    %v1357 = vld [vmem:[#allocation3 + $0xc0] sm:$0xff]
    %v1358 = vld [vmem:[#allocation3 + $0xc8] sm:$0xff]
    %v1359 = vld [vmem:[#allocation3 + $0xd0] sm:$0xff]
    %v1360 = vld [vmem:[#allocation3 + $0xd8] sm:$0xff]
    %v1361 = vld [vmem:[#allocation3 + $0xe0] sm:$0xff]
    %v1362 = vld [vmem:[#allocation3 + $0xe8] sm:$0xff]
    %v1363 = vld [vmem:[#allocation3 + $0xf0] sm:$0xff]
    %v1364 = vld [vmem:[#allocation3 + $0xf8] sm:$0xff]
    %v1365 = vld [vmem:[#allocation3 + $0x100] sm:$0xff]
    %v1366 = vld [vmem:[#allocation3 + $0x108] sm:$0xff]
    %v1367 = vld [vmem:[#allocation3 + $0x110] sm:$0xff]
    %v1368 = vld [vmem:[#allocation3 + $0x118] sm:$0xff]
    %v1369 = vld [vmem:[#allocation3 + $0x120] sm:$0xff]
    %v1370 = vld [vmem:[#allocation3 + $0x128] sm:$0xff]
    %v1371 = vld [vmem:[#allocation3 + $0x130] sm:$0xff]
    %v1372 = vld [vmem:[#allocation3 + $0x138] sm:$0xff]
    %v1373 = vld [vmem:[#allocation3 + $0x140] sm:$0xff]
    %v1374 = vld [vmem:[#allocation3 + $0x148] sm:$0xff]
    %v1375 = vld [vmem:[#allocation3 + $0x150] sm:$0xff]
    %v1376 = vld [vmem:[#allocation3 + $0x158] sm:$0xff]
    %v1377 = vld [vmem:[#allocation3 + $0x160] sm:$0xff]
    %v1378 = vld [vmem:[#allocation3 + $0x168] sm:$0xff]
    %v1379 = vld [vmem:[#allocation3 + $0x170] sm:$0xff]
    %v1380 = vld [vmem:[#allocation3 + $0x178] sm:$0xff]
    %v1381 = vld [vmem:[#allocation3 + $0x180] sm:$0xff]
    %v1382 = vld [vmem:[#allocation3 + $0x188] sm:$0xff]
    %v1383 = vld [vmem:[#allocation3 + $0x190] sm:$0xff]
    %v1384 = vld [vmem:[#allocation3 + $0x198] sm:$0xff]
    %v1385 = vld [vmem:[#allocation3 + $0x1a0] sm:$0xff]
    %v1386 = vld [vmem:[#allocation3 + $0x1a8] sm:$0xff]
    %v1387 = vld [vmem:[#allocation3 + $0x1b0] sm:$0xff]
    %v1388 = vld [vmem:[#allocation3 + $0x1b8] sm:$0xff]
    %v1389 = vld [vmem:[#allocation3 + $0x1c0] sm:$0xff]
    %v1390 = vld [vmem:[#allocation3 + $0x1c8] sm:$0xff]
    %v1391 = vld [vmem:[#allocation3 + $0x1d0] sm:$0xff]
    %v1392 = vld [vmem:[#allocation3 + $0x1d8] sm:$0xff]
    %v1393 = vld [vmem:[#allocation3 + $0x1e0] sm:$0xff]
    %v1394 = vld [vmem:[#allocation3 + $0x1e8] sm:$0xff]
    %v1395 = vld [vmem:[#allocation3 + $0x1f0] sm:$0xff]
    %v1396 = vld [vmem:[#allocation3 + $0x1f8] sm:$0xff]
    %v1397 = vld [vmem:[#allocation3 + $0x200] sm:$0xff]
    %v1398 = vld [vmem:[#allocation3 + $0x208] sm:$0xff]
    %v1399 = vld [vmem:[#allocation3 + $0x210] sm:$0x3]
    %v1400 = vld [vmem:[#allocation3 + $0x218] sm:$0x3]
    %v1401 = vld [vmem:[#allocation3 + $0x220] sm:$0x3]
    %v1402 = vpack.c.bf16 %v1336, %v1333
    %v1403 = vpack.c.bf16 %v1337, %v1334
    %v1404 = vpack.c.bf16 %v1338, %v1335
    %v1405 = vpack.c.bf16 %v1342, %v1339
    %v1406 = vpack.c.bf16 %v1343, %v1340
    %v1407 = vpack.c.bf16 %v1344, %v1341
    %v1408 = vpack.c.bf16 %v1348, %v1345
    %v1409 = vpack.c.bf16 %v1349, %v1346
    %v1410 = vpack.c.bf16 %v1350, %v1347
    %v1411 = vpack.c.bf16 %v1354, %v1351
    %v1412 = vpack.c.bf16 %v1355, %v1352
    %v1413 = vpack.c.bf16 %v1356, %v1353
    %v1414 = vpack.c.bf16 %v1360, %v1357
    %v1415 = vpack.c.bf16 %v1361, %v1358
    %v1416 = vpack.c.bf16 %v1362, %v1359
    %v1417 = vpack.c.bf16 %v1366, %v1363
    %v1418 = vpack.c.bf16 %v1367, %v1364
    %v1419 = vpack.c.bf16 %v1368, %v1365
    %v1420 = vpack.c.bf16 %v1372, %v1369
    %v1421 = vpack.c.bf16 %v1373, %v1370
    %v1422 = vpack.c.bf16 %v1374, %v1371
    %v1423 = vpack.c.bf16 %v1378, %v1375
    %v1424 = vpack.c.bf16 %v1379, %v1376
    %v1425 = vpack.c.bf16 %v1380, %v1377
    %v1426 = vpack.c.bf16 %v1384, %v1381
    %v1427 = vpack.c.bf16 %v1385, %v1382
    %v1428 = vpack.c.bf16 %v1386, %v1383
    %v1429 = vpack.c.bf16 %v1390, %v1387
    %v1430 = vpack.c.bf16 %v1391, %v1388
    %v1431 = vpack.c.bf16 %v1392, %v1389
    %v1432 = vpack.c.bf16 %v1396, %v1393
    %v1433 = vpack.c.bf16 %v1397, %v1394
    %v1434 = vpack.c.bf16 %v1398, %v1395
    %v1435 = vpack.c.bf16 %v1399, %v1399
    %v1436 = vpack.c.bf16 %v1400, %v1400
    %v1437 = vpack.c.bf16 %v1401, %v1401
    %v1438 = vld [vmem:[%s1 + $0x18] sm:$0xf]
    %v1439 = vld [vmem:[%s1 + $0x1c] sm:$0xf]
    %v1440 = vld [vmem:[%s1 + $0x20] sm:$0xf]
    %v1441 = vld [vmem:[%s1 + $0x24] sm:$0xf]
    %v1442 = vld [vmem:[%s1 + $0x28] sm:$0xf]
    %v1443 = vld [vmem:[%s1 + $0x2c] sm:$0xf]
    %v1444 = vld [vmem:[%s1 + $0x30] sm:$0xf]
    %v1445 = vld [vmem:[%s1 + $0x34] sm:$0xf]
    %v1446 = vld [vmem:[%s1 + $0x38] sm:$0xf]
    %v1447 = vld [vmem:[%s1 + $0x3c] sm:$0xf]
    %v1448 = vld [vmem:[%s1 + $0x40] sm:$0xf]
    %v1449 = vld [vmem:[%s1 + $0x44] sm:$0xf]
    %v1450 = vld [vmem:[%s1 + $0x48] sm:$0xf]
    %v1451 = vld [vmem:[%s1 + $0x4c] sm:$0xf]
    %v1452 = vld [vmem:[%s1 + $0x50] sm:$0xf]
    %v1453 = vld [vmem:[%s1 + $0x54] sm:$0xf]
    %v1454 = vld [vmem:[%s1 + $0x58] sm:$0xf]
    %v1455 = vld [vmem:[%s1 + $0x5c] sm:$0xf]
    %v1456 = vld [vmem:[%s1 + $0x60] sm:$0xf]
    %v1457 = vld [vmem:[%s1 + $0x64] sm:$0xf]
    %v1458 = vld [vmem:[%s1 + $0x68] sm:$0xf]
    %v1459 = vld [vmem:[%s1 + $0x6c] sm:$0xf]
    %v1460 = vld [vmem:[%s1 + $0x70] sm:$0xf]
    %v1461 = vld [vmem:[%s1 + $0x74] sm:$0xf]
    %v1462 = vld [vmem:[%s1 + $0x78] sm:$0xf]
    %v1463 = vld [vmem:[%s1 + $0x7c] sm:$0xf]
    %v1464 = vld [vmem:[%s1 + $0x80] sm:$0xf]
    %v1465 = vld [vmem:[%s1 + $0x84] sm:$0xf]
    %v1466 = vld [vmem:[%s1 + $0x88] sm:$0xf]
    %v1467 = vld [vmem:[%s1 + $0x8c] sm:$0xf]
    %v1468 = vld [vmem:[%s1 + $0x90] sm:$0xf]
    %v1469 = vld [vmem:[%s1 + $0x94] sm:$0xf]
    %v1470 = vld [vmem:[%s1 + $0x98] sm:$0xf]
    %v1471 = vld [vmem:[%s1 + $0x9c] sm:$0xf]
    %v1472 = vld [vmem:[%s1 + $0xa0] sm:$0xf]
    %v1473 = vld [vmem:[%s1 + $0xa4] sm:$0xf]
    %v1474 = vld [vmem:[%s2 + $0x1] sm:$0x1]
    %v1475 = vlaneseq
    %v1476 = vshrl.u32 %v1475, 7
    %v1477 = vsub.s32 0, %v1476
    %v1478 = vrot.slane %v1474, %v1477
    %v1515 = vunpack.c.l.b16 %v1438
    %v1516 = vunpack.c.l.b16 %v1439
    %v1517 = vunpack.c.l.b16 %v1440
    %v1518 = vunpack.c.l.b16 %v1441
    %v1519 = vunpack.c.l.b16 %v1442
    %v1520 = vunpack.c.l.b16 %v1443
    %v1521 = vunpack.c.l.b16 %v1444
    %v1522 = vunpack.c.l.b16 %v1445
    %v1523 = vunpack.c.l.b16 %v1446
    %v1524 = vunpack.c.l.b16 %v1447
    %v1525 = vunpack.c.l.b16 %v1448
    %v1526 = vunpack.c.l.b16 %v1449
    %v1527 = vunpack.c.l.b16 %v1450
    %v1528 = vunpack.c.l.b16 %v1451
    %v1529 = vunpack.c.l.b16 %v1452
    %v1530 = vunpack.c.l.b16 %v1453
    %v1531 = vunpack.c.l.b16 %v1454
    %v1532 = vunpack.c.l.b16 %v1455
    %v1533 = vunpack.c.l.b16 %v1456
    %v1534 = vunpack.c.l.b16 %v1457
    %v1535 = vunpack.c.l.b16 %v1458
    %v1536 = vunpack.c.l.b16 %v1459
    %v1537 = vunpack.c.l.b16 %v1460
    %v1538 = vunpack.c.l.b16 %v1461
    %v1539 = vunpack.c.l.b16 %v1462
    %v1540 = vunpack.c.l.b16 %v1463
    %v1541 = vunpack.c.l.b16 %v1464
    %v1542 = vunpack.c.l.b16 %v1465
    %v1543 = vunpack.c.l.b16 %v1466
    %v1544 = vunpack.c.l.b16 %v1467
    %v1545 = vunpack.c.l.b16 %v1468
    %v1546 = vunpack.c.l.b16 %v1469
    %v1547 = vunpack.c.l.b16 %v1470
    %v1548 = vunpack.c.l.b16 %v1471
    %v1549 = vunpack.c.l.b16 %v1472
    %v1550 = vunpack.c.l.b16 %v1473
    %v1551 = vpack.c.b16 %v1516, %v1515
    %v1552 = vpack.c.b16 %v1518, %v1517
    %v1553 = vpack.c.b16 %v1520, %v1519
    %v1554 = vpack.c.b16 %v1522, %v1521
    %v1555 = vpack.c.b16 %v1524, %v1523
    %v1556 = vpack.c.b16 %v1526, %v1525
    %v1557 = vpack.c.b16 %v1528, %v1527
    %v1558 = vpack.c.b16 %v1530, %v1529
    %v1559 = vpack.c.b16 %v1532, %v1531
    %v1560 = vpack.c.b16 %v1534, %v1533
    %v1561 = vpack.c.b16 %v1536, %v1535
    %v1562 = vpack.c.b16 %v1538, %v1537
    %v1563 = vpack.c.b16 %v1540, %v1539
    %v1564 = vpack.c.b16 %v1542, %v1541
    %v1565 = vpack.c.b16 %v1544, %v1543
    %v1566 = vpack.c.b16 %v1546, %v1545
    %v1567 = vpack.c.b16 %v1548, %v1547
    %v1568 = vpack.c.b16 %v1550, %v1549
    %v1588 = vsel %vm334, %v1404, 0
    %v1591 = vsel %vm334, %v1407, 0
    %v1594 = vsel %vm334, %v1410, 0
    %v1597 = vsel %vm334, %v1413, 0
    %v1600 = vsel %vm334, %v1416, 0
    %v1603 = vsel %vm334, %v1419, 0
    %v1606 = vsel %vm334, %v1422, 0
    %v1609 = vsel %vm334, %v1425, 0
    %v1612 = vsel %vm334, %v1428, 0
    %v1615 = vsel %vm334, %v1431, 0
    %v1618 = vsel %vm334, %v1434, 0
    %v1621 = vsel %vm334, %v1437, 0
    %1623 = vmatprep.subr.bf16.mxu0 0
    %1624 = vmatpush1.bf16.msra.mxu0 %v1551
    %1625 = vmatprep.subr.bf16.mxu0 0
    %1626 = vmatpush1.bf16.msra.mxu0 %v1552
    %1627 = vmatprep.subr.bf16.mxu0 0
    %1628 = vmatpush1.bf16.msra.mxu0 %v1553
    %1629 = vmatprep.subr.bf16.mxu0 0
    %1630 = vmatpush1.bf16.msra.mxu0 %v1554
    %1631 = vmatprep.subr.bf16.mxu0 0
    %1632 = vmatpush1.bf16.msra.mxu0 %v1555
    %1633 = vmatprep.subr.bf16.mxu0 0
    %1634 = vmatpush1.bf16.msra.mxu0 %v1556
    %1635 = vmatprep.subr.bf16.mxu0 0
    %1636 = vmatpush1.bf16.msra.mxu0 %v1557
    %1637 = vmatprep.subr.bf16.mxu0 0
    %1638 = vmatpush1.bf16.msra.mxu0 %v1558
    %1639 = vmatprep.subr.bf16.mxu0 0
    %1640 = vmatpush1.bf16.msra.mxu0 %v1559
    %1641 = vmatprep.subr.bf16.mxu0 0
    %1642 = vmatpush1.bf16.msra.mxu0 %v1560
    %1643 = vmatprep.subr.bf16.mxu0 0
    %1644 = vmatpush1.bf16.msra.mxu0 %v1561
    %1645 = vmatprep.subr.bf16.mxu0 0
    %1646 = vmatpush1.bf16.msra.mxu0 %v1562
    %1647 = vmatprep.subr.bf16.mxu0 0
    %1648 = vmatpush1.bf16.msra.mxu0 %v1563
    %1649 = vmatprep.subr.bf16.mxu0 0
    %1650 = vmatpush1.bf16.msra.mxu0 %v1564
    %1651 = vmatprep.subr.bf16.mxu0 0
    %1652 = vmatpush1.bf16.msra.mxu0 %v1565
    %1653 = vmatprep.subr.bf16.mxu0 0
    %1654 = vmatpush1.bf16.msra.mxu0 %v1566
    %1655 = vmatprep.mubr.bf16.mxu0 %v1403
    %1656 = vmatmul.mubr.bf16.gmra.mrb[0].mxu0 %v1402
    %v1657 = vpop.f32.mrb[0].mxu0
    %v1658 = vadd.f32 %v1478, %v1657
    %v1659 = vpop.f32.mrb[0].mxu0
    %v1660 = vpop.f32.mrb[0].mxu0
    %v1661 = vadd.f32 %v1478, %v1660
    %v1662 = vpop.f32.mrb[0].mxu0
    %1663 = vmatprep.mubr.bf16.mxu0 %v1406
    %1664 = vmatmul.mubr.bf16.gmra.mrb[0].mxu0 %v1405
    %v1665 = vpop.f32.mrb[0].mxu0
    %v1666 = vadd.f32 %v1478, %v1665
    %v1667 = vpop.f32.mrb[0].mxu0
    %v1668 = vpop.f32.mrb[0].mxu0
    %v1669 = vadd.f32 %v1478, %v1668
    %v1670 = vpop.f32.mrb[0].mxu0
    %1671 = vmatprep.mubr.bf16.mxu0 %v1409
    %1672 = vmatmul.mubr.bf16.gmra.mrb[0].mxu0 %v1408
    %v1673 = vpop.f32.mrb[0].mxu0
    %v1674 = vadd.f32 %v1478, %v1673
    %v1675 = vpop.f32.mrb[0].mxu0
    %v1676 = vpop.f32.mrb[0].mxu0
    %v1677 = vadd.f32 %v1478, %v1676
    %v1678 = vpop.f32.mrb[0].mxu0
    %1679 = vmatprep.mubr.bf16.mxu0 %v1412
    %1680 = vmatmul.mubr.bf16.gmra.mrb[0].mxu0 %v1411
    %v1681 = vpop.f32.mrb[0].mxu0
    %v1682 = vadd.f32 %v1478, %v1681
    %v1683 = vpop.f32.mrb[0].mxu0
    %v1684 = vpop.f32.mrb[0].mxu0
    %v1685 = vadd.f32 %v1478, %v1684
    %v1686 = vpop.f32.mrb[0].mxu0
    %1687 = vmatprep.mubr.bf16.mxu0 %v1415
    %1688 = vmatmul.mubr.bf16.gmra.mrb[0].mxu0 %v1414
    %v1689 = vpop.f32.mrb[0].mxu0
    %v1690 = vadd.f32 %v1478, %v1689
    %v1691 = vpop.f32.mrb[0].mxu0
    %v1692 = vpop.f32.mrb[0].mxu0
    %v1693 = vadd.f32 %v1478, %v1692
    %v1694 = vpop.f32.mrb[0].mxu0
    %1695 = vmatprep.mubr.bf16.mxu0 %v1418
    %1696 = vmatmul.mubr.bf16.gmra.mrb[0].mxu0 %v1417
    %v1697 = vpop.f32.mrb[0].mxu0
    %v1698 = vadd.f32 %v1478, %v1697
    %v1699 = vpop.f32.mrb[0].mxu0
    %v1700 = vpop.f32.mrb[0].mxu0
    %v1701 = vadd.f32 %v1478, %v1700
    %v1702 = vpop.f32.mrb[0].mxu0
    %1703 = vmatprep.mubr.bf16.mxu0 %v1421
    %1704 = vmatmul.mubr.bf16.gmra.mrb[0].mxu0 %v1420
    %v1705 = vpop.f32.mrb[0].mxu0
    %v1706 = vadd.f32 %v1478, %v1705
    %v1707 = vpop.f32.mrb[0].mxu0
    %v1708 = vpop.f32.mrb[0].mxu0
    %v1709 = vadd.f32 %v1478, %v1708
    %v1710 = vpop.f32.mrb[0].mxu0
    %1711 = vmatprep.mubr.bf16.mxu0 %v1424
    %1712 = vmatmul.mubr.bf16.gmra.mrb[0].mxu0 %v1423
    %v1713 = vpop.f32.mrb[0].mxu0
    %v1714 = vadd.f32 %v1478, %v1713
    %v1715 = vpop.f32.mrb[0].mxu0
    %v1716 = vpop.f32.mrb[0].mxu0
    %v1717 = vadd.f32 %v1478, %v1716
    %v1718 = vpop.f32.mrb[0].mxu0
    %1719 = vmatprep.mubr.bf16.mxu0 %v1427
    %1720 = vmatmul.mubr.bf16.gmra.mrb[0].mxu0 %v1426
    %v1721 = vpop.f32.mrb[0].mxu0
    %v1722 = vadd.f32 %v1478, %v1721
    %v1723 = vpop.f32.mrb[0].mxu0
    %v1724 = vpop.f32.mrb[0].mxu0
    %v1725 = vadd.f32 %v1478, %v1724
    %v1726 = vpop.f32.mrb[0].mxu0
    %1727 = vmatprep.mubr.bf16.mxu0 %v1430
    %1728 = vmatmul.mubr.bf16.gmra.mrb[0].mxu0 %v1429
    %v1729 = vpop.f32.mrb[0].mxu0
    %v1730 = vadd.f32 %v1478, %v1729
    %v1731 = vpop.f32.mrb[0].mxu0
    %v1732 = vpop.f32.mrb[0].mxu0
    %v1733 = vadd.f32 %v1478, %v1732
    %v1734 = vpop.f32.mrb[0].mxu0
    %1735 = vmatprep.mubr.bf16.mxu0 %v1433
    %1736 = vmatmul.mubr.bf16.gmra.mrb[0].mxu0 %v1432
    %v1737 = vpop.f32.mrb[0].mxu0
    %v1738 = vadd.f32 %v1478, %v1737
    %v1739 = vpop.f32.mrb[0].mxu0
    %v1740 = vpop.f32.mrb[0].mxu0
    %v1741 = vadd.f32 %v1478, %v1740
    %v1742 = vpop.f32.mrb[0].mxu0
    %1743 = vmatprep.mubr.bf16.mxu0 %v1436
    %1744 = vmatmul.mubr.bf16.gmra.mrb[0].mxu0 %v1435
    %v1745 = vpop.f32.mrb[0].mxu0
    %v1746 = vadd.f32 %v1478, %v1745
    %v1747 = vpop.f32.mrb[0].mxu0
    %v1748 = vpop.f32.mrb[0].mxu0
    %v1749 = vpop.f32.mrb[0].mxu0
    %1750 = vdwg.mxu0
    %1751 = vmatprep.subr.bf16.mxu0 0
    %1752 = vmatpush1.bf16.msra.mxu0 %v1567
    %1753 = vmatprep.subr.bf16.mxu0 0
    %1754 = vmatpush1.bf16.msra.mxu0 %v1568
    %1755 = vmatprep.subr.bf16.mxu0 0
    %1756 = vmatpush1.bf16.msra.mxu0 0
    %1757 = vmatprep.subr.bf16.mxu0 0
    %1758 = vmatpush1.bf16.msra.mxu0 0
    %1759 = vmatprep.subr.bf16.mxu0 0
    %1760 = vmatpush1.bf16.msra.mxu0 0
    %1761 = vmatprep.subr.bf16.mxu0 0
    %1762 = vmatpush1.bf16.msra.mxu0 0
    %1763 = vmatprep.subr.bf16.mxu0 0
    %1764 = vmatpush1.bf16.msra.mxu0 0
    %1765 = vmatprep.subr.bf16.mxu0 0
    %1766 = vmatpush1.bf16.msra.mxu0 0
    %1767 = vmatprep.subr.bf16.mxu0 0
    %1768 = vmatpush1.bf16.msra.mxu0 0
    %1769 = vmatprep.subr.bf16.mxu0 0
    %1770 = vmatpush1.bf16.msra.mxu0 0
    %1771 = vmatprep.subr.bf16.mxu0 0
    %1772 = vmatpush1.bf16.msra.mxu0 0
    %1773 = vmatprep.subr.bf16.mxu0 0
    %1774 = vmatpush1.bf16.msra.mxu0 0
    %1775 = vmatprep.subr.bf16.mxu0 0
    %1776 = vmatpush1.bf16.msra.mxu0 0
    %1777 = vmatprep.subr.bf16.mxu0 0
    %1778 = vmatpush1.bf16.msra.mxu0 0
    %1779 = vmatprep.subr.bf16.mxu0 0
    %1780 = vmatpush1.bf16.msra.mxu0 0
    %1781 = vmatprep.subr.bf16.mxu0 0
    %1782 = vmatpush1.bf16.msra.mxu0 0
    %1783 = vmatprep.mubr.bf16.mxu0 0
    %1784 = vmatmul.mubr.bf16.gmra.mrb[0].mxu0 %v1588
    %v1785 = vpop.f32.mrb[0].mxu0
    %v1786 = vadd.f32 %v1658, %v1785
    %v1787 = vpop.f32.mrb[0].mxu0
    %v1788 = vpop.f32.mrb[0].mxu0
    %v1789 = vadd.f32 %v1661, %v1788
    %v1790 = vpop.f32.mrb[0].mxu0
    %1791 = vmatprep.mubr.bf16.mxu0 0
    %1792 = vmatmul.mubr.bf16.gmra.mrb[0].mxu0 %v1591
    %v1793 = vpop.f32.mrb[0].mxu0
    %v1794 = vadd.f32 %v1666, %v1793
    %v1795 = vpop.f32.mrb[0].mxu0
    %v1796 = vpop.f32.mrb[0].mxu0
    %v1797 = vadd.f32 %v1669, %v1796
    %v1798 = vpop.f32.mrb[0].mxu0
    %1799 = vmatprep.mubr.bf16.mxu0 0
    %1800 = vmatmul.mubr.bf16.gmra.mrb[0].mxu0 %v1594
    %v1801 = vpop.f32.mrb[0].mxu0
    %v1802 = vadd.f32 %v1674, %v1801
    %v1803 = vpop.f32.mrb[0].mxu0
    %v1804 = vpop.f32.mrb[0].mxu0
    %v1805 = vadd.f32 %v1677, %v1804
    %v1806 = vpop.f32.mrb[0].mxu0
    %1807 = vmatprep.mubr.bf16.mxu0 0
    %1808 = vmatmul.mubr.bf16.gmra.mrb[0].mxu0 %v1597
    %v1809 = vpop.f32.mrb[0].mxu0
    %v1810 = vadd.f32 %v1682, %v1809
    %v1811 = vpop.f32.mrb[0].mxu0
    %v1812 = vpop.f32.mrb[0].mxu0
    %v1813 = vadd.f32 %v1685, %v1812
    %v1814 = vpop.f32.mrb[0].mxu0
    %1815 = vmatprep.mubr.bf16.mxu0 0
    %1816 = vmatmul.mubr.bf16.gmra.mrb[0].mxu0 %v1600
    %v1817 = vpop.f32.mrb[0].mxu0
    %v1818 = vadd.f32 %v1690, %v1817
    %v1819 = vpop.f32.mrb[0].mxu0
    %v1820 = vpop.f32.mrb[0].mxu0
    %v1821 = vadd.f32 %v1693, %v1820
    %v1822 = vpop.f32.mrb[0].mxu0
    %1823 = vmatprep.mubr.bf16.mxu0 0
    %1824 = vmatmul.mubr.bf16.gmra.mrb[0].mxu0 %v1603
    %v1825 = vpop.f32.mrb[0].mxu0
    %v1826 = vadd.f32 %v1698, %v1825
    %v1827 = vpop.f32.mrb[0].mxu0
    %v1828 = vpop.f32.mrb[0].mxu0
    %v1829 = vadd.f32 %v1701, %v1828
    %v1830 = vpop.f32.mrb[0].mxu0
    %1831 = vmatprep.mubr.bf16.mxu0 0
    %1832 = vmatmul.mubr.bf16.gmra.mrb[0].mxu0 %v1606
    %v1833 = vpop.f32.mrb[0].mxu0
    %v1834 = vadd.f32 %v1706, %v1833
    %v1835 = vpop.f32.mrb[0].mxu0
    %v1836 = vpop.f32.mrb[0].mxu0
    %v1837 = vadd.f32 %v1709, %v1836
    %v1838 = vpop.f32.mrb[0].mxu0
    %1839 = vmatprep.mubr.bf16.mxu0 0
    %1840 = vmatmul.mubr.bf16.gmra.mrb[0].mxu0 %v1609
    %v1841 = vpop.f32.mrb[0].mxu0
    %v1842 = vadd.f32 %v1714, %v1841
    %v1843 = vpop.f32.mrb[0].mxu0
    %v1844 = vpop.f32.mrb[0].mxu0
    %v1845 = vadd.f32 %v1717, %v1844
    %v1846 = vpop.f32.mrb[0].mxu0
    %1847 = vmatprep.mubr.bf16.mxu0 0
    %1848 = vmatmul.mubr.bf16.gmra.mrb[0].mxu0 %v1612
    %v1849 = vpop.f32.mrb[0].mxu0
    %v1850 = vadd.f32 %v1722, %v1849
    %v1851 = vpop.f32.mrb[0].mxu0
    %v1852 = vpop.f32.mrb[0].mxu0
    %v1853 = vadd.f32 %v1725, %v1852
    %v1854 = vpop.f32.mrb[0].mxu0
    %1855 = vmatprep.mubr.bf16.mxu0 0
    %1856 = vmatmul.mubr.bf16.gmra.mrb[0].mxu0 %v1615
    %v1857 = vpop.f32.mrb[0].mxu0
    %v1858 = vadd.f32 %v1730, %v1857
    %v1859 = vpop.f32.mrb[0].mxu0
    %v1860 = vpop.f32.mrb[0].mxu0
    %v1861 = vadd.f32 %v1733, %v1860
    %v1862 = vpop.f32.mrb[0].mxu0
    %1863 = vmatprep.mubr.bf16.mxu0 0
    %1864 = vmatmul.mubr.bf16.gmra.mrb[0].mxu0 %v1618
    %v1865 = vpop.f32.mrb[0].mxu0
    %v1866 = vadd.f32 %v1738, %v1865
    %v1867 = vpop.f32.mrb[0].mxu0
    %v1868 = vpop.f32.mrb[0].mxu0
    %v1869 = vadd.f32 %v1741, %v1868
    %v1870 = vpop.f32.mrb[0].mxu0
    %1871 = vmatprep.mubr.bf16.mxu0 0
    %1872 = vmatmul.mubr.bf16.gmra.mrb[0].mxu0 %v1621
    %v1873 = vpop.f32.mrb[0].mxu0
    %v1874 = vadd.f32 %v1746, %v1873
    %v1875 = vpop.f32.mrb[0].mxu0
    %v1876 = vpop.f32.mrb[0].mxu0
    %v1877 = vpop.f32.mrb[0].mxu0
    %1878 = vdwg.mxu0
    %v1879 = vmax.f32 %v1786, 0.0
    %v1880 = vmax.f32 %v1789, 0.0
    %v1881 = vmax.f32 %v1794, 0.0
    %v1882 = vmax.f32 %v1797, 0.0
    %v1883 = vmax.f32 %v1802, 0.0
    %v1884 = vmax.f32 %v1805, 0.0
    %v1885 = vmax.f32 %v1810, 0.0
    %v1886 = vmax.f32 %v1813, 0.0
    %v1887 = vmax.f32 %v1818, 0.0
    %v1888 = vmax.f32 %v1821, 0.0
    %v1889 = vmax.f32 %v1826, 0.0
    %v1890 = vmax.f32 %v1829, 0.0
    %v1891 = vmax.f32 %v1834, 0.0
    %v1892 = vmax.f32 %v1837, 0.0
    %v1893 = vmax.f32 %v1842, 0.0
    %v1894 = vmax.f32 %v1845, 0.0
    %v1895 = vmax.f32 %v1850, 0.0
    %v1896 = vmax.f32 %v1853, 0.0
    %v1897 = vmax.f32 %v1858, 0.0
    %v1898 = vmax.f32 %v1861, 0.0
    %v1899 = vmax.f32 %v1866, 0.0
    %v1900 = vmax.f32 %v1869, 0.0
    %v1901 = vmax.f32 %v1874, 0.0
    %1902 = vst.msk [vmem:[#allocation2] sm:$0xff] %vm334, %v1879
    %1903 = vst.msk [vmem:[#allocation2 + $0x8] sm:$0xff] %vm334, %v1880
    %1904 = vst.msk [vmem:[#allocation2 + $0x10] sm:$0xff] %vm334, %v1881
    %1905 = vst.msk [vmem:[#allocation2 + $0x18] sm:$0xff] %vm334, %v1882
    %1906 = vst.msk [vmem:[#allocation2 + $0x20] sm:$0xff] %vm334, %v1883
    %1907 = vst.msk [vmem:[#allocation2 + $0x28] sm:$0xff] %vm334, %v1884
    %1908 = vst.msk [vmem:[#allocation2 + $0x30] sm:$0xff] %vm334, %v1885
    %1909 = vst.msk [vmem:[#allocation2 + $0x38] sm:$0xff] %vm334, %v1886
    %1910 = vst.msk [vmem:[#allocation2 + $0x40] sm:$0xff] %vm334, %v1887
    %1911 = vst.msk [vmem:[#allocation2 + $0x48] sm:$0xff] %vm334, %v1888
    %1912 = vst.msk [vmem:[#allocation2 + $0x50] sm:$0xff] %vm334, %v1889
    %1913 = vst.msk [vmem:[#allocation2 + $0x58] sm:$0xff] %vm334, %v1890
    %1914 = vst.msk [vmem:[#allocation2 + $0x60] sm:$0xff] %vm334, %v1891
    %1915 = vst.msk [vmem:[#allocation2 + $0x68] sm:$0xff] %vm334, %v1892
    %1916 = vst.msk [vmem:[#allocation2 + $0x70] sm:$0xff] %vm334, %v1893
    %1917 = vst.msk [vmem:[#allocation2 + $0x78] sm:$0xff] %vm334, %v1894
    %1918 = vst.msk [vmem:[#allocation2 + $0x80] sm:$0xff] %vm334, %v1895
    %1919 = vst.msk [vmem:[#allocation2 + $0x88] sm:$0xff] %vm334, %v1896
    %1920 = vst.msk [vmem:[#allocation2 + $0x90] sm:$0xff] %vm334, %v1897
    %1921 = vst.msk [vmem:[#allocation2 + $0x98] sm:$0xff] %vm334, %v1898
    %1922 = vst.msk [vmem:[#allocation2 + $0xa0] sm:$0xff] %vm334, %v1899
    %1923 = vst.msk [vmem:[#allocation2 + $0xa8] sm:$0xff] %vm334, %v1900
    %1924 = vst.msk [vmem:[#allocation2 + $0xb0] sm:$0x3] %vm405, %v1901
    %v1925 = vld [vmem:[#allocation2] sm:$0xff]
    %v1926 = vld [vmem:[#allocation2 + $0x8] sm:$0xff]
    %v1927 = vld [vmem:[#allocation2 + $0x10] sm:$0xff]
    %v1928 = vld [vmem:[#allocation2 + $0x18] sm:$0xff]
    %v1929 = vld [vmem:[#allocation2 + $0x20] sm:$0xff]
    %v1930 = vld [vmem:[#allocation2 + $0x28] sm:$0xff]
    %v1931 = vld [vmem:[#allocation2 + $0x30] sm:$0xff]
    %v1932 = vld [vmem:[#allocation2 + $0x38] sm:$0xff]
    %v1933 = vld [vmem:[#allocation2 + $0x40] sm:$0xff]
    %v1934 = vld [vmem:[#allocation2 + $0x48] sm:$0xff]
    %v1935 = vld [vmem:[#allocation2 + $0x50] sm:$0xff]
    %v1936 = vld [vmem:[#allocation2 + $0x58] sm:$0xff]
    %v1937 = vld [vmem:[#allocation2 + $0x60] sm:$0xff]
    %v1938 = vld [vmem:[#allocation2 + $0x68] sm:$0xff]
    %v1939 = vld [vmem:[#allocation2 + $0x70] sm:$0xff]
    %v1940 = vld [vmem:[#allocation2 + $0x78] sm:$0xff]
    %v1941 = vld [vmem:[#allocation2 + $0x80] sm:$0xff]
    %v1942 = vld [vmem:[#allocation2 + $0x88] sm:$0xff]
    %v1943 = vld [vmem:[#allocation2 + $0x90] sm:$0xff]
    %v1944 = vld [vmem:[#allocation2 + $0x98] sm:$0xf]
    %1945 = vst.msk [vmem:[#allocation3] sm:$0xff] %vm334, %v1925
    %1946 = vst.msk [vmem:[#allocation3 + $0x18] sm:$0xff] %vm334, %v1926
    %1947 = vst.msk [vmem:[#allocation3 + $0x30] sm:$0xff] %vm334, %v1927
    %1948 = vst.msk [vmem:[#allocation3 + $0x48] sm:$0xff] %vm334, %v1928
    %1949 = vst.msk [vmem:[#allocation3 + $0x60] sm:$0xff] %vm334, %v1929
    %1950 = vst.msk [vmem:[#allocation3 + $0x78] sm:$0xff] %vm334, %v1930
    %1951 = vst.msk [vmem:[#allocation3 + $0x90] sm:$0xff] %vm334, %v1931
    %1952 = vst.msk [vmem:[#allocation3 + $0xa8] sm:$0xff] %vm334, %v1932
    %1953 = vst.msk [vmem:[#allocation3 + $0xc0] sm:$0xff] %vm334, %v1933
    %1954 = vst.msk [vmem:[#allocation3 + $0xd8] sm:$0xff] %vm334, %v1934
    %1955 = vst.msk [vmem:[#allocation3 + $0xf0] sm:$0xff] %vm334, %v1935
    %1956 = vst.msk [vmem:[#allocation3 + $0x108] sm:$0xff] %vm334, %v1936
    %1957 = vst.msk [vmem:[#allocation3 + $0x120] sm:$0xff] %vm334, %v1937
    %1958 = vst.msk [vmem:[#allocation3 + $0x138] sm:$0xff] %vm334, %v1938
    %1959 = vst.msk [vmem:[#allocation3 + $0x150] sm:$0xff] %vm334, %v1939
    %1960 = vst.msk [vmem:[#allocation3 + $0x168] sm:$0xff] %vm334, %v1940
    %1961 = vst.msk [vmem:[#allocation3 + $0x180] sm:$0xff] %vm334, %v1941
    %1962 = vst.msk [vmem:[#allocation3 + $0x198] sm:$0xff] %vm334, %v1942
    %1963 = vst.msk [vmem:[#allocation3 + $0x1b0] sm:$0xff] %vm334, %v1943
    %vm1964 = vcmask 257024
    %1965 = vst.msk [vmem:[#allocation3 + $0x1c8] sm:$0xf] %vm1964, %v1944
    %v1966 = vld [vmem:[#allocation2 + $0x1] sm:$0xff]
    %v1967 = vld [vmem:[#allocation2 + $0x9] sm:$0xff]
    %v1968 = vld [vmem:[#allocation2 + $0x11] sm:$0xff]
    %v1969 = vld [vmem:[#allocation2 + $0x19] sm:$0xff]
    %v1970 = vld [vmem:[#allocation2 + $0x21] sm:$0xff]
    %v1971 = vld [vmem:[#allocation2 + $0x29] sm:$0xff]
    %v1972 = vld [vmem:[#allocation2 + $0x31] sm:$0xff]
    %v1973 = vld [vmem:[#allocation2 + $0x39] sm:$0xff]
    %v1974 = vld [vmem:[#allocation2 + $0x41] sm:$0xff]
    %v1975 = vld [vmem:[#allocation2 + $0x49] sm:$0xff]
    %v1976 = vld [vmem:[#allocation2 + $0x51] sm:$0xff]
    %v1977 = vld [vmem:[#allocation2 + $0x59] sm:$0xff]
    %v1978 = vld [vmem:[#allocation2 + $0x61] sm:$0xff]
    %v1979 = vld [vmem:[#allocation2 + $0x69] sm:$0xff]
    %v1980 = vld [vmem:[#allocation2 + $0x71] sm:$0xff]
    %v1981 = vld [vmem:[#allocation2 + $0x79] sm:$0xff]
    %v1982 = vld [vmem:[#allocation2 + $0x81] sm:$0xff]
    %v1983 = vld [vmem:[#allocation2 + $0x89] sm:$0xff]
    %v1984 = vld [vmem:[#allocation2 + $0x91] sm:$0xff]
    %v1985 = vld [vmem:[#allocation2 + $0x99] sm:$0xf]
    %2006 = vrot.lane.b32.xlu0 %v1966, 32
    %v2007 = vpop.permute.xlu0 %2006
    %2008 = vrot.lane.b32.xlu0 %v1967, 32
    %v2009 = vpop.permute.xlu0 %2008
    %2010 = vrot.lane.b32.xlu0 %v1968, 32
    %v2011 = vpop.permute.xlu0 %2010
    %2012 = vrot.lane.b32.xlu0 %v1969, 32
    %v2013 = vpop.permute.xlu0 %2012
    %2014 = vrot.lane.b32.xlu0 %v1970, 32
    %v2015 = vpop.permute.xlu0 %2014
    %2016 = vrot.lane.b32.xlu0 %v1971, 32
    %v2017 = vpop.permute.xlu0 %2016
    %2018 = vrot.lane.b32.xlu0 %v1972, 32
    %v2019 = vpop.permute.xlu0 %2018
    %2020 = vrot.lane.b32.xlu0 %v1973, 32
    %v2021 = vpop.permute.xlu0 %2020
    %2022 = vrot.lane.b32.xlu0 %v1974, 32
    %v2023 = vpop.permute.xlu0 %2022
    %2024 = vrot.lane.b32.xlu0 %v1975, 32
    %v2025 = vpop.permute.xlu0 %2024
    %2026 = vrot.lane.b32.xlu0 %v1976, 32
    %v2027 = vpop.permute.xlu0 %2026
    %2028 = vrot.lane.b32.xlu0 %v1977, 32
    %v2029 = vpop.permute.xlu0 %2028
    %2030 = vrot.lane.b32.xlu0 %v1978, 32
    %v2031 = vpop.permute.xlu0 %2030
    %2032 = vrot.lane.b32.xlu0 %v1979, 32
    %v2033 = vpop.permute.xlu0 %2032
    %2034 = vrot.lane.b32.xlu0 %v1980, 32
    %v2035 = vpop.permute.xlu0 %2034
    %2036 = vrot.lane.b32.xlu0 %v1981, 32
    %v2037 = vpop.permute.xlu0 %2036
    %2038 = vrot.lane.b32.xlu0 %v1982, 32
    %v2039 = vpop.permute.xlu0 %2038
    %2040 = vrot.lane.b32.xlu0 %v1983, 32
    %v2041 = vpop.permute.xlu0 %2040
    %2042 = vrot.lane.b32.xlu0 %v1984, 32
    %v2043 = vpop.permute.xlu0 %2042
    %2044 = vrot.lane.b32.xlu0 %v1985, 32
    %v2045 = vpop.permute.xlu0 %2044
    %2066 = vst.msk [vmem:[#allocation3] sm:$0xff] %vm522, %v2007
    %2067 = vst.msk [vmem:[#allocation3 + $0x18] sm:$0xff] %vm522, %v2009
    %2068 = vst.msk [vmem:[#allocation3 + $0x30] sm:$0xff] %vm522, %v2011
    %2069 = vst.msk [vmem:[#allocation3 + $0x48] sm:$0xff] %vm522, %v2013
    %2070 = vst.msk [vmem:[#allocation3 + $0x60] sm:$0xff] %vm522, %v2015
    %2071 = vst.msk [vmem:[#allocation3 + $0x78] sm:$0xff] %vm522, %v2017
    %2072 = vst.msk [vmem:[#allocation3 + $0x90] sm:$0xff] %vm522, %v2019
    %2073 = vst.msk [vmem:[#allocation3 + $0xa8] sm:$0xff] %vm522, %v2021
    %2074 = vst.msk [vmem:[#allocation3 + $0xc0] sm:$0xff] %vm522, %v2023
    %2075 = vst.msk [vmem:[#allocation3 + $0xd8] sm:$0xff] %vm522, %v2025
    %2076 = vst.msk [vmem:[#allocation3 + $0xf0] sm:$0xff] %vm522, %v2027
    %2077 = vst.msk [vmem:[#allocation3 + $0x108] sm:$0xff] %vm522, %v2029
    %2078 = vst.msk [vmem:[#allocation3 + $0x120] sm:$0xff] %vm522, %v2031
    %2079 = vst.msk [vmem:[#allocation3 + $0x138] sm:$0xff] %vm522, %v2033
    %2080 = vst.msk [vmem:[#allocation3 + $0x150] sm:$0xff] %vm522, %v2035
    %2081 = vst.msk [vmem:[#allocation3 + $0x168] sm:$0xff] %vm522, %v2037
    %2082 = vst.msk [vmem:[#allocation3 + $0x180] sm:$0xff] %vm522, %v2039
    %2083 = vst.msk [vmem:[#allocation3 + $0x198] sm:$0xff] %vm522, %v2041
    %2084 = vst.msk [vmem:[#allocation3 + $0x1b0] sm:$0xff] %vm522, %v2043
    %vm2085 = vcmask 519424
    %2086 = vst.msk [vmem:[#allocation3 + $0x1c8] sm:$0xf] %vm2085, %v2045
    %v2087 = vld [vmem:[#allocation2 + $0x2] sm:$0xff]
    %v2088 = vld [vmem:[#allocation2 + $0xa] sm:$0xff]
    %v2089 = vld [vmem:[#allocation2 + $0x12] sm:$0xff]
    %v2090 = vld [vmem:[#allocation2 + $0x1a] sm:$0xff]
    %v2091 = vld [vmem:[#allocation2 + $0x22] sm:$0xff]
    %v2092 = vld [vmem:[#allocation2 + $0x2a] sm:$0xff]
    %v2093 = vld [vmem:[#allocation2 + $0x32] sm:$0xff]
    %v2094 = vld [vmem:[#allocation2 + $0x3a] sm:$0xff]
    %v2095 = vld [vmem:[#allocation2 + $0x42] sm:$0xff]
    %v2096 = vld [vmem:[#allocation2 + $0x4a] sm:$0xff]
    %v2097 = vld [vmem:[#allocation2 + $0x52] sm:$0xff]
    %v2098 = vld [vmem:[#allocation2 + $0x5a] sm:$0xff]
    %v2099 = vld [vmem:[#allocation2 + $0x62] sm:$0xff]
    %v2100 = vld [vmem:[#allocation2 + $0x6a] sm:$0xff]
    %v2101 = vld [vmem:[#allocation2 + $0x72] sm:$0xff]
    %v2102 = vld [vmem:[#allocation2 + $0x7a] sm:$0xff]
    %v2103 = vld [vmem:[#allocation2 + $0x82] sm:$0xff]
    %v2104 = vld [vmem:[#allocation2 + $0x8a] sm:$0xff]
    %v2105 = vld [vmem:[#allocation2 + $0x92] sm:$0xff]
    %v2106 = vld [vmem:[#allocation2 + $0x9a] sm:$0xf]
    %2127 = vrot.lane.b32.xlu0 %v2087, 64
    %v2128 = vpop.permute.xlu0 %2127
    %2129 = vrot.lane.b32.xlu0 %v2088, 64
    %v2130 = vpop.permute.xlu0 %2129
    %2131 = vrot.lane.b32.xlu0 %v2089, 64
    %v2132 = vpop.permute.xlu0 %2131
    %2133 = vrot.lane.b32.xlu0 %v2090, 64
    %v2134 = vpop.permute.xlu0 %2133
    %2135 = vrot.lane.b32.xlu0 %v2091, 64
    %v2136 = vpop.permute.xlu0 %2135
    %2137 = vrot.lane.b32.xlu0 %v2092, 64
    %v2138 = vpop.permute.xlu0 %2137
    %2139 = vrot.lane.b32.xlu0 %v2093, 64
    %v2140 = vpop.permute.xlu0 %2139
    %2141 = vrot.lane.b32.xlu0 %v2094, 64
    %v2142 = vpop.permute.xlu0 %2141
    %2143 = vrot.lane.b32.xlu0 %v2095, 64
    %v2144 = vpop.permute.xlu0 %2143
    %2145 = vrot.lane.b32.xlu0 %v2096, 64
    %v2146 = vpop.permute.xlu0 %2145
    %2147 = vrot.lane.b32.xlu0 %v2097, 64
    %v2148 = vpop.permute.xlu0 %2147
    %2149 = vrot.lane.b32.xlu0 %v2098, 64
    %v2150 = vpop.permute.xlu0 %2149
    %2151 = vrot.lane.b32.xlu0 %v2099, 64
    %v2152 = vpop.permute.xlu0 %2151
    %2153 = vrot.lane.b32.xlu0 %v2100, 64
    %v2154 = vpop.permute.xlu0 %2153
    %2155 = vrot.lane.b32.xlu0 %v2101, 64
    %v2156 = vpop.permute.xlu0 %2155
    %2157 = vrot.lane.b32.xlu0 %v2102, 64
    %v2158 = vpop.permute.xlu0 %2157
    %2159 = vrot.lane.b32.xlu0 %v2103, 64
    %v2160 = vpop.permute.xlu0 %2159
    %2161 = vrot.lane.b32.xlu0 %v2104, 64
    %v2162 = vpop.permute.xlu0 %2161
    %2163 = vrot.lane.b32.xlu0 %v2105, 64
    %v2164 = vpop.permute.xlu0 %2163
    %2165 = vrot.lane.b32.xlu0 %v2106, 64
    %v2166 = vpop.permute.xlu0 %2165
    %2187 = vst.msk [vmem:[#allocation3] sm:$0xff] %vm662, %v2128
    %2188 = vst.msk [vmem:[#allocation3 + $0x18] sm:$0xff] %vm662, %v2130
    %2189 = vst.msk [vmem:[#allocation3 + $0x30] sm:$0xff] %vm662, %v2132
    %2190 = vst.msk [vmem:[#allocation3 + $0x48] sm:$0xff] %vm662, %v2134
    %2191 = vst.msk [vmem:[#allocation3 + $0x60] sm:$0xff] %vm662, %v2136
    %2192 = vst.msk [vmem:[#allocation3 + $0x78] sm:$0xff] %vm662, %v2138
    %2193 = vst.msk [vmem:[#allocation3 + $0x90] sm:$0xff] %vm662, %v2140
    %2194 = vst.msk [vmem:[#allocation3 + $0xa8] sm:$0xff] %vm662, %v2142
    %2195 = vst.msk [vmem:[#allocation3 + $0xc0] sm:$0xff] %vm662, %v2144
    %2196 = vst.msk [vmem:[#allocation3 + $0xd8] sm:$0xff] %vm662, %v2146
    %2197 = vst.msk [vmem:[#allocation3 + $0xf0] sm:$0xff] %vm662, %v2148
    %2198 = vst.msk [vmem:[#allocation3 + $0x108] sm:$0xff] %vm662, %v2150
    %2199 = vst.msk [vmem:[#allocation3 + $0x120] sm:$0xff] %vm662, %v2152
    %2200 = vst.msk [vmem:[#allocation3 + $0x138] sm:$0xff] %vm662, %v2154
    %2201 = vst.msk [vmem:[#allocation3 + $0x150] sm:$0xff] %vm662, %v2156
    %2202 = vst.msk [vmem:[#allocation3 + $0x168] sm:$0xff] %vm662, %v2158
    %2203 = vst.msk [vmem:[#allocation3 + $0x180] sm:$0xff] %vm662, %v2160
    %2204 = vst.msk [vmem:[#allocation3 + $0x198] sm:$0xff] %vm662, %v2162
    %2205 = vst.msk [vmem:[#allocation3 + $0x1b0] sm:$0xff] %vm662, %v2164
    %vm2206 = vcmask 781824
    %2207 = vst.msk [vmem:[#allocation3 + $0x1c8] sm:$0xf] %vm2206, %v2166
    %v2208 = vld [vmem:[#allocation2 + $0xa] sm:$0xff]
    %v2209 = vld [vmem:[#allocation2 + $0x12] sm:$0xff]
    %v2210 = vld [vmem:[#allocation2 + $0x1a] sm:$0xff]
    %v2211 = vld [vmem:[#allocation2 + $0x22] sm:$0xff]
    %v2212 = vld [vmem:[#allocation2 + $0x2a] sm:$0xff]
    %v2213 = vld [vmem:[#allocation2 + $0x32] sm:$0xff]
    %v2214 = vld [vmem:[#allocation2 + $0x3a] sm:$0xff]
    %v2215 = vld [vmem:[#allocation2 + $0x42] sm:$0xff]
    %v2216 = vld [vmem:[#allocation2 + $0x4a] sm:$0xff]
    %v2217 = vld [vmem:[#allocation2 + $0x52] sm:$0xff]
    %v2218 = vld [vmem:[#allocation2 + $0x5a] sm:$0xff]
    %v2219 = vld [vmem:[#allocation2 + $0x62] sm:$0xff]
    %v2220 = vld [vmem:[#allocation2 + $0x6a] sm:$0xff]
    %v2221 = vld [vmem:[#allocation2 + $0x72] sm:$0xff]
    %v2222 = vld [vmem:[#allocation2 + $0x7a] sm:$0xff]
    %v2223 = vld [vmem:[#allocation2 + $0x82] sm:$0xff]
    %v2224 = vld [vmem:[#allocation2 + $0x8a] sm:$0xff]
    %v2225 = vld [vmem:[#allocation2 + $0x92] sm:$0xff]
    %v2226 = vld [vmem:[#allocation2 + $0x9a] sm:$0xff]
    %v2227 = vld [vmem:[#allocation2 + $0xa2] sm:$0xf]
    %2248 = vrot.lane.b32.xlu0 %v2208, 96
    %v2249 = vpop.permute.xlu0 %2248
    %2250 = vrot.lane.b32.xlu0 %v2209, 96
    %v2251 = vpop.permute.xlu0 %2250
    %2252 = vrot.lane.b32.xlu0 %v2210, 96
    %v2253 = vpop.permute.xlu0 %2252
    %2254 = vrot.lane.b32.xlu0 %v2211, 96
    %v2255 = vpop.permute.xlu0 %2254
    %2256 = vrot.lane.b32.xlu0 %v2212, 96
    %v2257 = vpop.permute.xlu0 %2256
    %2258 = vrot.lane.b32.xlu0 %v2213, 96
    %v2259 = vpop.permute.xlu0 %2258
    %2260 = vrot.lane.b32.xlu0 %v2214, 96
    %v2261 = vpop.permute.xlu0 %2260
    %2262 = vrot.lane.b32.xlu0 %v2215, 96
    %v2263 = vpop.permute.xlu0 %2262
    %2264 = vrot.lane.b32.xlu0 %v2216, 96
    %v2265 = vpop.permute.xlu0 %2264
    %2266 = vrot.lane.b32.xlu0 %v2217, 96
    %v2267 = vpop.permute.xlu0 %2266
    %2268 = vrot.lane.b32.xlu0 %v2218, 96
    %v2269 = vpop.permute.xlu0 %2268
    %2270 = vrot.lane.b32.xlu0 %v2219, 96
    %v2271 = vpop.permute.xlu0 %2270
    %2272 = vrot.lane.b32.xlu0 %v2220, 96
    %v2273 = vpop.permute.xlu0 %2272
    %2274 = vrot.lane.b32.xlu0 %v2221, 96
    %v2275 = vpop.permute.xlu0 %2274
    %2276 = vrot.lane.b32.xlu0 %v2222, 96
    %v2277 = vpop.permute.xlu0 %2276
    %2278 = vrot.lane.b32.xlu0 %v2223, 96
    %v2279 = vpop.permute.xlu0 %2278
    %2280 = vrot.lane.b32.xlu0 %v2224, 96
    %v2281 = vpop.permute.xlu0 %2280
    %2282 = vrot.lane.b32.xlu0 %v2225, 96
    %v2283 = vpop.permute.xlu0 %2282
    %2284 = vrot.lane.b32.xlu0 %v2226, 96
    %v2285 = vpop.permute.xlu0 %2284
    %2286 = vrot.lane.b32.xlu0 %v2227, 96
    %v2287 = vpop.permute.xlu0 %2286
    %2308 = vst.msk [vmem:[#allocation3] sm:$0xff] %vm802, %v2249
    %2309 = vst.msk [vmem:[#allocation3 + $0x18] sm:$0xff] %vm802, %v2251
    %2310 = vst.msk [vmem:[#allocation3 + $0x30] sm:$0xff] %vm802, %v2253
    %2311 = vst.msk [vmem:[#allocation3 + $0x48] sm:$0xff] %vm802, %v2255
    %2312 = vst.msk [vmem:[#allocation3 + $0x60] sm:$0xff] %vm802, %v2257
    %2313 = vst.msk [vmem:[#allocation3 + $0x78] sm:$0xff] %vm802, %v2259
    %2314 = vst.msk [vmem:[#allocation3 + $0x90] sm:$0xff] %vm802, %v2261
    %2315 = vst.msk [vmem:[#allocation3 + $0xa8] sm:$0xff] %vm802, %v2263
    %2316 = vst.msk [vmem:[#allocation3 + $0xc0] sm:$0xff] %vm802, %v2265
    %2317 = vst.msk [vmem:[#allocation3 + $0xd8] sm:$0xff] %vm802, %v2267
    %2318 = vst.msk [vmem:[#allocation3 + $0xf0] sm:$0xff] %vm802, %v2269
    %2319 = vst.msk [vmem:[#allocation3 + $0x108] sm:$0xff] %vm802, %v2271
    %2320 = vst.msk [vmem:[#allocation3 + $0x120] sm:$0xff] %vm802, %v2273
    %2321 = vst.msk [vmem:[#allocation3 + $0x138] sm:$0xff] %vm802, %v2275
    %2322 = vst.msk [vmem:[#allocation3 + $0x150] sm:$0xff] %vm802, %v2277
    %2323 = vst.msk [vmem:[#allocation3 + $0x168] sm:$0xff] %vm802, %v2279
    %2324 = vst.msk [vmem:[#allocation3 + $0x180] sm:$0xff] %vm802, %v2281
    %2325 = vst.msk [vmem:[#allocation3 + $0x198] sm:$0xff] %vm802, %v2283
    %2326 = vst.msk [vmem:[#allocation3 + $0x1b0] sm:$0xff] %vm802, %v2285
    %vm2327 = vcmask 1044224
    %2328 = vst.msk [vmem:[#allocation3 + $0x1c8] sm:$0xf] %vm2327, %v2287
    %v2329 = vld [vmem:[#allocation2 + $0xb] sm:$0xff]
    %v2330 = vld [vmem:[#allocation2 + $0x13] sm:$0xff]
    %v2331 = vld [vmem:[#allocation2 + $0x1b] sm:$0xff]
    %v2332 = vld [vmem:[#allocation2 + $0x23] sm:$0xff]
    %v2333 = vld [vmem:[#allocation2 + $0x2b] sm:$0xff]
    %v2334 = vld [vmem:[#allocation2 + $0x33] sm:$0xff]
    %v2335 = vld [vmem:[#allocation2 + $0x3b] sm:$0xff]
    %v2336 = vld [vmem:[#allocation2 + $0x43] sm:$0xff]
    %v2337 = vld [vmem:[#allocation2 + $0x4b] sm:$0xff]
    %v2338 = vld [vmem:[#allocation2 + $0x53] sm:$0xff]
    %v2339 = vld [vmem:[#allocation2 + $0x5b] sm:$0xff]
    %v2340 = vld [vmem:[#allocation2 + $0x63] sm:$0xff]
    %v2341 = vld [vmem:[#allocation2 + $0x6b] sm:$0xff]
    %v2342 = vld [vmem:[#allocation2 + $0x73] sm:$0xff]
    %v2343 = vld [vmem:[#allocation2 + $0x7b] sm:$0xff]
    %v2344 = vld [vmem:[#allocation2 + $0x83] sm:$0xff]
    %v2345 = vld [vmem:[#allocation2 + $0x8b] sm:$0xff]
    %v2346 = vld [vmem:[#allocation2 + $0x93] sm:$0xff]
    %v2347 = vld [vmem:[#allocation2 + $0x9b] sm:$0xff]
    %v2348 = vld [vmem:[#allocation2 + $0xa3] sm:$0xf]
    %2349 = vst.msk [vmem:[#allocation3 + $0x8] sm:$0xff] %vm334, %v2329
    %2350 = vst.msk [vmem:[#allocation3 + $0x20] sm:$0xff] %vm334, %v2330
    %2351 = vst.msk [vmem:[#allocation3 + $0x38] sm:$0xff] %vm334, %v2331
    %2352 = vst.msk [vmem:[#allocation3 + $0x50] sm:$0xff] %vm334, %v2332
    %2353 = vst.msk [vmem:[#allocation3 + $0x68] sm:$0xff] %vm334, %v2333
    %2354 = vst.msk [vmem:[#allocation3 + $0x80] sm:$0xff] %vm334, %v2334
    %2355 = vst.msk [vmem:[#allocation3 + $0x98] sm:$0xff] %vm334, %v2335
    %2356 = vst.msk [vmem:[#allocation3 + $0xb0] sm:$0xff] %vm334, %v2336
    %2357 = vst.msk [vmem:[#allocation3 + $0xc8] sm:$0xff] %vm334, %v2337
    %2358 = vst.msk [vmem:[#allocation3 + $0xe0] sm:$0xff] %vm334, %v2338
    %2359 = vst.msk [vmem:[#allocation3 + $0xf8] sm:$0xff] %vm334, %v2339
    %2360 = vst.msk [vmem:[#allocation3 + $0x110] sm:$0xff] %vm334, %v2340
    %2361 = vst.msk [vmem:[#allocation3 + $0x128] sm:$0xff] %vm334, %v2341
    %2362 = vst.msk [vmem:[#allocation3 + $0x140] sm:$0xff] %vm334, %v2342
    %2363 = vst.msk [vmem:[#allocation3 + $0x158] sm:$0xff] %vm334, %v2343
    %2364 = vst.msk [vmem:[#allocation3 + $0x170] sm:$0xff] %vm334, %v2344
    %2365 = vst.msk [vmem:[#allocation3 + $0x188] sm:$0xff] %vm334, %v2345
    %2366 = vst.msk [vmem:[#allocation3 + $0x1a0] sm:$0xff] %vm334, %v2346
    %2367 = vst.msk [vmem:[#allocation3 + $0x1b8] sm:$0xff] %vm334, %v2347
    %2368 = vst.msk [vmem:[#allocation3 + $0x1d0] sm:$0xf] %vm1964, %v2348
    %v2369 = vld [vmem:[#allocation2 + $0xc] sm:$0xff]
    %v2370 = vld [vmem:[#allocation2 + $0x14] sm:$0xff]
    %v2371 = vld [vmem:[#allocation2 + $0x1c] sm:$0xff]
    %v2372 = vld [vmem:[#allocation2 + $0x24] sm:$0xff]
    %v2373 = vld [vmem:[#allocation2 + $0x2c] sm:$0xff]
    %v2374 = vld [vmem:[#allocation2 + $0x34] sm:$0xff]
    %v2375 = vld [vmem:[#allocation2 + $0x3c] sm:$0xff]
    %v2376 = vld [vmem:[#allocation2 + $0x44] sm:$0xff]
    %v2377 = vld [vmem:[#allocation2 + $0x4c] sm:$0xff]
    %v2378 = vld [vmem:[#allocation2 + $0x54] sm:$0xff]
    %v2379 = vld [vmem:[#allocation2 + $0x5c] sm:$0xff]
    %v2380 = vld [vmem:[#allocation2 + $0x64] sm:$0xff]
    %v2381 = vld [vmem:[#allocation2 + $0x6c] sm:$0xff]
    %v2382 = vld [vmem:[#allocation2 + $0x74] sm:$0xff]
    %v2383 = vld [vmem:[#allocation2 + $0x7c] sm:$0xff]
    %v2384 = vld [vmem:[#allocation2 + $0x84] sm:$0xff]
    %v2385 = vld [vmem:[#allocation2 + $0x8c] sm:$0xff]
    %v2386 = vld [vmem:[#allocation2 + $0x94] sm:$0xff]
    %v2387 = vld [vmem:[#allocation2 + $0x9c] sm:$0xff]
    %v2388 = vld [vmem:[#allocation2 + $0xa4] sm:$0xf]
    %2409 = vrot.lane.b32.xlu0 %v2369, 32
    %v2410 = vpop.permute.xlu0 %2409
    %2411 = vrot.lane.b32.xlu0 %v2370, 32
    %v2412 = vpop.permute.xlu0 %2411
    %2413 = vrot.lane.b32.xlu0 %v2371, 32
    %v2414 = vpop.permute.xlu0 %2413
    %2415 = vrot.lane.b32.xlu0 %v2372, 32
    %v2416 = vpop.permute.xlu0 %2415
    %2417 = vrot.lane.b32.xlu0 %v2373, 32
    %v2418 = vpop.permute.xlu0 %2417
    %2419 = vrot.lane.b32.xlu0 %v2374, 32
    %v2420 = vpop.permute.xlu0 %2419
    %2421 = vrot.lane.b32.xlu0 %v2375, 32
    %v2422 = vpop.permute.xlu0 %2421
    %2423 = vrot.lane.b32.xlu0 %v2376, 32
    %v2424 = vpop.permute.xlu0 %2423
    %2425 = vrot.lane.b32.xlu0 %v2377, 32
    %v2426 = vpop.permute.xlu0 %2425
    %2427 = vrot.lane.b32.xlu0 %v2378, 32
    %v2428 = vpop.permute.xlu0 %2427
    %2429 = vrot.lane.b32.xlu0 %v2379, 32
    %v2430 = vpop.permute.xlu0 %2429
    %2431 = vrot.lane.b32.xlu0 %v2380, 32
    %v2432 = vpop.permute.xlu0 %2431
    %2433 = vrot.lane.b32.xlu0 %v2381, 32
    %v2434 = vpop.permute.xlu0 %2433
    %2435 = vrot.lane.b32.xlu0 %v2382, 32
    %v2436 = vpop.permute.xlu0 %2435
    %2437 = vrot.lane.b32.xlu0 %v2383, 32
    %v2438 = vpop.permute.xlu0 %2437
    %2439 = vrot.lane.b32.xlu0 %v2384, 32
    %v2440 = vpop.permute.xlu0 %2439
    %2441 = vrot.lane.b32.xlu0 %v2385, 32
    %v2442 = vpop.permute.xlu0 %2441
    %2443 = vrot.lane.b32.xlu0 %v2386, 32
    %v2444 = vpop.permute.xlu0 %2443
    %2445 = vrot.lane.b32.xlu0 %v2387, 32
    %v2446 = vpop.permute.xlu0 %2445
    %2447 = vrot.lane.b32.xlu0 %v2388, 32
    %v2448 = vpop.permute.xlu0 %2447
    %2469 = vst.msk [vmem:[#allocation3 + $0x8] sm:$0xff] %vm522, %v2410
    %2470 = vst.msk [vmem:[#allocation3 + $0x20] sm:$0xff] %vm522, %v2412
    %2471 = vst.msk [vmem:[#allocation3 + $0x38] sm:$0xff] %vm522, %v2414
    %2472 = vst.msk [vmem:[#allocation3 + $0x50] sm:$0xff] %vm522, %v2416
    %2473 = vst.msk [vmem:[#allocation3 + $0x68] sm:$0xff] %vm522, %v2418
    %2474 = vst.msk [vmem:[#allocation3 + $0x80] sm:$0xff] %vm522, %v2420
    %2475 = vst.msk [vmem:[#allocation3 + $0x98] sm:$0xff] %vm522, %v2422
    %2476 = vst.msk [vmem:[#allocation3 + $0xb0] sm:$0xff] %vm522, %v2424
    %2477 = vst.msk [vmem:[#allocation3 + $0xc8] sm:$0xff] %vm522, %v2426
    %2478 = vst.msk [vmem:[#allocation3 + $0xe0] sm:$0xff] %vm522, %v2428
    %2479 = vst.msk [vmem:[#allocation3 + $0xf8] sm:$0xff] %vm522, %v2430
    %2480 = vst.msk [vmem:[#allocation3 + $0x110] sm:$0xff] %vm522, %v2432
    %2481 = vst.msk [vmem:[#allocation3 + $0x128] sm:$0xff] %vm522, %v2434
    %2482 = vst.msk [vmem:[#allocation3 + $0x140] sm:$0xff] %vm522, %v2436
    %2483 = vst.msk [vmem:[#allocation3 + $0x158] sm:$0xff] %vm522, %v2438
    %2484 = vst.msk [vmem:[#allocation3 + $0x170] sm:$0xff] %vm522, %v2440
    %2485 = vst.msk [vmem:[#allocation3 + $0x188] sm:$0xff] %vm522, %v2442
    %2486 = vst.msk [vmem:[#allocation3 + $0x1a0] sm:$0xff] %vm522, %v2444
    %2487 = vst.msk [vmem:[#allocation3 + $0x1b8] sm:$0xff] %vm522, %v2446
    %2488 = vst.msk [vmem:[#allocation3 + $0x1d0] sm:$0xf] %vm2085, %v2448
    %v2489 = vld [vmem:[#allocation2 + $0x14] sm:$0xff]
    %v2490 = vld [vmem:[#allocation2 + $0x1c] sm:$0xff]
    %v2491 = vld [vmem:[#allocation2 + $0x24] sm:$0xff]
    %v2492 = vld [vmem:[#allocation2 + $0x2c] sm:$0xff]
    %v2493 = vld [vmem:[#allocation2 + $0x34] sm:$0xff]
    %v2494 = vld [vmem:[#allocation2 + $0x3c] sm:$0xff]
    %v2495 = vld [vmem:[#allocation2 + $0x44] sm:$0xff]
    %v2496 = vld [vmem:[#allocation2 + $0x4c] sm:$0xff]
    %v2497 = vld [vmem:[#allocation2 + $0x54] sm:$0xff]
    %v2498 = vld [vmem:[#allocation2 + $0x5c] sm:$0xff]
    %v2499 = vld [vmem:[#allocation2 + $0x64] sm:$0xff]
    %v2500 = vld [vmem:[#allocation2 + $0x6c] sm:$0xff]
    %v2501 = vld [vmem:[#allocation2 + $0x74] sm:$0xff]
    %v2502 = vld [vmem:[#allocation2 + $0x7c] sm:$0xff]
    %v2503 = vld [vmem:[#allocation2 + $0x84] sm:$0xff]
    %v2504 = vld [vmem:[#allocation2 + $0x8c] sm:$0xff]
    %v2505 = vld [vmem:[#allocation2 + $0x94] sm:$0xff]
    %v2506 = vld [vmem:[#allocation2 + $0x9c] sm:$0xff]
    %v2507 = vld [vmem:[#allocation2 + $0xa4] sm:$0xff]
    %v2508 = vld [vmem:[#allocation2 + $0xac] sm:$0xf]
    %2529 = vrot.lane.b32.xlu0 %v2489, 64
    %v2530 = vpop.permute.xlu0 %2529
    %2531 = vrot.lane.b32.xlu0 %v2490, 64
    %v2532 = vpop.permute.xlu0 %2531
    %2533 = vrot.lane.b32.xlu0 %v2491, 64
    %v2534 = vpop.permute.xlu0 %2533
    %2535 = vrot.lane.b32.xlu0 %v2492, 64
    %v2536 = vpop.permute.xlu0 %2535
    %2537 = vrot.lane.b32.xlu0 %v2493, 64
    %v2538 = vpop.permute.xlu0 %2537
    %2539 = vrot.lane.b32.xlu0 %v2494, 64
    %v2540 = vpop.permute.xlu0 %2539
    %2541 = vrot.lane.b32.xlu0 %v2495, 64
    %v2542 = vpop.permute.xlu0 %2541
    %2543 = vrot.lane.b32.xlu0 %v2496, 64
    %v2544 = vpop.permute.xlu0 %2543
    %2545 = vrot.lane.b32.xlu0 %v2497, 64
    %v2546 = vpop.permute.xlu0 %2545
    %2547 = vrot.lane.b32.xlu0 %v2498, 64
    %v2548 = vpop.permute.xlu0 %2547
    %2549 = vrot.lane.b32.xlu0 %v2499, 64
    %v2550 = vpop.permute.xlu0 %2549
    %2551 = vrot.lane.b32.xlu0 %v2500, 64
    %v2552 = vpop.permute.xlu0 %2551
    %2553 = vrot.lane.b32.xlu0 %v2501, 64
    %v2554 = vpop.permute.xlu0 %2553
    %2555 = vrot.lane.b32.xlu0 %v2502, 64
    %v2556 = vpop.permute.xlu0 %2555
    %2557 = vrot.lane.b32.xlu0 %v2503, 64
    %v2558 = vpop.permute.xlu0 %2557
    %2559 = vrot.lane.b32.xlu0 %v2504, 64
    %v2560 = vpop.permute.xlu0 %2559
    %2561 = vrot.lane.b32.xlu0 %v2505, 64
    %v2562 = vpop.permute.xlu0 %2561
    %2563 = vrot.lane.b32.xlu0 %v2506, 64
    %v2564 = vpop.permute.xlu0 %2563
    %2565 = vrot.lane.b32.xlu0 %v2507, 64
    %v2566 = vpop.permute.xlu0 %2565
    %2567 = vrot.lane.b32.xlu0 %v2508, 64
    %v2568 = vpop.permute.xlu0 %2567
    %2589 = vst.msk [vmem:[#allocation3 + $0x8] sm:$0xff] %vm662, %v2530
    %2590 = vst.msk [vmem:[#allocation3 + $0x20] sm:$0xff] %vm662, %v2532
    %2591 = vst.msk [vmem:[#allocation3 + $0x38] sm:$0xff] %vm662, %v2534
    %2592 = vst.msk [vmem:[#allocation3 + $0x50] sm:$0xff] %vm662, %v2536
    %2593 = vst.msk [vmem:[#allocation3 + $0x68] sm:$0xff] %vm662, %v2538
    %2594 = vst.msk [vmem:[#allocation3 + $0x80] sm:$0xff] %vm662, %v2540
    %2595 = vst.msk [vmem:[#allocation3 + $0x98] sm:$0xff] %vm662, %v2542
    %2596 = vst.msk [vmem:[#allocation3 + $0xb0] sm:$0xff] %vm662, %v2544
    %2597 = vst.msk [vmem:[#allocation3 + $0xc8] sm:$0xff] %vm662, %v2546
    %2598 = vst.msk [vmem:[#allocation3 + $0xe0] sm:$0xff] %vm662, %v2548
    %2599 = vst.msk [vmem:[#allocation3 + $0xf8] sm:$0xff] %vm662, %v2550
    %2600 = vst.msk [vmem:[#allocation3 + $0x110] sm:$0xff] %vm662, %v2552
    %2601 = vst.msk [vmem:[#allocation3 + $0x128] sm:$0xff] %vm662, %v2554
    %2602 = vst.msk [vmem:[#allocation3 + $0x140] sm:$0xff] %vm662, %v2556
    %2603 = vst.msk [vmem:[#allocation3 + $0x158] sm:$0xff] %vm662, %v2558
    %2604 = vst.msk [vmem:[#allocation3 + $0x170] sm:$0xff] %vm662, %v2560
    %2605 = vst.msk [vmem:[#allocation3 + $0x188] sm:$0xff] %vm662, %v2562
    %2606 = vst.msk [vmem:[#allocation3 + $0x1a0] sm:$0xff] %vm662, %v2564
    %2607 = vst.msk [vmem:[#allocation3 + $0x1b8] sm:$0xff] %vm662, %v2566
    %2608 = vst.msk [vmem:[#allocation3 + $0x1d0] sm:$0xf] %vm2206, %v2568
    %v2609 = vld [vmem:[#allocation2 + $0x15] sm:$0xff]
    %v2610 = vld [vmem:[#allocation2 + $0x1d] sm:$0xff]
    %v2611 = vld [vmem:[#allocation2 + $0x25] sm:$0xff]
    %v2612 = vld [vmem:[#allocation2 + $0x2d] sm:$0xff]
    %v2613 = vld [vmem:[#allocation2 + $0x35] sm:$0xff]
    %v2614 = vld [vmem:[#allocation2 + $0x3d] sm:$0xff]
    %v2615 = vld [vmem:[#allocation2 + $0x45] sm:$0xff]
    %v2616 = vld [vmem:[#allocation2 + $0x4d] sm:$0xff]
    %v2617 = vld [vmem:[#allocation2 + $0x55] sm:$0xff]
    %v2618 = vld [vmem:[#allocation2 + $0x5d] sm:$0xff]
    %v2619 = vld [vmem:[#allocation2 + $0x65] sm:$0xff]
    %v2620 = vld [vmem:[#allocation2 + $0x6d] sm:$0xff]
    %v2621 = vld [vmem:[#allocation2 + $0x75] sm:$0xff]
    %v2622 = vld [vmem:[#allocation2 + $0x7d] sm:$0xff]
    %v2623 = vld [vmem:[#allocation2 + $0x85] sm:$0xff]
    %v2624 = vld [vmem:[#allocation2 + $0x8d] sm:$0xff]
    %v2625 = vld [vmem:[#allocation2 + $0x95] sm:$0xff]
    %v2626 = vld [vmem:[#allocation2 + $0x9d] sm:$0xff]
    %v2627 = vld [vmem:[#allocation2 + $0xa5] sm:$0xff]
    %v2628 = vld [vmem:[#allocation2 + $0xad] sm:$0xf]
    %2649 = vrot.lane.b32.xlu0 %v2609, 96
    %v2650 = vpop.permute.xlu0 %2649
    %2651 = vrot.lane.b32.xlu0 %v2610, 96
    %v2652 = vpop.permute.xlu0 %2651
    %2653 = vrot.lane.b32.xlu0 %v2611, 96
    %v2654 = vpop.permute.xlu0 %2653
    %2655 = vrot.lane.b32.xlu0 %v2612, 96
    %v2656 = vpop.permute.xlu0 %2655
    %2657 = vrot.lane.b32.xlu0 %v2613, 96
    %v2658 = vpop.permute.xlu0 %2657
    %2659 = vrot.lane.b32.xlu0 %v2614, 96
    %v2660 = vpop.permute.xlu0 %2659
    %2661 = vrot.lane.b32.xlu0 %v2615, 96
    %v2662 = vpop.permute.xlu0 %2661
    %2663 = vrot.lane.b32.xlu0 %v2616, 96
    %v2664 = vpop.permute.xlu0 %2663
    %2665 = vrot.lane.b32.xlu0 %v2617, 96
    %v2666 = vpop.permute.xlu0 %2665
    %2667 = vrot.lane.b32.xlu0 %v2618, 96
    %v2668 = vpop.permute.xlu0 %2667
    %2669 = vrot.lane.b32.xlu0 %v2619, 96
    %v2670 = vpop.permute.xlu0 %2669
    %2671 = vrot.lane.b32.xlu0 %v2620, 96
    %v2672 = vpop.permute.xlu0 %2671
    %2673 = vrot.lane.b32.xlu0 %v2621, 96
    %v2674 = vpop.permute.xlu0 %2673
    %2675 = vrot.lane.b32.xlu0 %v2622, 96
    %v2676 = vpop.permute.xlu0 %2675
    %2677 = vrot.lane.b32.xlu0 %v2623, 96
    %v2678 = vpop.permute.xlu0 %2677
    %2679 = vrot.lane.b32.xlu0 %v2624, 96
    %v2680 = vpop.permute.xlu0 %2679
    %2681 = vrot.lane.b32.xlu0 %v2625, 96
    %v2682 = vpop.permute.xlu0 %2681
    %2683 = vrot.lane.b32.xlu0 %v2626, 96
    %v2684 = vpop.permute.xlu0 %2683
    %2685 = vrot.lane.b32.xlu0 %v2627, 96
    %v2686 = vpop.permute.xlu0 %2685
    %2687 = vrot.lane.b32.xlu0 %v2628, 96
    %v2688 = vpop.permute.xlu0 %2687
    %2709 = vst.msk [vmem:[#allocation3 + $0x8] sm:$0xff] %vm802, %v2650
    %2710 = vst.msk [vmem:[#allocation3 + $0x20] sm:$0xff] %vm802, %v2652
    %2711 = vst.msk [vmem:[#allocation3 + $0x38] sm:$0xff] %vm802, %v2654
    %2712 = vst.msk [vmem:[#allocation3 + $0x50] sm:$0xff] %vm802, %v2656
    %2713 = vst.msk [vmem:[#allocation3 + $0x68] sm:$0xff] %vm802, %v2658
    %2714 = vst.msk [vmem:[#allocation3 + $0x80] sm:$0xff] %vm802, %v2660
    %2715 = vst.msk [vmem:[#allocation3 + $0x98] sm:$0xff] %vm802, %v2662
    %2716 = vst.msk [vmem:[#allocation3 + $0xb0] sm:$0xff] %vm802, %v2664
    %2717 = vst.msk [vmem:[#allocation3 + $0xc8] sm:$0xff] %vm802, %v2666
    %2718 = vst.msk [vmem:[#allocation3 + $0xe0] sm:$0xff] %vm802, %v2668
    %2719 = vst.msk [vmem:[#allocation3 + $0xf8] sm:$0xff] %vm802, %v2670
    %2720 = vst.msk [vmem:[#allocation3 + $0x110] sm:$0xff] %vm802, %v2672
    %2721 = vst.msk [vmem:[#allocation3 + $0x128] sm:$0xff] %vm802, %v2674
    %2722 = vst.msk [vmem:[#allocation3 + $0x140] sm:$0xff] %vm802, %v2676
    %2723 = vst.msk [vmem:[#allocation3 + $0x158] sm:$0xff] %vm802, %v2678
    %2724 = vst.msk [vmem:[#allocation3 + $0x170] sm:$0xff] %vm802, %v2680
    %2725 = vst.msk [vmem:[#allocation3 + $0x188] sm:$0xff] %vm802, %v2682
    %2726 = vst.msk [vmem:[#allocation3 + $0x1a0] sm:$0xff] %vm802, %v2684
    %2727 = vst.msk [vmem:[#allocation3 + $0x1b8] sm:$0xff] %vm802, %v2686
    %2728 = vst.msk [vmem:[#allocation3 + $0x1d0] sm:$0xf] %vm2327, %v2688
    %v2729 = vld [vmem:[#allocation2 + $0x16] sm:$0xff]
    %v2730 = vld [vmem:[#allocation2 + $0x1e] sm:$0xff]
    %v2731 = vld [vmem:[#allocation2 + $0x26] sm:$0xff]
    %v2732 = vld [vmem:[#allocation2 + $0x2e] sm:$0xff]
    %v2733 = vld [vmem:[#allocation2 + $0x36] sm:$0xff]
    %v2734 = vld [vmem:[#allocation2 + $0x3e] sm:$0xff]
    %v2735 = vld [vmem:[#allocation2 + $0x46] sm:$0xff]
    %v2736 = vld [vmem:[#allocation2 + $0x4e] sm:$0xff]
    %v2737 = vld [vmem:[#allocation2 + $0x56] sm:$0xff]
    %v2738 = vld [vmem:[#allocation2 + $0x5e] sm:$0xff]
    %v2739 = vld [vmem:[#allocation2 + $0x66] sm:$0xff]
    %v2740 = vld [vmem:[#allocation2 + $0x6e] sm:$0xff]
    %v2741 = vld [vmem:[#allocation2 + $0x76] sm:$0xff]
    %v2742 = vld [vmem:[#allocation2 + $0x7e] sm:$0xff]
    %v2743 = vld [vmem:[#allocation2 + $0x86] sm:$0xff]
    %v2744 = vld [vmem:[#allocation2 + $0x8e] sm:$0xff]
    %v2745 = vld [vmem:[#allocation2 + $0x96] sm:$0xff]
    %v2746 = vld [vmem:[#allocation2 + $0x9e] sm:$0xff]
    %v2747 = vld [vmem:[#allocation2 + $0xa6] sm:$0xff]
    %v2748 = vld [vmem:[#allocation2 + $0xae] sm:$0xf]
    %2749 = vst.msk [vmem:[#allocation3 + $0x10] sm:$0xff] %vm334, %v2729
    %2750 = vst.msk [vmem:[#allocation3 + $0x28] sm:$0xff] %vm334, %v2730
    %2751 = vst.msk [vmem:[#allocation3 + $0x40] sm:$0xff] %vm334, %v2731
    %2752 = vst.msk [vmem:[#allocation3 + $0x58] sm:$0xff] %vm334, %v2732
    %2753 = vst.msk [vmem:[#allocation3 + $0x70] sm:$0xff] %vm334, %v2733
    %2754 = vst.msk [vmem:[#allocation3 + $0x88] sm:$0xff] %vm334, %v2734
    %2755 = vst.msk [vmem:[#allocation3 + $0xa0] sm:$0xff] %vm334, %v2735
    %2756 = vst.msk [vmem:[#allocation3 + $0xb8] sm:$0xff] %vm334, %v2736
    %2757 = vst.msk [vmem:[#allocation3 + $0xd0] sm:$0xff] %vm334, %v2737
    %2758 = vst.msk [vmem:[#allocation3 + $0xe8] sm:$0xff] %vm334, %v2738
    %2759 = vst.msk [vmem:[#allocation3 + $0x100] sm:$0xff] %vm334, %v2739
    %2760 = vst.msk [vmem:[#allocation3 + $0x118] sm:$0xff] %vm334, %v2740
    %2761 = vst.msk [vmem:[#allocation3 + $0x130] sm:$0xff] %vm334, %v2741
    %2762 = vst.msk [vmem:[#allocation3 + $0x148] sm:$0xff] %vm334, %v2742
    %2763 = vst.msk [vmem:[#allocation3 + $0x160] sm:$0xff] %vm334, %v2743
    %2764 = vst.msk [vmem:[#allocation3 + $0x178] sm:$0xff] %vm334, %v2744
    %2765 = vst.msk [vmem:[#allocation3 + $0x190] sm:$0xff] %vm334, %v2745
    %2766 = vst.msk [vmem:[#allocation3 + $0x1a8] sm:$0xff] %vm334, %v2746
    %2767 = vst.msk [vmem:[#allocation3 + $0x1c0] sm:$0xff] %vm334, %v2747
    %2768 = vst.msk [vmem:[#allocation3 + $0x1d8] sm:$0xf] %vm1964, %v2748
    %v2769 = vld [vmem:[#allocation3] sm:$0xff]
    %v2770 = vld [vmem:[#allocation3 + $0x8] sm:$0xff]
    %v2771 = vld [vmem:[#allocation3 + $0x10] sm:$0xff]
    %v2772 = vld [vmem:[#allocation3 + $0x18] sm:$0xff]
    %v2773 = vld [vmem:[#allocation3 + $0x20] sm:$0xff]
    %v2774 = vld [vmem:[#allocation3 + $0x28] sm:$0xff]
    %v2775 = vld [vmem:[#allocation3 + $0x30] sm:$0xff]
    %v2776 = vld [vmem:[#allocation3 + $0x38] sm:$0xff]
    %v2777 = vld [vmem:[#allocation3 + $0x40] sm:$0xff]
    %v2778 = vld [vmem:[#allocation3 + $0x48] sm:$0xff]
    %v2779 = vld [vmem:[#allocation3 + $0x50] sm:$0xff]
    %v2780 = vld [vmem:[#allocation3 + $0x58] sm:$0xff]
    %v2781 = vld [vmem:[#allocation3 + $0x60] sm:$0xff]
    %v2782 = vld [vmem:[#allocation3 + $0x68] sm:$0xff]
    %v2783 = vld [vmem:[#allocation3 + $0x70] sm:$0xff]
    %v2784 = vld [vmem:[#allocation3 + $0x78] sm:$0xff]
    %v2785 = vld [vmem:[#allocation3 + $0x80] sm:$0xff]
    %v2786 = vld [vmem:[#allocation3 + $0x88] sm:$0xff]
    %v2787 = vld [vmem:[#allocation3 + $0x90] sm:$0xff]
    %v2788 = vld [vmem:[#allocation3 + $0x98] sm:$0xff]
    %v2789 = vld [vmem:[#allocation3 + $0xa0] sm:$0xff]
    %v2790 = vld [vmem:[#allocation3 + $0xa8] sm:$0xff]
    %v2791 = vld [vmem:[#allocation3 + $0xb0] sm:$0xff]
    %v2792 = vld [vmem:[#allocation3 + $0xb8] sm:$0xff]
    %v2793 = vld [vmem:[#allocation3 + $0xc0] sm:$0xff]
    %v2794 = vld [vmem:[#allocation3 + $0xc8] sm:$0xff]
    %v2795 = vld [vmem:[#allocation3 + $0xd0] sm:$0xff]
    %v2796 = vld [vmem:[#allocation3 + $0xd8] sm:$0xff]
    %v2797 = vld [vmem:[#allocation3 + $0xe0] sm:$0xff]
    %v2798 = vld [vmem:[#allocation3 + $0xe8] sm:$0xff]
    %v2799 = vld [vmem:[#allocation3 + $0xf0] sm:$0xff]
    %v2800 = vld [vmem:[#allocation3 + $0xf8] sm:$0xff]
    %v2801 = vld [vmem:[#allocation3 + $0x100] sm:$0xff]
    %v2802 = vld [vmem:[#allocation3 + $0x108] sm:$0xff]
    %v2803 = vld [vmem:[#allocation3 + $0x110] sm:$0xff]
    %v2804 = vld [vmem:[#allocation3 + $0x118] sm:$0xff]
    %v2805 = vld [vmem:[#allocation3 + $0x120] sm:$0xff]
    %v2806 = vld [vmem:[#allocation3 + $0x128] sm:$0xff]
    %v2807 = vld [vmem:[#allocation3 + $0x130] sm:$0xff]
    %v2808 = vld [vmem:[#allocation3 + $0x138] sm:$0xff]
    %v2809 = vld [vmem:[#allocation3 + $0x140] sm:$0xff]
    %v2810 = vld [vmem:[#allocation3 + $0x148] sm:$0xff]
    %v2811 = vld [vmem:[#allocation3 + $0x150] sm:$0xff]
    %v2812 = vld [vmem:[#allocation3 + $0x158] sm:$0xff]
    %v2813 = vld [vmem:[#allocation3 + $0x160] sm:$0xff]
    %v2814 = vld [vmem:[#allocation3 + $0x168] sm:$0xff]
    %v2815 = vld [vmem:[#allocation3 + $0x170] sm:$0xff]
    %v2816 = vld [vmem:[#allocation3 + $0x178] sm:$0xff]
    %v2817 = vld [vmem:[#allocation3 + $0x180] sm:$0xff]
    %v2818 = vld [vmem:[#allocation3 + $0x188] sm:$0xff]
    %v2819 = vld [vmem:[#allocation3 + $0x190] sm:$0xff]
    %v2820 = vld [vmem:[#allocation3 + $0x198] sm:$0xff]
    %v2821 = vld [vmem:[#allocation3 + $0x1a0] sm:$0xff]
    %v2822 = vld [vmem:[#allocation3 + $0x1a8] sm:$0xff]
    %v2823 = vld [vmem:[#allocation3 + $0x1b0] sm:$0xff]
    %v2824 = vld [vmem:[#allocation3 + $0x1b8] sm:$0xff]
    %v2825 = vld [vmem:[#allocation3 + $0x1c0] sm:$0xff]
    %v2826 = vld [vmem:[#allocation3 + $0x1c8] sm:$0xf]
    %v2827 = vld [vmem:[#allocation3 + $0x1d0] sm:$0xf]
    %v2828 = vld [vmem:[#allocation3 + $0x1d8] sm:$0xf]
    %v2829 = vpack.c.bf16 %v2772, %v2769
    %v2830 = vpack.c.bf16 %v2773, %v2770
    %v2831 = vpack.c.bf16 %v2774, %v2771
    %v2832 = vpack.c.bf16 %v2778, %v2775
    %v2833 = vpack.c.bf16 %v2779, %v2776
    %v2834 = vpack.c.bf16 %v2780, %v2777
    %v2835 = vpack.c.bf16 %v2784, %v2781
    %v2836 = vpack.c.bf16 %v2785, %v2782
    %v2837 = vpack.c.bf16 %v2786, %v2783
    %v2838 = vpack.c.bf16 %v2790, %v2787
    %v2839 = vpack.c.bf16 %v2791, %v2788
    %v2840 = vpack.c.bf16 %v2792, %v2789
    %v2841 = vpack.c.bf16 %v2796, %v2793
    %v2842 = vpack.c.bf16 %v2797, %v2794
    %v2843 = vpack.c.bf16 %v2798, %v2795
    %v2844 = vpack.c.bf16 %v2802, %v2799
    %v2845 = vpack.c.bf16 %v2803, %v2800
    %v2846 = vpack.c.bf16 %v2804, %v2801
    %v2847 = vpack.c.bf16 %v2808, %v2805
    %v2848 = vpack.c.bf16 %v2809, %v2806
    %v2849 = vpack.c.bf16 %v2810, %v2807
    %v2850 = vpack.c.bf16 %v2814, %v2811
    %v2851 = vpack.c.bf16 %v2815, %v2812
    %v2852 = vpack.c.bf16 %v2816, %v2813
    %v2853 = vpack.c.bf16 %v2820, %v2817
    %v2854 = vpack.c.bf16 %v2821, %v2818
    %v2855 = vpack.c.bf16 %v2822, %v2819
    %v2856 = vpack.c.bf16 %v2826, %v2823
    %v2857 = vpack.c.bf16 %v2827, %v2824
    %v2858 = vpack.c.bf16 %v2828, %v2825
    %v2859 = vld [vmem:[%s1 + $0xa8] sm:$0xf]
    %v2860 = vld [vmem:[%s1 + $0xac] sm:$0xf]
    %v2861 = vld [vmem:[%s1 + $0xb0] sm:$0xf]
    %v2862 = vld [vmem:[%s1 + $0xb4] sm:$0xf]
    %v2863 = vld [vmem:[%s1 + $0xb8] sm:$0xf]
    %v2864 = vld [vmem:[%s1 + $0xbc] sm:$0xf]
    %v2865 = vld [vmem:[%s1 + $0xc0] sm:$0xf]
    %v2866 = vld [vmem:[%s1 + $0xc4] sm:$0xf]
    %v2867 = vld [vmem:[%s1 + $0xc8] sm:$0xf]
    %v2868 = vld [vmem:[%s1 + $0xcc] sm:$0xf]
    %v2869 = vld [vmem:[%s1 + $0xd0] sm:$0xf]
    %v2870 = vld [vmem:[%s1 + $0xd4] sm:$0xf]
    %v2871 = vld [vmem:[%s1 + $0xd8] sm:$0xf]
    %v2872 = vld [vmem:[%s1 + $0xdc] sm:$0xf]
    %v2873 = vld [vmem:[%s1 + $0xe0] sm:$0xf]
    %v2874 = vld [vmem:[%s1 + $0xe4] sm:$0xf]
    %v2875 = vld [vmem:[%s1 + $0xe8] sm:$0xf]
    %v2876 = vld [vmem:[%s1 + $0xec] sm:$0xf]
    %v2877 = vld [vmem:[%s1 + $0xf0] sm:$0xf]
    %v2878 = vld [vmem:[%s1 + $0xf4] sm:$0xf]
    %v2879 = vld [vmem:[%s1 + $0xf8] sm:$0xf]
    %v2880 = vld [vmem:[%s1 + $0xfc] sm:$0xf]
    %v2881 = vld [vmem:[%s1 + $0x100] sm:$0xf]
    %v2882 = vld [vmem:[%s1 + $0x104] sm:$0xf]
    %v2883 = vld [vmem:[%s1 + $0x108] sm:$0xf]
    %v2884 = vld [vmem:[%s1 + $0x10c] sm:$0xf]
    %v2885 = vld [vmem:[%s1 + $0x110] sm:$0xf]
    %v2886 = vld [vmem:[%s1 + $0x114] sm:$0xf]
    %v2887 = vld [vmem:[%s1 + $0x118] sm:$0xf]
    %v2888 = vld [vmem:[%s1 + $0x11c] sm:$0xf]
    %v2889 = vld [vmem:[%s1 + $0x120] sm:$0xf]
    %v2890 = vld [vmem:[%s1 + $0x124] sm:$0xf]
    %v2891 = vld [vmem:[%s1 + $0x128] sm:$0xf]
    %v2892 = vld [vmem:[%s1 + $0x12c] sm:$0xf]
    %v2893 = vld [vmem:[%s1 + $0x130] sm:$0xf]
    %v2894 = vld [vmem:[%s1 + $0x134] sm:$0xf]
    %v2895 = vld [vmem:[%s2 + $0x2] sm:$0x1]
    %v2896 = vlaneseq
    %v2897 = vshrl.u32 %v2896, 7
    %v2898 = vsub.s32 0, %v2897
    %v2899 = vrot.slane %v2895, %v2898
    %v2936 = vunpack.c.l.b16 %v2859
    %v2937 = vunpack.c.l.b16 %v2860
    %v2938 = vunpack.c.l.b16 %v2861
    %v2939 = vunpack.c.l.b16 %v2862
    %v2940 = vunpack.c.l.b16 %v2863
    %v2941 = vunpack.c.l.b16 %v2864
    %v2942 = vunpack.c.l.b16 %v2865
    %v2943 = vunpack.c.l.b16 %v2866
    %v2944 = vunpack.c.l.b16 %v2867
    %v2945 = vunpack.c.l.b16 %v2868
    %v2946 = vunpack.c.l.b16 %v2869
    %v2947 = vunpack.c.l.b16 %v2870
    %v2948 = vunpack.c.l.b16 %v2871
    %v2949 = vunpack.c.l.b16 %v2872
    %v2950 = vunpack.c.l.b16 %v2873
    %v2951 = vunpack.c.l.b16 %v2874
    %v2952 = vunpack.c.l.b16 %v2875
    %v2953 = vunpack.c.l.b16 %v2876
    %v2954 = vunpack.c.l.b16 %v2877
    %v2955 = vunpack.c.l.b16 %v2878
    %v2956 = vunpack.c.l.b16 %v2879
    %v2957 = vunpack.c.l.b16 %v2880
    %v2958 = vunpack.c.l.b16 %v2881
    %v2959 = vunpack.c.l.b16 %v2882
    %v2960 = vunpack.c.l.b16 %v2883
    %v2961 = vunpack.c.l.b16 %v2884
    %v2962 = vunpack.c.l.b16 %v2885
    %v2963 = vunpack.c.l.b16 %v2886
    %v2964 = vunpack.c.l.b16 %v2887
    %v2965 = vunpack.c.l.b16 %v2888
    %v2966 = vunpack.c.l.b16 %v2889
    %v2967 = vunpack.c.l.b16 %v2890
    %v2968 = vunpack.c.l.b16 %v2891
    %v2969 = vunpack.c.l.b16 %v2892
    %v2970 = vunpack.c.l.b16 %v2893
    %v2971 = vunpack.c.l.b16 %v2894
    %v2972 = vpack.c.b16 %v2937, %v2936
    %v2973 = vpack.c.b16 %v2939, %v2938
    %v2974 = vpack.c.b16 %v2941, %v2940
    %v2975 = vpack.c.b16 %v2943, %v2942
    %v2976 = vpack.c.b16 %v2945, %v2944
    %v2977 = vpack.c.b16 %v2947, %v2946
    %v2978 = vpack.c.b16 %v2949, %v2948
    %v2979 = vpack.c.b16 %v2951, %v2950
    %v2980 = vpack.c.b16 %v2953, %v2952
    %v2981 = vpack.c.b16 %v2955, %v2954
    %v2982 = vpack.c.b16 %v2957, %v2956
    %v2983 = vpack.c.b16 %v2959, %v2958
    %v2984 = vpack.c.b16 %v2961, %v2960
    %v2985 = vpack.c.b16 %v2963, %v2962
    %v2986 = vpack.c.b16 %v2965, %v2964
    %v2987 = vpack.c.b16 %v2967, %v2966
    %v2988 = vpack.c.b16 %v2969, %v2968
    %v2989 = vpack.c.b16 %v2971, %v2970
    %v3009 = vsel %vm334, %v2831, 0
    %v3012 = vsel %vm334, %v2834, 0
    %v3015 = vsel %vm334, %v2837, 0
    %v3018 = vsel %vm334, %v2840, 0
    %v3021 = vsel %vm334, %v2843, 0
    %v3024 = vsel %vm334, %v2846, 0
    %v3027 = vsel %vm334, %v2849, 0
    %v3030 = vsel %vm334, %v2852, 0
    %v3033 = vsel %vm334, %v2855, 0
    %v3036 = vsel %vm334, %v2858, 0
    %3038 = vmatprep.subr.bf16.mxu0 0
    %3039 = vmatpush1.bf16.msra.mxu0 %v2972
    %3040 = vmatprep.subr.bf16.mxu0 0
    %3041 = vmatpush1.bf16.msra.mxu0 %v2973
    %3042 = vmatprep.subr.bf16.mxu0 0
    %3043 = vmatpush1.bf16.msra.mxu0 %v2974
    %3044 = vmatprep.subr.bf16.mxu0 0
    %3045 = vmatpush1.bf16.msra.mxu0 %v2975
    %3046 = vmatprep.subr.bf16.mxu0 0
    %3047 = vmatpush1.bf16.msra.mxu0 %v2976
    %3048 = vmatprep.subr.bf16.mxu0 0
    %3049 = vmatpush1.bf16.msra.mxu0 %v2977
    %3050 = vmatprep.subr.bf16.mxu0 0
    %3051 = vmatpush1.bf16.msra.mxu0 %v2978
    %3052 = vmatprep.subr.bf16.mxu0 0
    %3053 = vmatpush1.bf16.msra.mxu0 %v2979
    %3054 = vmatprep.subr.bf16.mxu0 0
    %3055 = vmatpush1.bf16.msra.mxu0 %v2980
    %3056 = vmatprep.subr.bf16.mxu0 0
    %3057 = vmatpush1.bf16.msra.mxu0 %v2981
    %3058 = vmatprep.subr.bf16.mxu0 0
    %3059 = vmatpush1.bf16.msra.mxu0 %v2982
    %3060 = vmatprep.subr.bf16.mxu0 0
    %3061 = vmatpush1.bf16.msra.mxu0 %v2983
    %3062 = vmatprep.subr.bf16.mxu0 0
    %3063 = vmatpush1.bf16.msra.mxu0 %v2984
    %3064 = vmatprep.subr.bf16.mxu0 0
    %3065 = vmatpush1.bf16.msra.mxu0 %v2985
    %3066 = vmatprep.subr.bf16.mxu0 0
    %3067 = vmatpush1.bf16.msra.mxu0 %v2986
    %3068 = vmatprep.subr.bf16.mxu0 0
    %3069 = vmatpush1.bf16.msra.mxu0 %v2987
    %3070 = vmatprep.mubr.bf16.mxu0 %v2830
    %3071 = vmatmul.mubr.bf16.gmra.mrb[0].mxu0 %v2829
    %v3072 = vpop.f32.mrb[0].mxu0
    %v3073 = vadd.f32 %v2899, %v3072
    %v3074 = vpop.f32.mrb[0].mxu0
    %v3075 = vpop.f32.mrb[0].mxu0
    %v3076 = vadd.f32 %v2899, %v3075
    %v3077 = vpop.f32.mrb[0].mxu0
    %3078 = vmatprep.mubr.bf16.mxu0 %v2833
    %3079 = vmatmul.mubr.bf16.gmra.mrb[0].mxu0 %v2832
    %v3080 = vpop.f32.mrb[0].mxu0
    %v3081 = vadd.f32 %v2899, %v3080
    %v3082 = vpop.f32.mrb[0].mxu0
    %v3083 = vpop.f32.mrb[0].mxu0
    %v3084 = vadd.f32 %v2899, %v3083
    %v3085 = vpop.f32.mrb[0].mxu0
    %3086 = vmatprep.mubr.bf16.mxu0 %v2836
    %3087 = vmatmul.mubr.bf16.gmra.mrb[0].mxu0 %v2835
    %v3088 = vpop.f32.mrb[0].mxu0
    %v3089 = vadd.f32 %v2899, %v3088
    %v3090 = vpop.f32.mrb[0].mxu0
    %v3091 = vpop.f32.mrb[0].mxu0
    %v3092 = vadd.f32 %v2899, %v3091
    %v3093 = vpop.f32.mrb[0].mxu0
    %3094 = vmatprep.mubr.bf16.mxu0 %v2839
    %3095 = vmatmul.mubr.bf16.gmra.mrb[0].mxu0 %v2838
    %v3096 = vpop.f32.mrb[0].mxu0
    %v3097 = vadd.f32 %v2899, %v3096
    %v3098 = vpop.f32.mrb[0].mxu0
    %v3099 = vpop.f32.mrb[0].mxu0
    %v3100 = vadd.f32 %v2899, %v3099
    %v3101 = vpop.f32.mrb[0].mxu0
    %3102 = vmatprep.mubr.bf16.mxu0 %v2842
    %3103 = vmatmul.mubr.bf16.gmra.mrb[0].mxu0 %v2841
    %v3104 = vpop.f32.mrb[0].mxu0
    %v3105 = vadd.f32 %v2899, %v3104
    %v3106 = vpop.f32.mrb[0].mxu0
    %v3107 = vpop.f32.mrb[0].mxu0
    %v3108 = vadd.f32 %v2899, %v3107
    %v3109 = vpop.f32.mrb[0].mxu0
    %3110 = vmatprep.mubr.bf16.mxu0 %v2845
    %3111 = vmatmul.mubr.bf16.gmra.mrb[0].mxu0 %v2844
    %v3112 = vpop.f32.mrb[0].mxu0
    %v3113 = vadd.f32 %v2899, %v3112
    %v3114 = vpop.f32.mrb[0].mxu0
    %v3115 = vpop.f32.mrb[0].mxu0
    %v3116 = vadd.f32 %v2899, %v3115
    %v3117 = vpop.f32.mrb[0].mxu0
    %3118 = vmatprep.mubr.bf16.mxu0 %v2848
    %3119 = vmatmul.mubr.bf16.gmra.mrb[0].mxu0 %v2847
    %v3120 = vpop.f32.mrb[0].mxu0
    %v3121 = vadd.f32 %v2899, %v3120
    %v3122 = vpop.f32.mrb[0].mxu0
    %v3123 = vpop.f32.mrb[0].mxu0
    %v3124 = vadd.f32 %v2899, %v3123
    %v3125 = vpop.f32.mrb[0].mxu0
    %3126 = vmatprep.mubr.bf16.mxu0 %v2851
    %3127 = vmatmul.mubr.bf16.gmra.mrb[0].mxu0 %v2850
    %v3128 = vpop.f32.mrb[0].mxu0
    %v3129 = vadd.f32 %v2899, %v3128
    %v3130 = vpop.f32.mrb[0].mxu0
    %v3131 = vpop.f32.mrb[0].mxu0
    %v3132 = vadd.f32 %v2899, %v3131
    %v3133 = vpop.f32.mrb[0].mxu0
    %3134 = vmatprep.mubr.bf16.mxu0 %v2854
    %3135 = vmatmul.mubr.bf16.gmra.mrb[0].mxu0 %v2853
    %v3136 = vpop.f32.mrb[0].mxu0
    %v3137 = vadd.f32 %v2899, %v3136
    %v3138 = vpop.f32.mrb[0].mxu0
    %v3139 = vpop.f32.mrb[0].mxu0
    %v3140 = vadd.f32 %v2899, %v3139
    %v3141 = vpop.f32.mrb[0].mxu0
    %3142 = vmatprep.mubr.bf16.mxu0 %v2857
    %3143 = vmatmul.mubr.bf16.gmra.mrb[0].mxu0 %v2856
    %v3144 = vpop.f32.mrb[0].mxu0
    %v3145 = vadd.f32 %v2899, %v3144
    %v3146 = vpop.f32.mrb[0].mxu0
    %v3147 = vpop.f32.mrb[0].mxu0
    %v3148 = vadd.f32 %v2899, %v3147
    %v3149 = vpop.f32.mrb[0].mxu0
    %3150 = vdwg.mxu0
    %3151 = vmatprep.subr.bf16.mxu0 0
    %3152 = vmatpush1.bf16.msra.mxu0 %v2988
    %3153 = vmatprep.subr.bf16.mxu0 0
    %3154 = vmatpush1.bf16.msra.mxu0 %v2989
    %3155 = vmatprep.subr.bf16.mxu0 0
    %3156 = vmatpush1.bf16.msra.mxu0 0
    %3157 = vmatprep.subr.bf16.mxu0 0
    %3158 = vmatpush1.bf16.msra.mxu0 0
    %3159 = vmatprep.subr.bf16.mxu0 0
    %3160 = vmatpush1.bf16.msra.mxu0 0
    %3161 = vmatprep.subr.bf16.mxu0 0
    %3162 = vmatpush1.bf16.msra.mxu0 0
    %3163 = vmatprep.subr.bf16.mxu0 0
    %3164 = vmatpush1.bf16.msra.mxu0 0
    %3165 = vmatprep.subr.bf16.mxu0 0
    %3166 = vmatpush1.bf16.msra.mxu0 0
    %3167 = vmatprep.subr.bf16.mxu0 0
    %3168 = vmatpush1.bf16.msra.mxu0 0
    %3169 = vmatprep.subr.bf16.mxu0 0
    %3170 = vmatpush1.bf16.msra.mxu0 0
    %3171 = vmatprep.subr.bf16.mxu0 0
    %3172 = vmatpush1.bf16.msra.mxu0 0
    %3173 = vmatprep.subr.bf16.mxu0 0
    %3174 = vmatpush1.bf16.msra.mxu0 0
    %3175 = vmatprep.subr.bf16.mxu0 0
    %3176 = vmatpush1.bf16.msra.mxu0 0
    %3177 = vmatprep.subr.bf16.mxu0 0
    %3178 = vmatpush1.bf16.msra.mxu0 0
    %3179 = vmatprep.subr.bf16.mxu0 0
    %3180 = vmatpush1.bf16.msra.mxu0 0
    %3181 = vmatprep.subr.bf16.mxu0 0
    %3182 = vmatpush1.bf16.msra.mxu0 0
    %3183 = vmatprep.mubr.bf16.mxu0 0
    %3184 = vmatmul.mubr.bf16.gmra.mrb[0].mxu0 %v3009
    %v3185 = vpop.f32.mrb[0].mxu0
    %v3186 = vadd.f32 %v3073, %v3185
    %v3187 = vpop.f32.mrb[0].mxu0
    %v3188 = vpop.f32.mrb[0].mxu0
    %v3189 = vadd.f32 %v3076, %v3188
    %v3190 = vpop.f32.mrb[0].mxu0
    %3191 = vmatprep.mubr.bf16.mxu0 0
    %3192 = vmatmul.mubr.bf16.gmra.mrb[0].mxu0 %v3012
    %v3193 = vpop.f32.mrb[0].mxu0
    %v3194 = vadd.f32 %v3081, %v3193
    %v3195 = vpop.f32.mrb[0].mxu0
    %v3196 = vpop.f32.mrb[0].mxu0
    %v3197 = vadd.f32 %v3084, %v3196
    %v3198 = vpop.f32.mrb[0].mxu0
    %3199 = vmatprep.mubr.bf16.mxu0 0
    %3200 = vmatmul.mubr.bf16.gmra.mrb[0].mxu0 %v3015
    %v3201 = vpop.f32.mrb[0].mxu0
    %v3202 = vadd.f32 %v3089, %v3201
    %v3203 = vpop.f32.mrb[0].mxu0
    %v3204 = vpop.f32.mrb[0].mxu0
    %v3205 = vadd.f32 %v3092, %v3204
    %v3206 = vpop.f32.mrb[0].mxu0
    %3207 = vmatprep.mubr.bf16.mxu0 0
    %3208 = vmatmul.mubr.bf16.gmra.mrb[0].mxu0 %v3018
    %v3209 = vpop.f32.mrb[0].mxu0
    %v3210 = vadd.f32 %v3097, %v3209
    %v3211 = vpop.f32.mrb[0].mxu0
    %v3212 = vpop.f32.mrb[0].mxu0
    %v3213 = vadd.f32 %v3100, %v3212
    %v3214 = vpop.f32.mrb[0].mxu0
    %3215 = vmatprep.mubr.bf16.mxu0 0
    %3216 = vmatmul.mubr.bf16.gmra.mrb[0].mxu0 %v3021
    %v3217 = vpop.f32.mrb[0].mxu0
    %v3218 = vadd.f32 %v3105, %v3217
    %v3219 = vpop.f32.mrb[0].mxu0
    %v3220 = vpop.f32.mrb[0].mxu0
    %v3221 = vadd.f32 %v3108, %v3220
    %v3222 = vpop.f32.mrb[0].mxu0
    %3223 = vmatprep.mubr.bf16.mxu0 0
    %3224 = vmatmul.mubr.bf16.gmra.mrb[0].mxu0 %v3024
    %v3225 = vpop.f32.mrb[0].mxu0
    %v3226 = vadd.f32 %v3113, %v3225
    %v3227 = vpop.f32.mrb[0].mxu0
    %v3228 = vpop.f32.mrb[0].mxu0
    %v3229 = vadd.f32 %v3116, %v3228
    %v3230 = vpop.f32.mrb[0].mxu0
    %3231 = vmatprep.mubr.bf16.mxu0 0
    %3232 = vmatmul.mubr.bf16.gmra.mrb[0].mxu0 %v3027
    %v3233 = vpop.f32.mrb[0].mxu0
    %v3234 = vadd.f32 %v3121, %v3233
    %v3235 = vpop.f32.mrb[0].mxu0
    %v3236 = vpop.f32.mrb[0].mxu0
    %v3237 = vadd.f32 %v3124, %v3236
    %v3238 = vpop.f32.mrb[0].mxu0
    %3239 = vmatprep.mubr.bf16.mxu0 0
    %3240 = vmatmul.mubr.bf16.gmra.mrb[0].mxu0 %v3030
    %v3241 = vpop.f32.mrb[0].mxu0
    %v3242 = vadd.f32 %v3129, %v3241
    %v3243 = vpop.f32.mrb[0].mxu0
    %v3244 = vpop.f32.mrb[0].mxu0
    %v3245 = vadd.f32 %v3132, %v3244
    %v3246 = vpop.f32.mrb[0].mxu0
    %3247 = vmatprep.mubr.bf16.mxu0 0
    %3248 = vmatmul.mubr.bf16.gmra.mrb[0].mxu0 %v3033
    %v3249 = vpop.f32.mrb[0].mxu0
    %v3250 = vadd.f32 %v3137, %v3249
    %v3251 = vpop.f32.mrb[0].mxu0
    %v3252 = vpop.f32.mrb[0].mxu0
    %v3253 = vadd.f32 %v3140, %v3252
    %v3254 = vpop.f32.mrb[0].mxu0
    %3255 = vmatprep.mubr.bf16.mxu0 0
    %3256 = vmatmul.mubr.bf16.gmra.mrb[0].mxu0 %v3036
    %v3257 = vpop.f32.mrb[0].mxu0
    %v3258 = vadd.f32 %v3145, %v3257
    %v3259 = vpop.f32.mrb[0].mxu0
    %v3260 = vpop.f32.mrb[0].mxu0
    %v3261 = vadd.f32 %v3148, %v3260
    %v3262 = vpop.f32.mrb[0].mxu0
    %3263 = vdwg.mxu0
    %v3264 = vmax.f32 %v3186, 0.0
    %v3265 = vmax.f32 %v3189, 0.0
    %v3266 = vmax.f32 %v3194, 0.0
    %v3267 = vmax.f32 %v3197, 0.0
    %v3268 = vmax.f32 %v3202, 0.0
    %v3269 = vmax.f32 %v3205, 0.0
    %v3270 = vmax.f32 %v3210, 0.0
    %v3271 = vmax.f32 %v3213, 0.0
    %v3272 = vmax.f32 %v3218, 0.0
    %v3273 = vmax.f32 %v3221, 0.0
    %v3274 = vmax.f32 %v3226, 0.0
    %v3275 = vmax.f32 %v3229, 0.0
    %v3276 = vmax.f32 %v3234, 0.0
    %v3277 = vmax.f32 %v3237, 0.0
    %v3278 = vmax.f32 %v3242, 0.0
    %v3279 = vmax.f32 %v3245, 0.0
    %v3280 = vmax.f32 %v3250, 0.0
    %v3281 = vmax.f32 %v3253, 0.0
    %v3282 = vmax.f32 %v3258, 0.0
    %v3283 = vmax.f32 %v3261, 0.0
    %3284 = vst.msk [vmem:[#allocation2] sm:$0xff] %vm334, %v3264
    %3285 = vst.msk [vmem:[#allocation2 + $0x8] sm:$0xff] %vm334, %v3265
    %3286 = vst.msk [vmem:[#allocation2 + $0x10] sm:$0xff] %vm334, %v3266
    %3287 = vst.msk [vmem:[#allocation2 + $0x18] sm:$0xff] %vm334, %v3267
    %3288 = vst.msk [vmem:[#allocation2 + $0x20] sm:$0xff] %vm334, %v3268
    %3289 = vst.msk [vmem:[#allocation2 + $0x28] sm:$0xff] %vm334, %v3269
    %3290 = vst.msk [vmem:[#allocation2 + $0x30] sm:$0xff] %vm334, %v3270
    %3291 = vst.msk [vmem:[#allocation2 + $0x38] sm:$0xff] %vm334, %v3271
    %3292 = vst.msk [vmem:[#allocation2 + $0x40] sm:$0xff] %vm334, %v3272
    %3293 = vst.msk [vmem:[#allocation2 + $0x48] sm:$0xff] %vm334, %v3273
    %3294 = vst.msk [vmem:[#allocation2 + $0x50] sm:$0xff] %vm334, %v3274
    %3295 = vst.msk [vmem:[#allocation2 + $0x58] sm:$0xff] %vm334, %v3275
    %3296 = vst.msk [vmem:[#allocation2 + $0x60] sm:$0xff] %vm334, %v3276
    %3297 = vst.msk [vmem:[#allocation2 + $0x68] sm:$0xff] %vm334, %v3277
    %3298 = vst.msk [vmem:[#allocation2 + $0x70] sm:$0xff] %vm334, %v3278
    %3299 = vst.msk [vmem:[#allocation2 + $0x78] sm:$0xff] %vm334, %v3279
    %3300 = vst.msk [vmem:[#allocation2 + $0x80] sm:$0xff] %vm334, %v3280
    %3301 = vst.msk [vmem:[#allocation2 + $0x88] sm:$0xff] %vm334, %v3281
    %3302 = vst.msk [vmem:[#allocation2 + $0x90] sm:$0xff] %vm334, %v3282
    %3303 = vst.msk [vmem:[#allocation2 + $0x98] sm:$0xf] %vm1964, %v3283
    %v3304 = vld [vmem:[#allocation2] sm:$0xff]
    %v3305 = vld [vmem:[#allocation2 + $0x8] sm:$0xff]
    %v3306 = vld [vmem:[#allocation2 + $0x10] sm:$0xff]
    %v3307 = vld [vmem:[#allocation2 + $0x18] sm:$0xff]
    %v3308 = vld [vmem:[#allocation2 + $0x20] sm:$0xff]
    %v3309 = vld [vmem:[#allocation2 + $0x28] sm:$0xff]
    %v3310 = vld [vmem:[#allocation2 + $0x30] sm:$0xff]
    %v3311 = vld [vmem:[#allocation2 + $0x38] sm:$0xff]
    %v3312 = vld [vmem:[#allocation2 + $0x40] sm:$0xff]
    %v3313 = vld [vmem:[#allocation2 + $0x48] sm:$0xff]
    %v3314 = vld [vmem:[#allocation2 + $0x50] sm:$0xff]
    %v3315 = vld [vmem:[#allocation2 + $0x58] sm:$0xff]
    %v3316 = vld [vmem:[#allocation2 + $0x60] sm:$0xff]
    %v3317 = vld [vmem:[#allocation2 + $0x68] sm:$0xff]
    %v3318 = vld [vmem:[#allocation2 + $0x70] sm:$0xff]
    %v3319 = vld [vmem:[#allocation2 + $0x78] sm:$0xff]
    %v3320 = vld [vmem:[#allocation2 + $0x80] sm:$0x3f]
    %3321 = vst.msk [vmem:[#allocation3] sm:$0xff] %vm334, %v3304
    %3322 = vst.msk [vmem:[#allocation3 + $0x18] sm:$0xff] %vm334, %v3305
    %3323 = vst.msk [vmem:[#allocation3 + $0x30] sm:$0xff] %vm334, %v3306
    %3324 = vst.msk [vmem:[#allocation3 + $0x48] sm:$0xff] %vm334, %v3307
    %3325 = vst.msk [vmem:[#allocation3 + $0x60] sm:$0xff] %vm334, %v3308
    %3326 = vst.msk [vmem:[#allocation3 + $0x78] sm:$0xff] %vm334, %v3309
    %3327 = vst.msk [vmem:[#allocation3 + $0x90] sm:$0xff] %vm334, %v3310
    %3328 = vst.msk [vmem:[#allocation3 + $0xa8] sm:$0xff] %vm334, %v3311
    %3329 = vst.msk [vmem:[#allocation3 + $0xc0] sm:$0xff] %vm334, %v3312
    %3330 = vst.msk [vmem:[#allocation3 + $0xd8] sm:$0xff] %vm334, %v3313
    %3331 = vst.msk [vmem:[#allocation3 + $0xf0] sm:$0xff] %vm334, %v3314
    %3332 = vst.msk [vmem:[#allocation3 + $0x108] sm:$0xff] %vm334, %v3315
    %3333 = vst.msk [vmem:[#allocation3 + $0x120] sm:$0xff] %vm334, %v3316
    %3334 = vst.msk [vmem:[#allocation3 + $0x138] sm:$0xff] %vm334, %v3317
    %3335 = vst.msk [vmem:[#allocation3 + $0x150] sm:$0xff] %vm334, %v3318
    %3336 = vst.msk [vmem:[#allocation3 + $0x168] sm:$0xff] %vm334, %v3319
    %vm3337 = vcmask 259072
    %3338 = vst.msk [vmem:[#allocation3 + $0x180] sm:$0x3f] %vm3337, %v3320
    %v3339 = vld [vmem:[#allocation2 + $0x1] sm:$0xff]
    %v3340 = vld [vmem:[#allocation2 + $0x9] sm:$0xff]
    %v3341 = vld [vmem:[#allocation2 + $0x11] sm:$0xff]
    %v3342 = vld [vmem:[#allocation2 + $0x19] sm:$0xff]
    %v3343 = vld [vmem:[#allocation2 + $0x21] sm:$0xff]
    %v3344 = vld [vmem:[#allocation2 + $0x29] sm:$0xff]
    %v3345 = vld [vmem:[#allocation2 + $0x31] sm:$0xff]
    %v3346 = vld [vmem:[#allocation2 + $0x39] sm:$0xff]
    %v3347 = vld [vmem:[#allocation2 + $0x41] sm:$0xff]
    %v3348 = vld [vmem:[#allocation2 + $0x49] sm:$0xff]
    %v3349 = vld [vmem:[#allocation2 + $0x51] sm:$0xff]
    %v3350 = vld [vmem:[#allocation2 + $0x59] sm:$0xff]
    %v3351 = vld [vmem:[#allocation2 + $0x61] sm:$0xff]
    %v3352 = vld [vmem:[#allocation2 + $0x69] sm:$0xff]
    %v3353 = vld [vmem:[#allocation2 + $0x71] sm:$0xff]
    %v3354 = vld [vmem:[#allocation2 + $0x79] sm:$0xff]
    %v3355 = vld [vmem:[#allocation2 + $0x81] sm:$0x3f]
    %3373 = vrot.lane.b32.xlu0 %v3339, 32
    %v3374 = vpop.permute.xlu0 %3373
    %3375 = vrot.lane.b32.xlu0 %v3340, 32
    %v3376 = vpop.permute.xlu0 %3375
    %3377 = vrot.lane.b32.xlu0 %v3341, 32
    %v3378 = vpop.permute.xlu0 %3377
    %3379 = vrot.lane.b32.xlu0 %v3342, 32
    %v3380 = vpop.permute.xlu0 %3379
    %3381 = vrot.lane.b32.xlu0 %v3343, 32
    %v3382 = vpop.permute.xlu0 %3381
    %3383 = vrot.lane.b32.xlu0 %v3344, 32
    %v3384 = vpop.permute.xlu0 %3383
    %3385 = vrot.lane.b32.xlu0 %v3345, 32
    %v3386 = vpop.permute.xlu0 %3385
    %3387 = vrot.lane.b32.xlu0 %v3346, 32
    %v3388 = vpop.permute.xlu0 %3387
    %3389 = vrot.lane.b32.xlu0 %v3347, 32
    %v3390 = vpop.permute.xlu0 %3389
    %3391 = vrot.lane.b32.xlu0 %v3348, 32
    %v3392 = vpop.permute.xlu0 %3391
    %3393 = vrot.lane.b32.xlu0 %v3349, 32
    %v3394 = vpop.permute.xlu0 %3393
    %3395 = vrot.lane.b32.xlu0 %v3350, 32
    %v3396 = vpop.permute.xlu0 %3395
    %3397 = vrot.lane.b32.xlu0 %v3351, 32
    %v3398 = vpop.permute.xlu0 %3397
    %3399 = vrot.lane.b32.xlu0 %v3352, 32
    %v3400 = vpop.permute.xlu0 %3399
    %3401 = vrot.lane.b32.xlu0 %v3353, 32
    %v3402 = vpop.permute.xlu0 %3401
    %3403 = vrot.lane.b32.xlu0 %v3354, 32
    %v3404 = vpop.permute.xlu0 %3403
    %3405 = vrot.lane.b32.xlu0 %v3355, 32
    %v3406 = vpop.permute.xlu0 %3405
    %3424 = vst.msk [vmem:[#allocation3] sm:$0xff] %vm522, %v3374
    %3425 = vst.msk [vmem:[#allocation3 + $0x18] sm:$0xff] %vm522, %v3376
    %3426 = vst.msk [vmem:[#allocation3 + $0x30] sm:$0xff] %vm522, %v3378
    %3427 = vst.msk [vmem:[#allocation3 + $0x48] sm:$0xff] %vm522, %v3380
    %3428 = vst.msk [vmem:[#allocation3 + $0x60] sm:$0xff] %vm522, %v3382
    %3429 = vst.msk [vmem:[#allocation3 + $0x78] sm:$0xff] %vm522, %v3384
    %3430 = vst.msk [vmem:[#allocation3 + $0x90] sm:$0xff] %vm522, %v3386
    %3431 = vst.msk [vmem:[#allocation3 + $0xa8] sm:$0xff] %vm522, %v3388
    %3432 = vst.msk [vmem:[#allocation3 + $0xc0] sm:$0xff] %vm522, %v3390
    %3433 = vst.msk [vmem:[#allocation3 + $0xd8] sm:$0xff] %vm522, %v3392
    %3434 = vst.msk [vmem:[#allocation3 + $0xf0] sm:$0xff] %vm522, %v3394
    %3435 = vst.msk [vmem:[#allocation3 + $0x108] sm:$0xff] %vm522, %v3396
    %3436 = vst.msk [vmem:[#allocation3 + $0x120] sm:$0xff] %vm522, %v3398
    %3437 = vst.msk [vmem:[#allocation3 + $0x138] sm:$0xff] %vm522, %v3400
    %3438 = vst.msk [vmem:[#allocation3 + $0x150] sm:$0xff] %vm522, %v3402
    %3439 = vst.msk [vmem:[#allocation3 + $0x168] sm:$0xff] %vm522, %v3404
    %vm3440 = vcmask 521472
    %3441 = vst.msk [vmem:[#allocation3 + $0x180] sm:$0x3f] %vm3440, %v3406
    %v3442 = vld [vmem:[#allocation2 + $0x2] sm:$0xff]
    %v3443 = vld [vmem:[#allocation2 + $0xa] sm:$0xff]
    %v3444 = vld [vmem:[#allocation2 + $0x12] sm:$0xff]
    %v3445 = vld [vmem:[#allocation2 + $0x1a] sm:$0xff]
    %v3446 = vld [vmem:[#allocation2 + $0x22] sm:$0xff]
    %v3447 = vld [vmem:[#allocation2 + $0x2a] sm:$0xff]
    %v3448 = vld [vmem:[#allocation2 + $0x32] sm:$0xff]
    %v3449 = vld [vmem:[#allocation2 + $0x3a] sm:$0xff]
    %v3450 = vld [vmem:[#allocation2 + $0x42] sm:$0xff]
    %v3451 = vld [vmem:[#allocation2 + $0x4a] sm:$0xff]
    %v3452 = vld [vmem:[#allocation2 + $0x52] sm:$0xff]
    %v3453 = vld [vmem:[#allocation2 + $0x5a] sm:$0xff]
    %v3454 = vld [vmem:[#allocation2 + $0x62] sm:$0xff]
    %v3455 = vld [vmem:[#allocation2 + $0x6a] sm:$0xff]
    %v3456 = vld [vmem:[#allocation2 + $0x72] sm:$0xff]
    %v3457 = vld [vmem:[#allocation2 + $0x7a] sm:$0xff]
    %v3458 = vld [vmem:[#allocation2 + $0x82] sm:$0x3f]
    %3476 = vrot.lane.b32.xlu0 %v3442, 64
    %v3477 = vpop.permute.xlu0 %3476
    %3478 = vrot.lane.b32.xlu0 %v3443, 64
    %v3479 = vpop.permute.xlu0 %3478
    %3480 = vrot.lane.b32.xlu0 %v3444, 64
    %v3481 = vpop.permute.xlu0 %3480
    %3482 = vrot.lane.b32.xlu0 %v3445, 64
    %v3483 = vpop.permute.xlu0 %3482
    %3484 = vrot.lane.b32.xlu0 %v3446, 64
    %v3485 = vpop.permute.xlu0 %3484
    %3486 = vrot.lane.b32.xlu0 %v3447, 64
    %v3487 = vpop.permute.xlu0 %3486
    %3488 = vrot.lane.b32.xlu0 %v3448, 64
    %v3489 = vpop.permute.xlu0 %3488
    %3490 = vrot.lane.b32.xlu0 %v3449, 64
    %v3491 = vpop.permute.xlu0 %3490
    %3492 = vrot.lane.b32.xlu0 %v3450, 64
    %v3493 = vpop.permute.xlu0 %3492
    %3494 = vrot.lane.b32.xlu0 %v3451, 64
    %v3495 = vpop.permute.xlu0 %3494
    %3496 = vrot.lane.b32.xlu0 %v3452, 64
    %v3497 = vpop.permute.xlu0 %3496
    %3498 = vrot.lane.b32.xlu0 %v3453, 64
    %v3499 = vpop.permute.xlu0 %3498
    %3500 = vrot.lane.b32.xlu0 %v3454, 64
    %v3501 = vpop.permute.xlu0 %3500
    %3502 = vrot.lane.b32.xlu0 %v3455, 64
    %v3503 = vpop.permute.xlu0 %3502
    %3504 = vrot.lane.b32.xlu0 %v3456, 64
    %v3505 = vpop.permute.xlu0 %3504
    %3506 = vrot.lane.b32.xlu0 %v3457, 64
    %v3507 = vpop.permute.xlu0 %3506
    %3508 = vrot.lane.b32.xlu0 %v3458, 64
    %v3509 = vpop.permute.xlu0 %3508
    %3527 = vst.msk [vmem:[#allocation3] sm:$0xff] %vm662, %v3477
    %3528 = vst.msk [vmem:[#allocation3 + $0x18] sm:$0xff] %vm662, %v3479
    %3529 = vst.msk [vmem:[#allocation3 + $0x30] sm:$0xff] %vm662, %v3481
    %3530 = vst.msk [vmem:[#allocation3 + $0x48] sm:$0xff] %vm662, %v3483
    %3531 = vst.msk [vmem:[#allocation3 + $0x60] sm:$0xff] %vm662, %v3485
    %3532 = vst.msk [vmem:[#allocation3 + $0x78] sm:$0xff] %vm662, %v3487
    %3533 = vst.msk [vmem:[#allocation3 + $0x90] sm:$0xff] %vm662, %v3489
    %3534 = vst.msk [vmem:[#allocation3 + $0xa8] sm:$0xff] %vm662, %v3491
    %3535 = vst.msk [vmem:[#allocation3 + $0xc0] sm:$0xff] %vm662, %v3493
    %3536 = vst.msk [vmem:[#allocation3 + $0xd8] sm:$0xff] %vm662, %v3495
    %3537 = vst.msk [vmem:[#allocation3 + $0xf0] sm:$0xff] %vm662, %v3497
    %3538 = vst.msk [vmem:[#allocation3 + $0x108] sm:$0xff] %vm662, %v3499
    %3539 = vst.msk [vmem:[#allocation3 + $0x120] sm:$0xff] %vm662, %v3501
    %3540 = vst.msk [vmem:[#allocation3 + $0x138] sm:$0xff] %vm662, %v3503
    %3541 = vst.msk [vmem:[#allocation3 + $0x150] sm:$0xff] %vm662, %v3505
    %3542 = vst.msk [vmem:[#allocation3 + $0x168] sm:$0xff] %vm662, %v3507
    %vm3543 = vcmask 783872
    %3544 = vst.msk [vmem:[#allocation3 + $0x180] sm:$0x3f] %vm3543, %v3509
    %v3545 = vld [vmem:[#allocation2 + $0xa] sm:$0xff]
    %v3546 = vld [vmem:[#allocation2 + $0x12] sm:$0xff]
    %v3547 = vld [vmem:[#allocation2 + $0x1a] sm:$0xff]
    %v3548 = vld [vmem:[#allocation2 + $0x22] sm:$0xff]
    %v3549 = vld [vmem:[#allocation2 + $0x2a] sm:$0xff]
    %v3550 = vld [vmem:[#allocation2 + $0x32] sm:$0xff]
    %v3551 = vld [vmem:[#allocation2 + $0x3a] sm:$0xff]
    %v3552 = vld [vmem:[#allocation2 + $0x42] sm:$0xff]
    %v3553 = vld [vmem:[#allocation2 + $0x4a] sm:$0xff]
    %v3554 = vld [vmem:[#allocation2 + $0x52] sm:$0xff]
    %v3555 = vld [vmem:[#allocation2 + $0x5a] sm:$0xff]
    %v3556 = vld [vmem:[#allocation2 + $0x62] sm:$0xff]
    %v3557 = vld [vmem:[#allocation2 + $0x6a] sm:$0xff]
    %v3558 = vld [vmem:[#allocation2 + $0x72] sm:$0xff]
    %v3559 = vld [vmem:[#allocation2 + $0x7a] sm:$0xff]
    %v3560 = vld [vmem:[#allocation2 + $0x82] sm:$0xff]
    %v3561 = vld [vmem:[#allocation2 + $0x8a] sm:$0x3f]
    %3579 = vrot.lane.b32.xlu0 %v3545, 96
    %v3580 = vpop.permute.xlu0 %3579
    %3581 = vrot.lane.b32.xlu0 %v3546, 96
    %v3582 = vpop.permute.xlu0 %3581
    %3583 = vrot.lane.b32.xlu0 %v3547, 96
    %v3584 = vpop.permute.xlu0 %3583
    %3585 = vrot.lane.b32.xlu0 %v3548, 96
    %v3586 = vpop.permute.xlu0 %3585
    %3587 = vrot.lane.b32.xlu0 %v3549, 96
    %v3588 = vpop.permute.xlu0 %3587
    %3589 = vrot.lane.b32.xlu0 %v3550, 96
    %v3590 = vpop.permute.xlu0 %3589
    %3591 = vrot.lane.b32.xlu0 %v3551, 96
    %v3592 = vpop.permute.xlu0 %3591
    %3593 = vrot.lane.b32.xlu0 %v3552, 96
    %v3594 = vpop.permute.xlu0 %3593
    %3595 = vrot.lane.b32.xlu0 %v3553, 96
    %v3596 = vpop.permute.xlu0 %3595
    %3597 = vrot.lane.b32.xlu0 %v3554, 96
    %v3598 = vpop.permute.xlu0 %3597
    %3599 = vrot.lane.b32.xlu0 %v3555, 96
    %v3600 = vpop.permute.xlu0 %3599
    %3601 = vrot.lane.b32.xlu0 %v3556, 96
    %v3602 = vpop.permute.xlu0 %3601
    %3603 = vrot.lane.b32.xlu0 %v3557, 96
    %v3604 = vpop.permute.xlu0 %3603
    %3605 = vrot.lane.b32.xlu0 %v3558, 96
    %v3606 = vpop.permute.xlu0 %3605
    %3607 = vrot.lane.b32.xlu0 %v3559, 96
    %v3608 = vpop.permute.xlu0 %3607
    %3609 = vrot.lane.b32.xlu0 %v3560, 96
    %v3610 = vpop.permute.xlu0 %3609
    %3611 = vrot.lane.b32.xlu0 %v3561, 96
    %v3612 = vpop.permute.xlu0 %3611
    %3630 = vst.msk [vmem:[#allocation3] sm:$0xff] %vm802, %v3580
    %3631 = vst.msk [vmem:[#allocation3 + $0x18] sm:$0xff] %vm802, %v3582
    %3632 = vst.msk [vmem:[#allocation3 + $0x30] sm:$0xff] %vm802, %v3584
    %3633 = vst.msk [vmem:[#allocation3 + $0x48] sm:$0xff] %vm802, %v3586
    %3634 = vst.msk [vmem:[#allocation3 + $0x60] sm:$0xff] %vm802, %v3588
    %3635 = vst.msk [vmem:[#allocation3 + $0x78] sm:$0xff] %vm802, %v3590
    %3636 = vst.msk [vmem:[#allocation3 + $0x90] sm:$0xff] %vm802, %v3592
    %3637 = vst.msk [vmem:[#allocation3 + $0xa8] sm:$0xff] %vm802, %v3594
    %3638 = vst.msk [vmem:[#allocation3 + $0xc0] sm:$0xff] %vm802, %v3596
    %3639 = vst.msk [vmem:[#allocation3 + $0xd8] sm:$0xff] %vm802, %v3598
    %3640 = vst.msk [vmem:[#allocation3 + $0xf0] sm:$0xff] %vm802, %v3600
    %3641 = vst.msk [vmem:[#allocation3 + $0x108] sm:$0xff] %vm802, %v3602
    %3642 = vst.msk [vmem:[#allocation3 + $0x120] sm:$0xff] %vm802, %v3604
    %3643 = vst.msk [vmem:[#allocation3 + $0x138] sm:$0xff] %vm802, %v3606
    %3644 = vst.msk [vmem:[#allocation3 + $0x150] sm:$0xff] %vm802, %v3608
    %3645 = vst.msk [vmem:[#allocation3 + $0x168] sm:$0xff] %vm802, %v3610
    %vm3646 = vcmask 1046272
    %3647 = vst.msk [vmem:[#allocation3 + $0x180] sm:$0x3f] %vm3646, %v3612
    %v3648 = vld [vmem:[#allocation2 + $0xb] sm:$0xff]
    %v3649 = vld [vmem:[#allocation2 + $0x13] sm:$0xff]
    %v3650 = vld [vmem:[#allocation2 + $0x1b] sm:$0xff]
    %v3651 = vld [vmem:[#allocation2 + $0x23] sm:$0xff]
    %v3652 = vld [vmem:[#allocation2 + $0x2b] sm:$0xff]
    %v3653 = vld [vmem:[#allocation2 + $0x33] sm:$0xff]
    %v3654 = vld [vmem:[#allocation2 + $0x3b] sm:$0xff]
    %v3655 = vld [vmem:[#allocation2 + $0x43] sm:$0xff]
    %v3656 = vld [vmem:[#allocation2 + $0x4b] sm:$0xff]
    %v3657 = vld [vmem:[#allocation2 + $0x53] sm:$0xff]
    %v3658 = vld [vmem:[#allocation2 + $0x5b] sm:$0xff]
    %v3659 = vld [vmem:[#allocation2 + $0x63] sm:$0xff]
    %v3660 = vld [vmem:[#allocation2 + $0x6b] sm:$0xff]
    %v3661 = vld [vmem:[#allocation2 + $0x73] sm:$0xff]
    %v3662 = vld [vmem:[#allocation2 + $0x7b] sm:$0xff]
    %v3663 = vld [vmem:[#allocation2 + $0x83] sm:$0xff]
    %v3664 = vld [vmem:[#allocation2 + $0x8b] sm:$0x3f]
    %3665 = vst.msk [vmem:[#allocation3 + $0x8] sm:$0xff] %vm334, %v3648
    %3666 = vst.msk [vmem:[#allocation3 + $0x20] sm:$0xff] %vm334, %v3649
    %3667 = vst.msk [vmem:[#allocation3 + $0x38] sm:$0xff] %vm334, %v3650
    %3668 = vst.msk [vmem:[#allocation3 + $0x50] sm:$0xff] %vm334, %v3651
    %3669 = vst.msk [vmem:[#allocation3 + $0x68] sm:$0xff] %vm334, %v3652
    %3670 = vst.msk [vmem:[#allocation3 + $0x80] sm:$0xff] %vm334, %v3653
    %3671 = vst.msk [vmem:[#allocation3 + $0x98] sm:$0xff] %vm334, %v3654
    %3672 = vst.msk [vmem:[#allocation3 + $0xb0] sm:$0xff] %vm334, %v3655
    %3673 = vst.msk [vmem:[#allocation3 + $0xc8] sm:$0xff] %vm334, %v3656
    %3674 = vst.msk [vmem:[#allocation3 + $0xe0] sm:$0xff] %vm334, %v3657
    %3675 = vst.msk [vmem:[#allocation3 + $0xf8] sm:$0xff] %vm334, %v3658
    %3676 = vst.msk [vmem:[#allocation3 + $0x110] sm:$0xff] %vm334, %v3659
    %3677 = vst.msk [vmem:[#allocation3 + $0x128] sm:$0xff] %vm334, %v3660
    %3678 = vst.msk [vmem:[#allocation3 + $0x140] sm:$0xff] %vm334, %v3661
    %3679 = vst.msk [vmem:[#allocation3 + $0x158] sm:$0xff] %vm334, %v3662
    %3680 = vst.msk [vmem:[#allocation3 + $0x170] sm:$0xff] %vm334, %v3663
    %3681 = vst.msk [vmem:[#allocation3 + $0x188] sm:$0x3f] %vm3337, %v3664
    %v3682 = vld [vmem:[#allocation2 + $0xc] sm:$0xff]
    %v3683 = vld [vmem:[#allocation2 + $0x14] sm:$0xff]
    %v3684 = vld [vmem:[#allocation2 + $0x1c] sm:$0xff]
    %v3685 = vld [vmem:[#allocation2 + $0x24] sm:$0xff]
    %v3686 = vld [vmem:[#allocation2 + $0x2c] sm:$0xff]
    %v3687 = vld [vmem:[#allocation2 + $0x34] sm:$0xff]
    %v3688 = vld [vmem:[#allocation2 + $0x3c] sm:$0xff]
    %v3689 = vld [vmem:[#allocation2 + $0x44] sm:$0xff]
    %v3690 = vld [vmem:[#allocation2 + $0x4c] sm:$0xff]
    %v3691 = vld [vmem:[#allocation2 + $0x54] sm:$0xff]
    %v3692 = vld [vmem:[#allocation2 + $0x5c] sm:$0xff]
    %v3693 = vld [vmem:[#allocation2 + $0x64] sm:$0xff]
    %v3694 = vld [vmem:[#allocation2 + $0x6c] sm:$0xff]
    %v3695 = vld [vmem:[#allocation2 + $0x74] sm:$0xff]
    %v3696 = vld [vmem:[#allocation2 + $0x7c] sm:$0xff]
    %v3697 = vld [vmem:[#allocation2 + $0x84] sm:$0xff]
    %v3698 = vld [vmem:[#allocation2 + $0x8c] sm:$0x3f]
    %3716 = vrot.lane.b32.xlu0 %v3682, 32
    %v3717 = vpop.permute.xlu0 %3716
    %3718 = vrot.lane.b32.xlu0 %v3683, 32
    %v3719 = vpop.permute.xlu0 %3718
    %3720 = vrot.lane.b32.xlu0 %v3684, 32
    %v3721 = vpop.permute.xlu0 %3720
    %3722 = vrot.lane.b32.xlu0 %v3685, 32
    %v3723 = vpop.permute.xlu0 %3722
    %3724 = vrot.lane.b32.xlu0 %v3686, 32
    %v3725 = vpop.permute.xlu0 %3724
    %3726 = vrot.lane.b32.xlu0 %v3687, 32
    %v3727 = vpop.permute.xlu0 %3726
    %3728 = vrot.lane.b32.xlu0 %v3688, 32
    %v3729 = vpop.permute.xlu0 %3728
    %3730 = vrot.lane.b32.xlu0 %v3689, 32
    %v3731 = vpop.permute.xlu0 %3730
    %3732 = vrot.lane.b32.xlu0 %v3690, 32
    %v3733 = vpop.permute.xlu0 %3732
    %3734 = vrot.lane.b32.xlu0 %v3691, 32
    %v3735 = vpop.permute.xlu0 %3734
    %3736 = vrot.lane.b32.xlu0 %v3692, 32
    %v3737 = vpop.permute.xlu0 %3736
    %3738 = vrot.lane.b32.xlu0 %v3693, 32
    %v3739 = vpop.permute.xlu0 %3738
    %3740 = vrot.lane.b32.xlu0 %v3694, 32
    %v3741 = vpop.permute.xlu0 %3740
    %3742 = vrot.lane.b32.xlu0 %v3695, 32
    %v3743 = vpop.permute.xlu0 %3742
    %3744 = vrot.lane.b32.xlu0 %v3696, 32
    %v3745 = vpop.permute.xlu0 %3744
    %3746 = vrot.lane.b32.xlu0 %v3697, 32
    %v3747 = vpop.permute.xlu0 %3746
    %3748 = vrot.lane.b32.xlu0 %v3698, 32
    %v3749 = vpop.permute.xlu0 %3748
    %3767 = vst.msk [vmem:[#allocation3 + $0x8] sm:$0xff] %vm522, %v3717
    %3768 = vst.msk [vmem:[#allocation3 + $0x20] sm:$0xff] %vm522, %v3719
    %3769 = vst.msk [vmem:[#allocation3 + $0x38] sm:$0xff] %vm522, %v3721
    %3770 = vst.msk [vmem:[#allocation3 + $0x50] sm:$0xff] %vm522, %v3723
    %3771 = vst.msk [vmem:[#allocation3 + $0x68] sm:$0xff] %vm522, %v3725
    %3772 = vst.msk [vmem:[#allocation3 + $0x80] sm:$0xff] %vm522, %v3727
    %3773 = vst.msk [vmem:[#allocation3 + $0x98] sm:$0xff] %vm522, %v3729
    %3774 = vst.msk [vmem:[#allocation3 + $0xb0] sm:$0xff] %vm522, %v3731
    %3775 = vst.msk [vmem:[#allocation3 + $0xc8] sm:$0xff] %vm522, %v3733
    %3776 = vst.msk [vmem:[#allocation3 + $0xe0] sm:$0xff] %vm522, %v3735
    %3777 = vst.msk [vmem:[#allocation3 + $0xf8] sm:$0xff] %vm522, %v3737
    %3778 = vst.msk [vmem:[#allocation3 + $0x110] sm:$0xff] %vm522, %v3739
    %3779 = vst.msk [vmem:[#allocation3 + $0x128] sm:$0xff] %vm522, %v3741
    %3780 = vst.msk [vmem:[#allocation3 + $0x140] sm:$0xff] %vm522, %v3743
    %3781 = vst.msk [vmem:[#allocation3 + $0x158] sm:$0xff] %vm522, %v3745
    %3782 = vst.msk [vmem:[#allocation3 + $0x170] sm:$0xff] %vm522, %v3747
    %3783 = vst.msk [vmem:[#allocation3 + $0x188] sm:$0x3f] %vm3440, %v3749
    %v3784 = vld [vmem:[#allocation2 + $0x14] sm:$0xff]
    %v3785 = vld [vmem:[#allocation2 + $0x1c] sm:$0xff]
    %v3786 = vld [vmem:[#allocation2 + $0x24] sm:$0xff]
    %v3787 = vld [vmem:[#allocation2 + $0x2c] sm:$0xff]
    %v3788 = vld [vmem:[#allocation2 + $0x34] sm:$0xff]
    %v3789 = vld [vmem:[#allocation2 + $0x3c] sm:$0xff]
    %v3790 = vld [vmem:[#allocation2 + $0x44] sm:$0xff]
    %v3791 = vld [vmem:[#allocation2 + $0x4c] sm:$0xff]
    %v3792 = vld [vmem:[#allocation2 + $0x54] sm:$0xff]
    %v3793 = vld [vmem:[#allocation2 + $0x5c] sm:$0xff]
    %v3794 = vld [vmem:[#allocation2 + $0x64] sm:$0xff]
    %v3795 = vld [vmem:[#allocation2 + $0x6c] sm:$0xff]
    %v3796 = vld [vmem:[#allocation2 + $0x74] sm:$0xff]
    %v3797 = vld [vmem:[#allocation2 + $0x7c] sm:$0xff]
    %v3798 = vld [vmem:[#allocation2 + $0x84] sm:$0xff]
    %v3799 = vld [vmem:[#allocation2 + $0x8c] sm:$0xff]
    %v3800 = vld [vmem:[#allocation2 + $0x94] sm:$0x3f]
    %3818 = vrot.lane.b32.xlu0 %v3784, 64
    %v3819 = vpop.permute.xlu0 %3818
    %3820 = vrot.lane.b32.xlu0 %v3785, 64
    %v3821 = vpop.permute.xlu0 %3820
    %3822 = vrot.lane.b32.xlu0 %v3786, 64
    %v3823 = vpop.permute.xlu0 %3822
    %3824 = vrot.lane.b32.xlu0 %v3787, 64
    %v3825 = vpop.permute.xlu0 %3824
    %3826 = vrot.lane.b32.xlu0 %v3788, 64
    %v3827 = vpop.permute.xlu0 %3826
    %3828 = vrot.lane.b32.xlu0 %v3789, 64
    %v3829 = vpop.permute.xlu0 %3828
    %3830 = vrot.lane.b32.xlu0 %v3790, 64
    %v3831 = vpop.permute.xlu0 %3830
    %3832 = vrot.lane.b32.xlu0 %v3791, 64
    %v3833 = vpop.permute.xlu0 %3832
    %3834 = vrot.lane.b32.xlu0 %v3792, 64
    %v3835 = vpop.permute.xlu0 %3834
    %3836 = vrot.lane.b32.xlu0 %v3793, 64
    %v3837 = vpop.permute.xlu0 %3836
    %3838 = vrot.lane.b32.xlu0 %v3794, 64
    %v3839 = vpop.permute.xlu0 %3838
    %3840 = vrot.lane.b32.xlu0 %v3795, 64
    %v3841 = vpop.permute.xlu0 %3840
    %3842 = vrot.lane.b32.xlu0 %v3796, 64
    %v3843 = vpop.permute.xlu0 %3842
    %3844 = vrot.lane.b32.xlu0 %v3797, 64
    %v3845 = vpop.permute.xlu0 %3844
    %3846 = vrot.lane.b32.xlu0 %v3798, 64
    %v3847 = vpop.permute.xlu0 %3846
    %3848 = vrot.lane.b32.xlu0 %v3799, 64
    %v3849 = vpop.permute.xlu0 %3848
    %3850 = vrot.lane.b32.xlu0 %v3800, 64
    %v3851 = vpop.permute.xlu0 %3850
    %3869 = vst.msk [vmem:[#allocation3 + $0x8] sm:$0xff] %vm662, %v3819
    %3870 = vst.msk [vmem:[#allocation3 + $0x20] sm:$0xff] %vm662, %v3821
    %3871 = vst.msk [vmem:[#allocation3 + $0x38] sm:$0xff] %vm662, %v3823
    %3872 = vst.msk [vmem:[#allocation3 + $0x50] sm:$0xff] %vm662, %v3825
    %3873 = vst.msk [vmem:[#allocation3 + $0x68] sm:$0xff] %vm662, %v3827
    %3874 = vst.msk [vmem:[#allocation3 + $0x80] sm:$0xff] %vm662, %v3829
    %3875 = vst.msk [vmem:[#allocation3 + $0x98] sm:$0xff] %vm662, %v3831
    %3876 = vst.msk [vmem:[#allocation3 + $0xb0] sm:$0xff] %vm662, %v3833
    %3877 = vst.msk [vmem:[#allocation3 + $0xc8] sm:$0xff] %vm662, %v3835
    %3878 = vst.msk [vmem:[#allocation3 + $0xe0] sm:$0xff] %vm662, %v3837
    %3879 = vst.msk [vmem:[#allocation3 + $0xf8] sm:$0xff] %vm662, %v3839
    %3880 = vst.msk [vmem:[#allocation3 + $0x110] sm:$0xff] %vm662, %v3841
    %3881 = vst.msk [vmem:[#allocation3 + $0x128] sm:$0xff] %vm662, %v3843
    %3882 = vst.msk [vmem:[#allocation3 + $0x140] sm:$0xff] %vm662, %v3845
    %3883 = vst.msk [vmem:[#allocation3 + $0x158] sm:$0xff] %vm662, %v3847
    %3884 = vst.msk [vmem:[#allocation3 + $0x170] sm:$0xff] %vm662, %v3849
    %3885 = vst.msk [vmem:[#allocation3 + $0x188] sm:$0x3f] %vm3543, %v3851
    %v3886 = vld [vmem:[#allocation2 + $0x15] sm:$0xff]
    %v3887 = vld [vmem:[#allocation2 + $0x1d] sm:$0xff]
    %v3888 = vld [vmem:[#allocation2 + $0x25] sm:$0xff]
    %v3889 = vld [vmem:[#allocation2 + $0x2d] sm:$0xff]
    %v3890 = vld [vmem:[#allocation2 + $0x35] sm:$0xff]
    %v3891 = vld [vmem:[#allocation2 + $0x3d] sm:$0xff]
    %v3892 = vld [vmem:[#allocation2 + $0x45] sm:$0xff]
    %v3893 = vld [vmem:[#allocation2 + $0x4d] sm:$0xff]
    %v3894 = vld [vmem:[#allocation2 + $0x55] sm:$0xff]
    %v3895 = vld [vmem:[#allocation2 + $0x5d] sm:$0xff]
    %v3896 = vld [vmem:[#allocation2 + $0x65] sm:$0xff]
    %v3897 = vld [vmem:[#allocation2 + $0x6d] sm:$0xff]
    %v3898 = vld [vmem:[#allocation2 + $0x75] sm:$0xff]
    %v3899 = vld [vmem:[#allocation2 + $0x7d] sm:$0xff]
    %v3900 = vld [vmem:[#allocation2 + $0x85] sm:$0xff]
    %v3901 = vld [vmem:[#allocation2 + $0x8d] sm:$0xff]
    %v3902 = vld [vmem:[#allocation2 + $0x95] sm:$0x3f]
    %3920 = vrot.lane.b32.xlu0 %v3886, 96
    %v3921 = vpop.permute.xlu0 %3920
    %3922 = vrot.lane.b32.xlu0 %v3887, 96
    %v3923 = vpop.permute.xlu0 %3922
    %3924 = vrot.lane.b32.xlu0 %v3888, 96
    %v3925 = vpop.permute.xlu0 %3924
    %3926 = vrot.lane.b32.xlu0 %v3889, 96
    %v3927 = vpop.permute.xlu0 %3926
    %3928 = vrot.lane.b32.xlu0 %v3890, 96
    %v3929 = vpop.permute.xlu0 %3928
    %3930 = vrot.lane.b32.xlu0 %v3891, 96
    %v3931 = vpop.permute.xlu0 %3930
    %3932 = vrot.lane.b32.xlu0 %v3892, 96
    %v3933 = vpop.permute.xlu0 %3932
    %3934 = vrot.lane.b32.xlu0 %v3893, 96
    %v3935 = vpop.permute.xlu0 %3934
    %3936 = vrot.lane.b32.xlu0 %v3894, 96
    %v3937 = vpop.permute.xlu0 %3936
    %3938 = vrot.lane.b32.xlu0 %v3895, 96
    %v3939 = vpop.permute.xlu0 %3938
    %3940 = vrot.lane.b32.xlu0 %v3896, 96
    %v3941 = vpop.permute.xlu0 %3940
    %3942 = vrot.lane.b32.xlu0 %v3897, 96
    %v3943 = vpop.permute.xlu0 %3942
    %3944 = vrot.lane.b32.xlu0 %v3898, 96
    %v3945 = vpop.permute.xlu0 %3944
    %3946 = vrot.lane.b32.xlu0 %v3899, 96
    %v3947 = vpop.permute.xlu0 %3946
    %3948 = vrot.lane.b32.xlu0 %v3900, 96
    %v3949 = vpop.permute.xlu0 %3948
    %3950 = vrot.lane.b32.xlu0 %v3901, 96
    %v3951 = vpop.permute.xlu0 %3950
    %3952 = vrot.lane.b32.xlu0 %v3902, 96
    %v3953 = vpop.permute.xlu0 %3952
    %3971 = vst.msk [vmem:[#allocation3 + $0x8] sm:$0xff] %vm802, %v3921
    %3972 = vst.msk [vmem:[#allocation3 + $0x20] sm:$0xff] %vm802, %v3923
    %3973 = vst.msk [vmem:[#allocation3 + $0x38] sm:$0xff] %vm802, %v3925
    %3974 = vst.msk [vmem:[#allocation3 + $0x50] sm:$0xff] %vm802, %v3927
    %3975 = vst.msk [vmem:[#allocation3 + $0x68] sm:$0xff] %vm802, %v3929
    %3976 = vst.msk [vmem:[#allocation3 + $0x80] sm:$0xff] %vm802, %v3931
    %3977 = vst.msk [vmem:[#allocation3 + $0x98] sm:$0xff] %vm802, %v3933
    %3978 = vst.msk [vmem:[#allocation3 + $0xb0] sm:$0xff] %vm802, %v3935
    %3979 = vst.msk [vmem:[#allocation3 + $0xc8] sm:$0xff] %vm802, %v3937
    %3980 = vst.msk [vmem:[#allocation3 + $0xe0] sm:$0xff] %vm802, %v3939
    %3981 = vst.msk [vmem:[#allocation3 + $0xf8] sm:$0xff] %vm802, %v3941
    %3982 = vst.msk [vmem:[#allocation3 + $0x110] sm:$0xff] %vm802, %v3943
    %3983 = vst.msk [vmem:[#allocation3 + $0x128] sm:$0xff] %vm802, %v3945
    %3984 = vst.msk [vmem:[#allocation3 + $0x140] sm:$0xff] %vm802, %v3947
    %3985 = vst.msk [vmem:[#allocation3 + $0x158] sm:$0xff] %vm802, %v3949
    %3986 = vst.msk [vmem:[#allocation3 + $0x170] sm:$0xff] %vm802, %v3951
    %3987 = vst.msk [vmem:[#allocation3 + $0x188] sm:$0x3f] %vm3646, %v3953
    %v3988 = vld [vmem:[#allocation2 + $0x16] sm:$0xff]
    %v3989 = vld [vmem:[#allocation2 + $0x1e] sm:$0xff]
    %v3990 = vld [vmem:[#allocation2 + $0x26] sm:$0xff]
    %v3991 = vld [vmem:[#allocation2 + $0x2e] sm:$0xff]
    %v3992 = vld [vmem:[#allocation2 + $0x36] sm:$0xff]
    %v3993 = vld [vmem:[#allocation2 + $0x3e] sm:$0xff]
    %v3994 = vld [vmem:[#allocation2 + $0x46] sm:$0xff]
    %v3995 = vld [vmem:[#allocation2 + $0x4e] sm:$0xff]
    %v3996 = vld [vmem:[#allocation2 + $0x56] sm:$0xff]
    %v3997 = vld [vmem:[#allocation2 + $0x5e] sm:$0xff]
    %v3998 = vld [vmem:[#allocation2 + $0x66] sm:$0xff]
    %v3999 = vld [vmem:[#allocation2 + $0x6e] sm:$0xff]
    %v4000 = vld [vmem:[#allocation2 + $0x76] sm:$0xff]
    %v4001 = vld [vmem:[#allocation2 + $0x7e] sm:$0xff]
    %v4002 = vld [vmem:[#allocation2 + $0x86] sm:$0xff]
    %v4003 = vld [vmem:[#allocation2 + $0x8e] sm:$0xff]
    %v4004 = vld [vmem:[#allocation2 + $0x96] sm:$0x3f]
    %4005 = vst.msk [vmem:[#allocation3 + $0x10] sm:$0xff] %vm334, %v3988
    %4006 = vst.msk [vmem:[#allocation3 + $0x28] sm:$0xff] %vm334, %v3989
    %4007 = vst.msk [vmem:[#allocation3 + $0x40] sm:$0xff] %vm334, %v3990
    %4008 = vst.msk [vmem:[#allocation3 + $0x58] sm:$0xff] %vm334, %v3991
    %4009 = vst.msk [vmem:[#allocation3 + $0x70] sm:$0xff] %vm334, %v3992
    %4010 = vst.msk [vmem:[#allocation3 + $0x88] sm:$0xff] %vm334, %v3993
    %4011 = vst.msk [vmem:[#allocation3 + $0xa0] sm:$0xff] %vm334, %v3994
    %4012 = vst.msk [vmem:[#allocation3 + $0xb8] sm:$0xff] %vm334, %v3995
    %4013 = vst.msk [vmem:[#allocation3 + $0xd0] sm:$0xff] %vm334, %v3996
    %4014 = vst.msk [vmem:[#allocation3 + $0xe8] sm:$0xff] %vm334, %v3997
    %4015 = vst.msk [vmem:[#allocation3 + $0x100] sm:$0xff] %vm334, %v3998
    %4016 = vst.msk [vmem:[#allocation3 + $0x118] sm:$0xff] %vm334, %v3999
    %4017 = vst.msk [vmem:[#allocation3 + $0x130] sm:$0xff] %vm334, %v4000
    %4018 = vst.msk [vmem:[#allocation3 + $0x148] sm:$0xff] %vm334, %v4001
    %4019 = vst.msk [vmem:[#allocation3 + $0x160] sm:$0xff] %vm334, %v4002
    %4020 = vst.msk [vmem:[#allocation3 + $0x178] sm:$0xff] %vm334, %v4003
    %4021 = vst.msk [vmem:[#allocation3 + $0x190] sm:$0x3f] %vm3337, %v4004
    %v4022 = vld [vmem:[#allocation3] sm:$0xff]
    %v4023 = vld [vmem:[#allocation3 + $0x8] sm:$0xff]
    %v4024 = vld [vmem:[#allocation3 + $0x10] sm:$0xff]
    %v4025 = vld [vmem:[#allocation3 + $0x18] sm:$0xff]
    %v4026 = vld [vmem:[#allocation3 + $0x20] sm:$0xff]
    %v4027 = vld [vmem:[#allocation3 + $0x28] sm:$0xff]
    %v4028 = vld [vmem:[#allocation3 + $0x30] sm:$0xff]
    %v4029 = vld [vmem:[#allocation3 + $0x38] sm:$0xff]
    %v4030 = vld [vmem:[#allocation3 + $0x40] sm:$0xff]
    %v4031 = vld [vmem:[#allocation3 + $0x48] sm:$0xff]
    %v4032 = vld [vmem:[#allocation3 + $0x50] sm:$0xff]
    %v4033 = vld [vmem:[#allocation3 + $0x58] sm:$0xff]
    %v4034 = vld [vmem:[#allocation3 + $0x60] sm:$0xff]
    %v4035 = vld [vmem:[#allocation3 + $0x68] sm:$0xff]
    %v4036 = vld [vmem:[#allocation3 + $0x70] sm:$0xff]
    %v4037 = vld [vmem:[#allocation3 + $0x78] sm:$0xff]
    %v4038 = vld [vmem:[#allocation3 + $0x80] sm:$0xff]
    %v4039 = vld [vmem:[#allocation3 + $0x88] sm:$0xff]
    %v4040 = vld [vmem:[#allocation3 + $0x90] sm:$0xff]
    %v4041 = vld [vmem:[#allocation3 + $0x98] sm:$0xff]
    %v4042 = vld [vmem:[#allocation3 + $0xa0] sm:$0xff]
    %v4043 = vld [vmem:[#allocation3 + $0xa8] sm:$0xff]
    %v4044 = vld [vmem:[#allocation3 + $0xb0] sm:$0xff]
    %v4045 = vld [vmem:[#allocation3 + $0xb8] sm:$0xff]
    %v4046 = vld [vmem:[#allocation3 + $0xc0] sm:$0xff]
    %v4047 = vld [vmem:[#allocation3 + $0xc8] sm:$0xff]
    %v4048 = vld [vmem:[#allocation3 + $0xd0] sm:$0xff]
    %v4049 = vld [vmem:[#allocation3 + $0xd8] sm:$0xff]
    %v4050 = vld [vmem:[#allocation3 + $0xe0] sm:$0xff]
    %v4051 = vld [vmem:[#allocation3 + $0xe8] sm:$0xff]
    %v4052 = vld [vmem:[#allocation3 + $0xf0] sm:$0xff]
    %v4053 = vld [vmem:[#allocation3 + $0xf8] sm:$0xff]
    %v4054 = vld [vmem:[#allocation3 + $0x100] sm:$0xff]
    %v4055 = vld [vmem:[#allocation3 + $0x108] sm:$0xff]
    %v4056 = vld [vmem:[#allocation3 + $0x110] sm:$0xff]
    %v4057 = vld [vmem:[#allocation3 + $0x118] sm:$0xff]
    %v4058 = vld [vmem:[#allocation3 + $0x120] sm:$0xff]
    %v4059 = vld [vmem:[#allocation3 + $0x128] sm:$0xff]
    %v4060 = vld [vmem:[#allocation3 + $0x130] sm:$0xff]
    %v4061 = vld [vmem:[#allocation3 + $0x138] sm:$0xff]
    %v4062 = vld [vmem:[#allocation3 + $0x140] sm:$0xff]
    %v4063 = vld [vmem:[#allocation3 + $0x148] sm:$0xff]
    %v4064 = vld [vmem:[#allocation3 + $0x150] sm:$0xff]
    %v4065 = vld [vmem:[#allocation3 + $0x158] sm:$0xff]
    %v4066 = vld [vmem:[#allocation3 + $0x160] sm:$0xff]
    %v4067 = vld [vmem:[#allocation3 + $0x168] sm:$0xff]
    %v4068 = vld [vmem:[#allocation3 + $0x170] sm:$0xff]
    %v4069 = vld [vmem:[#allocation3 + $0x178] sm:$0xff]
    %v4070 = vld [vmem:[#allocation3 + $0x180] sm:$0x3f]
    %v4071 = vld [vmem:[#allocation3 + $0x188] sm:$0x3f]
    %v4072 = vld [vmem:[#allocation3 + $0x190] sm:$0x3f]
    %v4073 = vpack.c.bf16 %v4025, %v4022
    %v4074 = vpack.c.bf16 %v4026, %v4023
    %v4075 = vpack.c.bf16 %v4027, %v4024
    %v4076 = vpack.c.bf16 %v4031, %v4028
    %v4077 = vpack.c.bf16 %v4032, %v4029
    %v4078 = vpack.c.bf16 %v4033, %v4030
    %v4079 = vpack.c.bf16 %v4037, %v4034
    %v4080 = vpack.c.bf16 %v4038, %v4035
    %v4081 = vpack.c.bf16 %v4039, %v4036
    %v4082 = vpack.c.bf16 %v4043, %v4040
    %v4083 = vpack.c.bf16 %v4044, %v4041
    %v4084 = vpack.c.bf16 %v4045, %v4042
    %v4085 = vpack.c.bf16 %v4049, %v4046
    %v4086 = vpack.c.bf16 %v4050, %v4047
    %v4087 = vpack.c.bf16 %v4051, %v4048
    %v4088 = vpack.c.bf16 %v4055, %v4052
    %v4089 = vpack.c.bf16 %v4056, %v4053
    %v4090 = vpack.c.bf16 %v4057, %v4054
    %v4091 = vpack.c.bf16 %v4061, %v4058
    %v4092 = vpack.c.bf16 %v4062, %v4059
    %v4093 = vpack.c.bf16 %v4063, %v4060
    %v4094 = vpack.c.bf16 %v4067, %v4064
    %v4095 = vpack.c.bf16 %v4068, %v4065
    %v4096 = vpack.c.bf16 %v4069, %v4066
    %v4097 = vpack.c.bf16 %v4070, %v4070
    %v4098 = vpack.c.bf16 %v4071, %v4071
    %v4099 = vpack.c.bf16 %v4072, %v4072
    %v4100 = vld [vmem:[%s1 + $0x138] sm:$0xf]
    %v4101 = vld [vmem:[%s1 + $0x13c] sm:$0xf]
    %v4102 = vld [vmem:[%s1 + $0x140] sm:$0xf]
    %v4103 = vld [vmem:[%s1 + $0x144] sm:$0xf]
    %v4104 = vld [vmem:[%s1 + $0x148] sm:$0xf]
    %v4105 = vld [vmem:[%s1 + $0x14c] sm:$0xf]
    %v4106 = vld [vmem:[%s1 + $0x150] sm:$0xf]
    %v4107 = vld [vmem:[%s1 + $0x154] sm:$0xf]
    %v4108 = vld [vmem:[%s1 + $0x158] sm:$0xf]
    %v4109 = vld [vmem:[%s1 + $0x15c] sm:$0xf]
    %v4110 = vld [vmem:[%s1 + $0x160] sm:$0xf]
    %v4111 = vld [vmem:[%s1 + $0x164] sm:$0xf]
    %v4112 = vld [vmem:[%s1 + $0x168] sm:$0xf]
    %v4113 = vld [vmem:[%s1 + $0x16c] sm:$0xf]
    %v4114 = vld [vmem:[%s1 + $0x170] sm:$0xf]
    %v4115 = vld [vmem:[%s1 + $0x174] sm:$0xf]
    %v4116 = vld [vmem:[%s1 + $0x178] sm:$0xf]
    %v4117 = vld [vmem:[%s1 + $0x17c] sm:$0xf]
    %v4118 = vld [vmem:[%s1 + $0x180] sm:$0xf]
    %v4119 = vld [vmem:[%s1 + $0x184] sm:$0xf]
    %v4120 = vld [vmem:[%s1 + $0x188] sm:$0xf]
    %v4121 = vld [vmem:[%s1 + $0x18c] sm:$0xf]
    %v4122 = vld [vmem:[%s1 + $0x190] sm:$0xf]
    %v4123 = vld [vmem:[%s1 + $0x194] sm:$0xf]
    %v4124 = vld [vmem:[%s1 + $0x198] sm:$0xf]
    %v4125 = vld [vmem:[%s1 + $0x19c] sm:$0xf]
    %v4126 = vld [vmem:[%s1 + $0x1a0] sm:$0xf]
    %v4127 = vld [vmem:[%s1 + $0x1a4] sm:$0xf]
    %v4128 = vld [vmem:[%s1 + $0x1a8] sm:$0xf]
    %v4129 = vld [vmem:[%s1 + $0x1ac] sm:$0xf]
    %v4130 = vld [vmem:[%s1 + $0x1b0] sm:$0xf]
    %v4131 = vld [vmem:[%s1 + $0x1b4] sm:$0xf]
    %v4132 = vld [vmem:[%s1 + $0x1b8] sm:$0xf]
    %v4133 = vld [vmem:[%s1 + $0x1bc] sm:$0xf]
    %v4134 = vld [vmem:[%s1 + $0x1c0] sm:$0xf]
    %v4135 = vld [vmem:[%s1 + $0x1c4] sm:$0xf]
    %v4136 = vld [vmem:[%s2 + $0x3] sm:$0x1]
    %v4137 = vlaneseq
    %v4138 = vshrl.u32 %v4137, 7
    %v4139 = vsub.s32 0, %v4138
    %v4140 = vrot.slane %v4136, %v4139
    %v4177 = vunpack.c.l.b16 %v4100
    %v4178 = vunpack.c.l.b16 %v4101
    %v4179 = vunpack.c.l.b16 %v4102
    %v4180 = vunpack.c.l.b16 %v4103
    %v4181 = vunpack.c.l.b16 %v4104
    %v4182 = vunpack.c.l.b16 %v4105
    %v4183 = vunpack.c.l.b16 %v4106
    %v4184 = vunpack.c.l.b16 %v4107
    %v4185 = vunpack.c.l.b16 %v4108
    %v4186 = vunpack.c.l.b16 %v4109
    %v4187 = vunpack.c.l.b16 %v4110
    %v4188 = vunpack.c.l.b16 %v4111
    %v4189 = vunpack.c.l.b16 %v4112
    %v4190 = vunpack.c.l.b16 %v4113
    %v4191 = vunpack.c.l.b16 %v4114
    %v4192 = vunpack.c.l.b16 %v4115
    %v4193 = vunpack.c.l.b16 %v4116
    %v4194 = vunpack.c.l.b16 %v4117
    %v4195 = vunpack.c.l.b16 %v4118
    %v4196 = vunpack.c.l.b16 %v4119
    %v4197 = vunpack.c.l.b16 %v4120
    %v4198 = vunpack.c.l.b16 %v4121
    %v4199 = vunpack.c.l.b16 %v4122
    %v4200 = vunpack.c.l.b16 %v4123
    %v4201 = vunpack.c.l.b16 %v4124
    %v4202 = vunpack.c.l.b16 %v4125
    %v4203 = vunpack.c.l.b16 %v4126
    %v4204 = vunpack.c.l.b16 %v4127
    %v4205 = vunpack.c.l.b16 %v4128
    %v4206 = vunpack.c.l.b16 %v4129
    %v4207 = vunpack.c.l.b16 %v4130
    %v4208 = vunpack.c.l.b16 %v4131
    %v4209 = vunpack.c.l.b16 %v4132
    %v4210 = vunpack.c.l.b16 %v4133
    %v4211 = vunpack.c.l.b16 %v4134
    %v4212 = vunpack.c.l.b16 %v4135
    %v4213 = vpack.c.b16 %v4178, %v4177
    %v4214 = vpack.c.b16 %v4180, %v4179
    %v4215 = vpack.c.b16 %v4182, %v4181
    %v4216 = vpack.c.b16 %v4184, %v4183
    %v4217 = vpack.c.b16 %v4186, %v4185
    %v4218 = vpack.c.b16 %v4188, %v4187
    %v4219 = vpack.c.b16 %v4190, %v4189
    %v4220 = vpack.c.b16 %v4192, %v4191
    %v4221 = vpack.c.b16 %v4194, %v4193
    %v4222 = vpack.c.b16 %v4196, %v4195
    %v4223 = vpack.c.b16 %v4198, %v4197
    %v4224 = vpack.c.b16 %v4200, %v4199
    %v4225 = vpack.c.b16 %v4202, %v4201
    %v4226 = vpack.c.b16 %v4204, %v4203
    %v4227 = vpack.c.b16 %v4206, %v4205
    %v4228 = vpack.c.b16 %v4208, %v4207
    %v4229 = vpack.c.b16 %v4210, %v4209
    %v4230 = vpack.c.b16 %v4212, %v4211
    %v4250 = vsel %vm334, %v4075, 0
    %v4253 = vsel %vm334, %v4078, 0
    %v4256 = vsel %vm334, %v4081, 0
    %v4259 = vsel %vm334, %v4084, 0
    %v4262 = vsel %vm334, %v4087, 0
    %v4265 = vsel %vm334, %v4090, 0
    %v4268 = vsel %vm334, %v4093, 0
    %v4271 = vsel %vm334, %v4096, 0
    %v4274 = vsel %vm334, %v4099, 0
    %4276 = vmatprep.subr.bf16.mxu0 0
    %4277 = vmatpush1.bf16.msra.mxu0 %v4213
    %4278 = vmatprep.subr.bf16.mxu0 0
    %4279 = vmatpush1.bf16.msra.mxu0 %v4214
    %4280 = vmatprep.subr.bf16.mxu0 0
    %4281 = vmatpush1.bf16.msra.mxu0 %v4215
    %4282 = vmatprep.subr.bf16.mxu0 0
    %4283 = vmatpush1.bf16.msra.mxu0 %v4216
    %4284 = vmatprep.subr.bf16.mxu0 0
    %4285 = vmatpush1.bf16.msra.mxu0 %v4217
    %4286 = vmatprep.subr.bf16.mxu0 0
    %4287 = vmatpush1.bf16.msra.mxu0 %v4218
    %4288 = vmatprep.subr.bf16.mxu0 0
    %4289 = vmatpush1.bf16.msra.mxu0 %v4219
    %4290 = vmatprep.subr.bf16.mxu0 0
    %4291 = vmatpush1.bf16.msra.mxu0 %v4220
    %4292 = vmatprep.subr.bf16.mxu0 0
    %4293 = vmatpush1.bf16.msra.mxu0 %v4221
    %4294 = vmatprep.subr.bf16.mxu0 0
    %4295 = vmatpush1.bf16.msra.mxu0 %v4222
    %4296 = vmatprep.subr.bf16.mxu0 0
    %4297 = vmatpush1.bf16.msra.mxu0 %v4223
    %4298 = vmatprep.subr.bf16.mxu0 0
    %4299 = vmatpush1.bf16.msra.mxu0 %v4224
    %4300 = vmatprep.subr.bf16.mxu0 0
    %4301 = vmatpush1.bf16.msra.mxu0 %v4225
    %4302 = vmatprep.subr.bf16.mxu0 0
    %4303 = vmatpush1.bf16.msra.mxu0 %v4226
    %4304 = vmatprep.subr.bf16.mxu0 0
    %4305 = vmatpush1.bf16.msra.mxu0 %v4227
    %4306 = vmatprep.subr.bf16.mxu0 0
    %4307 = vmatpush1.bf16.msra.mxu0 %v4228
    %4308 = vmatprep.mubr.bf16.mxu0 %v4074
    %4309 = vmatmul.mubr.bf16.gmra.mrb[0].mxu0 %v4073
    %v4310 = vpop.f32.mrb[0].mxu0
    %v4311 = vadd.f32 %v4140, %v4310
    %v4312 = vpop.f32.mrb[0].mxu0
    %v4313 = vpop.f32.mrb[0].mxu0
    %v4314 = vadd.f32 %v4140, %v4313
    %v4315 = vpop.f32.mrb[0].mxu0
    %4316 = vmatprep.mubr.bf16.mxu0 %v4077
    %4317 = vmatmul.mubr.bf16.gmra.mrb[0].mxu0 %v4076
    %v4318 = vpop.f32.mrb[0].mxu0
    %v4319 = vadd.f32 %v4140, %v4318
    %v4320 = vpop.f32.mrb[0].mxu0
    %v4321 = vpop.f32.mrb[0].mxu0
    %v4322 = vadd.f32 %v4140, %v4321
    %v4323 = vpop.f32.mrb[0].mxu0
    %4324 = vmatprep.mubr.bf16.mxu0 %v4080
    %4325 = vmatmul.mubr.bf16.gmra.mrb[0].mxu0 %v4079
    %v4326 = vpop.f32.mrb[0].mxu0
    %v4327 = vadd.f32 %v4140, %v4326
    %v4328 = vpop.f32.mrb[0].mxu0
    %v4329 = vpop.f32.mrb[0].mxu0
    %v4330 = vpop.f32.mrb[0].mxu0
    %4331 = vmatprep.mubr.bf16.mxu0 %v4083
    %4332 = vmatmul.mubr.bf16.gmra.mrb[0].mxu0 %v4082
    %v4333 = vpop.f32.mrb[0].mxu0
    %v4334 = vpop.f32.mrb[0].mxu0
    %v4335 = vpop.f32.mrb[0].mxu0
    %v4336 = vpop.f32.mrb[0].mxu0
    %4337 = vmatprep.mubr.bf16.mxu0 %v4086
    %4338 = vmatmul.mubr.bf16.gmra.mrb[0].mxu0 %v4085
    %v4339 = vpop.f32.mrb[0].mxu0
    %v4340 = vpop.f32.mrb[0].mxu0
    %v4341 = vpop.f32.mrb[0].mxu0
    %v4342 = vpop.f32.mrb[0].mxu0
    %4343 = vmatprep.mubr.bf16.mxu0 %v4089
    %4344 = vmatmul.mubr.bf16.gmra.mrb[0].mxu0 %v4088
    %v4345 = vpop.f32.mrb[0].mxu0
    %v4346 = vpop.f32.mrb[0].mxu0
    %v4347 = vpop.f32.mrb[0].mxu0
    %v4348 = vpop.f32.mrb[0].mxu0
    %4349 = vmatprep.mubr.bf16.mxu0 %v4092
    %4350 = vmatmul.mubr.bf16.gmra.mrb[0].mxu0 %v4091
    %v4351 = vpop.f32.mrb[0].mxu0
    %v4352 = vadd.f32 %v4140, %v4351
    %v4353 = vpop.f32.mrb[0].mxu0
    %v4354 = vpop.f32.mrb[0].mxu0
    %v4355 = vadd.f32 %v4140, %v4354
    %v4356 = vpop.f32.mrb[0].mxu0
    %4357 = vmatprep.mubr.bf16.mxu0 %v4095
    %4358 = vmatmul.mubr.bf16.gmra.mrb[0].mxu0 %v4094
    %v4359 = vpop.f32.mrb[0].mxu0
    %v4360 = vadd.f32 %v4140, %v4359
    %v4361 = vpop.f32.mrb[0].mxu0
    %v4362 = vpop.f32.mrb[0].mxu0
    %v4363 = vadd.f32 %v4140, %v4362
    %v4364 = vpop.f32.mrb[0].mxu0
    %4365 = vmatprep.mubr.bf16.mxu0 %v4098
    %4366 = vmatmul.mubr.bf16.gmra.mrb[0].mxu0 %v4097
    %v4367 = vpop.f32.mrb[0].mxu0
    %v4368 = vadd.f32 %v4140, %v4367
    %v4369 = vpop.f32.mrb[0].mxu0
    %v4370 = vpop.f32.mrb[0].mxu0
    %v4371 = vpop.f32.mrb[0].mxu0
    %4372 = vdwg.mxu0
    %4373 = vmatprep.subr.bf16.mxu0 0
    %4374 = vmatpush1.bf16.msra.mxu0 %v4229
    %4375 = vmatprep.subr.bf16.mxu0 0
    %4376 = vmatpush1.bf16.msra.mxu0 %v4230
    %4377 = vmatprep.subr.bf16.mxu0 0
    %4378 = vmatpush1.bf16.msra.mxu0 0
    %4379 = vmatprep.subr.bf16.mxu0 0
    %4380 = vmatpush1.bf16.msra.mxu0 0
    %4381 = vmatprep.subr.bf16.mxu0 0
    %4382 = vmatpush1.bf16.msra.mxu0 0
    %4383 = vmatprep.subr.bf16.mxu0 0
    %4384 = vmatpush1.bf16.msra.mxu0 0
    %4385 = vmatprep.subr.bf16.mxu0 0
    %4386 = vmatpush1.bf16.msra.mxu0 0
    %4387 = vmatprep.subr.bf16.mxu0 0
    %4388 = vmatpush1.bf16.msra.mxu0 0
    %4389 = vmatprep.subr.bf16.mxu0 0
    %4390 = vmatpush1.bf16.msra.mxu0 0
    %4391 = vmatprep.subr.bf16.mxu0 0
    %4392 = vmatpush1.bf16.msra.mxu0 0
    %4393 = vmatprep.subr.bf16.mxu0 0
    %4394 = vmatpush1.bf16.msra.mxu0 0
    %4395 = vmatprep.subr.bf16.mxu0 0
    %4396 = vmatpush1.bf16.msra.mxu0 0
    %4397 = vmatprep.subr.bf16.mxu0 0
    %4398 = vmatpush1.bf16.msra.mxu0 0
    %4399 = vmatprep.subr.bf16.mxu0 0
    %4400 = vmatpush1.bf16.msra.mxu0 0
    %4401 = vmatprep.subr.bf16.mxu0 0
    %4402 = vmatpush1.bf16.msra.mxu0 0
    %4403 = vmatprep.subr.bf16.mxu0 0
    %4404 = vmatpush1.bf16.msra.mxu0 0
    %4405 = vmatprep.mubr.bf16.mxu0 0
    %4406 = vmatmul.mubr.bf16.gmra.mrb[0].mxu0 %v4250
    %v4407 = vpop.f32.mrb[0].mxu0
    %v4408 = vadd.f32 %v4311, %v4407
    %v4409 = vpop.f32.mrb[0].mxu0
    %v4410 = vpop.f32.mrb[0].mxu0
    %v4411 = vadd.f32 %v4314, %v4410
    %v4412 = vpop.f32.mrb[0].mxu0
    %4413 = vmatprep.mubr.bf16.mxu0 0
    %4414 = vmatmul.mubr.bf16.gmra.mrb[0].mxu0 %v4253
    %v4415 = vpop.f32.mrb[0].mxu0
    %v4416 = vadd.f32 %v4319, %v4415
    %v4417 = vpop.f32.mrb[0].mxu0
    %v4418 = vpop.f32.mrb[0].mxu0
    %v4419 = vadd.f32 %v4322, %v4418
    %v4420 = vpop.f32.mrb[0].mxu0
    %4421 = vmatprep.mubr.bf16.mxu0 0
    %4422 = vmatmul.mubr.bf16.gmra.mrb[0].mxu0 %v4256
    %v4423 = vpop.f32.mrb[0].mxu0
    %v4424 = vadd.f32 %v4327, %v4423
    %v4425 = vpop.f32.mrb[0].mxu0
    %v4426 = vpop.f32.mrb[0].mxu0
    %v4427 = vpop.f32.mrb[0].mxu0
    %4428 = vmatprep.mubr.bf16.mxu0 0
    %4429 = vmatmul.mubr.bf16.gmra.mrb[0].mxu0 %v4259
    %v4430 = vpop.f32.mrb[0].mxu0
    %v4431 = vpop.f32.mrb[0].mxu0
    %v4432 = vpop.f32.mrb[0].mxu0
    %v4433 = vpop.f32.mrb[0].mxu0
    %4434 = vmatprep.mubr.bf16.mxu0 0
    %4435 = vmatmul.mubr.bf16.gmra.mrb[0].mxu0 %v4262
    %v4436 = vpop.f32.mrb[0].mxu0
    %v4437 = vpop.f32.mrb[0].mxu0
    %v4438 = vpop.f32.mrb[0].mxu0
    %v4439 = vpop.f32.mrb[0].mxu0
    %4440 = vmatprep.mubr.bf16.mxu0 0
    %4441 = vmatmul.mubr.bf16.gmra.mrb[0].mxu0 %v4265
    %v4442 = vpop.f32.mrb[0].mxu0
    %v4443 = vpop.f32.mrb[0].mxu0
    %v4444 = vpop.f32.mrb[0].mxu0
    %v4445 = vpop.f32.mrb[0].mxu0
    %4446 = vmatprep.mubr.bf16.mxu0 0
    %4447 = vmatmul.mubr.bf16.gmra.mrb[0].mxu0 %v4268
    %v4448 = vpop.f32.mrb[0].mxu0
    %v4449 = vadd.f32 %v4352, %v4448
    %v4450 = vpop.f32.mrb[0].mxu0
    %v4451 = vpop.f32.mrb[0].mxu0
    %v4452 = vadd.f32 %v4355, %v4451
    %v4453 = vpop.f32.mrb[0].mxu0
    %4454 = vmatprep.mubr.bf16.mxu0 0
    %4455 = vmatmul.mubr.bf16.gmra.mrb[0].mxu0 %v4271
    %v4456 = vpop.f32.mrb[0].mxu0
    %v4457 = vadd.f32 %v4360, %v4456
    %v4458 = vpop.f32.mrb[0].mxu0
    %v4459 = vpop.f32.mrb[0].mxu0
    %v4460 = vadd.f32 %v4363, %v4459
    %v4461 = vpop.f32.mrb[0].mxu0
    %4462 = vmatprep.mubr.bf16.mxu0 0
    %4463 = vmatmul.mubr.bf16.gmra.mrb[0].mxu0 %v4274
    %v4464 = vpop.f32.mrb[0].mxu0
    %v4465 = vadd.f32 %v4368, %v4464
    %v4466 = vpop.f32.mrb[0].mxu0
    %v4467 = vpop.f32.mrb[0].mxu0
    %v4468 = vpop.f32.mrb[0].mxu0
    %4469 = vdwg.mxu0
    %v4470 = vmax.f32 %v4408, 0.0
    %v4471 = vmax.f32 %v4411, 0.0
    %v4472 = vmax.f32 %v4416, 0.0
    %v4473 = vmax.f32 %v4419, 0.0
    %v4474 = vmax.f32 %v4424, 0.0
    %v4475 = vmax.f32 %v4449, 0.0
    %v4476 = vmax.f32 %v4452, 0.0
    %v4477 = vmax.f32 %v4457, 0.0
    %v4478 = vmax.f32 %v4460, 0.0
    %v4479 = vmax.f32 %v4465, 0.0
    %4480 = vst [vmem:[#allocation4] sm:$0xff] 0.0
    %4481 = vst [vmem:[#allocation4 + $0x8] sm:$0xff] 0.0
    %4482 = vst [vmem:[#allocation4 + $0x10] sm:$0xff] 0.0
    %4483 = vst [vmem:[#allocation4 + $0x18] sm:$0xff] 0.0
    %4484 = vst.msk [vmem:[#allocation4] sm:$0xf] %vm1964, %v4470
    %vm4485 = vcmask 259074
    %4486 = vst.msk [vmem:[#allocation4 + $0x2] sm:$0x3c] %vm4485, %v4471
    %vm4487 = vcmask 261124
    %4488 = vst.msk [vmem:[#allocation4 + $0x4] sm:$0xf0] %vm4487, %v4472
    %vm4489 = vcmask 261126
    %4490 = vst.msk [vmem:[#allocation4 + $0x6] sm:$0xc0] %vm4489, %v4473
    %4491 = vst.msk [vmem:[#allocation4 + $0xe] sm:$0x3] %vm405, %v4474
    %4492 = vst.msk [vmem:[#allocation4 + $0xc] sm:$0xf0] %vm4487, %v4475
    %4493 = vst.msk [vmem:[#allocation4 + $0xe] sm:$0xc0] %vm4489, %v4476
    %4494 = vst.msk [vmem:[#allocation4 + $0x16] sm:$0x3] %vm405, %v4477
    %4495 = vst.msk [vmem:[#allocation4 + $0x18] sm:$0xf] %vm1964, %v4478
    %4496 = vst.msk [vmem:[#allocation4 + $0x1a] sm:$0x3c] %vm4485, %v4479
    %v4497 = vld [vmem:[#allocation4] sm:$0xff]
    %v4498 = vld [vmem:[#allocation4 + $0x8] sm:$0xff]
    %v4499 = vld [vmem:[#allocation4 + $0x10] sm:$0xff]
    %v4500 = vld [vmem:[#allocation4 + $0x18] sm:$0xff]
    %4501 = vxpose.xlu0.b32.start [1/16] %v4497, 128
    %4502 = vxpose.xlu0.b32.cont [2/16] %v4498, 128
    %4503 = vxpose.xlu0.b32.cont [3/16] %v4499, 128
    %4504 = vxpose.xlu0.b32.cont [4/16] %v4500, 128
    %4505 = vxpose.xlu0.b32.cont [5/16] 0.0, 128
    %4506 = vxpose.xlu0.b32.cont [6/16] 0.0, 128
    %4507 = vxpose.xlu0.b32.cont [7/16] 0.0, 128
    %4508 = vxpose.xlu0.b32.cont [8/16] 0.0, 128
    %4509 = vxpose.xlu0.b32.cont [9/16] 0.0, 128
    %4510 = vxpose.xlu0.b32.cont [10/16] 0.0, 128
    %4511 = vxpose.xlu0.b32.cont [11/16] 0.0, 128
    %4512 = vxpose.xlu0.b32.cont [12/16] 0.0, 128
    %4513 = vxpose.xlu0.b32.cont [13/16] 0.0, 128
    %4514 = vxpose.xlu0.b32.cont [14/16] 0.0, 128
    %4515 = vxpose.xlu0.b32.cont [15/16] 0.0, 128
    %4516 = vxpose.xlu0.b32.end [16/16] 0.0, 128
    %v4517 = vpop.trf.xlu0
    %v4518 = vpop.trf.xlu0
    %v4519 = vpop.trf.xlu0
    %v4520 = vpop.trf.xlu0
    %v4521 = vpop.trf.xlu0
    %v4522 = vpop.trf.xlu0
    %v4523 = vpop.trf.xlu0
    %v4524 = vpop.trf.xlu0
    %v4525 = vpop.trf.xlu0
    %v4526 = vpop.trf.xlu0
    %v4527 = vpop.trf.xlu0
    %v4528 = vpop.trf.xlu0
    %v4529 = vpop.trf.xlu0
    %v4530 = vpop.trf.xlu0
    %v4531 = vpop.trf.xlu0
    %v4532 = vpop.trf.xlu0
    %vm4533 = vcmask 122880
    %4534 = vst.msk [vmem:[#allocation5] sm:$0x1] %vm4533, %v4517
    %v4537 = vunpack.c.l.s4 1983009808
    %v4538 = vunpack.c.0.s8 %v4537
    %v4539 = vlaneseq
    %v4540 = vshrl.u32 %v4539, 7
    %v4541 = vsub.s32 %v4538, %v4540
    %v4542 = vrot.slane %v4517, %v4541
    %v4543 = vrot.slane %v4542, 7
    %v4544 = vrot.slane %v4543, 2
    %4545 = vrot.lane.b32.xlu0 %v4544, 16
    %v4546 = vpop.permute.xlu0 %4545
    %vm4548 = vcmask 254080
    %4549 = vst.msk [vmem:[#allocation5] sm:$0x1] %vm4548, %v4546
    %v4550 = vcombine.high %v4542, %v4542
    %4551 = vrot.lane.b32.xlu0 %v4550, 32
    %v4552 = vpop.permute.xlu0 %4551
    %vm4554 = vcmask 385280
    %4555 = vst.msk [vmem:[#allocation5] sm:$0x1] %vm4554, %v4552
    %v4556 = vrot.slane %v4550, 7
    %v4557 = vrot.slane %v4556, 2
    %4558 = vrot.lane.b32.xlu0 %v4557, 48
    %v4559 = vpop.permute.xlu0 %4558
    %vm4561 = vcmask 516480
    %4562 = vst.msk [vmem:[#allocation5] sm:$0x1] %vm4561, %v4559
    %v4563 = vcombine.high %v4517, %v4517
    %v4565 = vunpack.c.l.s4 1983009808
    %v4566 = vunpack.c.0.s8 %v4565
    %v4567 = vlaneseq
    %v4568 = vshrl.u32 %v4567, 7
    %v4569 = vsub.s32 %v4566, %v4568
    %v4570 = vrot.slane %v4563, %v4569
    %4571 = vrot.lane.b32.xlu0 %v4570, 64
    %v4572 = vpop.permute.xlu0 %4571
    %vm4574 = vcmask 647680
    %4575 = vst.msk [vmem:[#allocation5] sm:$0x1] %vm4574, %v4572
    %v4576 = vrot.slane %v4570, 7
    %v4577 = vrot.slane %v4576, 2
    %4578 = vrot.lane.b32.xlu0 %v4577, 80
    %v4579 = vpop.permute.xlu0 %4578
    %vm4581 = vcmask 778880
    %4582 = vst.msk [vmem:[#allocation5] sm:$0x1] %vm4581, %v4579
    %v4583 = vcombine.high %v4570, %v4570
    %4584 = vrot.lane.b32.xlu0 %v4583, 96
    %v4585 = vpop.permute.xlu0 %4584
    %vm4587 = vcmask 910080
    %4588 = vst.msk [vmem:[#allocation5] sm:$0x1] %vm4587, %v4585
    %v4589 = vrot.slane %v4583, 7
    %v4590 = vrot.slane %v4589, 2
    %4591 = vrot.lane.b32.xlu0 %v4590, 112
    %v4592 = vpop.permute.xlu0 %4591
    %vm4594 = vcmask 1041280
    %4595 = vst.msk [vmem:[#allocation5] sm:$0x1] %vm4594, %v4592
    %4596 = vst.msk [vmem:[#allocation5 + $0x2] sm:$0x1] %vm4533, %v4518
    %v4599 = vunpack.c.l.s4 1983009808
    %v4600 = vunpack.c.0.s8 %v4599
    %v4601 = vlaneseq
    %v4602 = vshrl.u32 %v4601, 7
    %v4603 = vsub.s32 %v4600, %v4602
    %v4604 = vrot.slane %v4518, %v4603
    %v4605 = vrot.slane %v4604, 7
    %v4606 = vrot.slane %v4605, 2
    %4607 = vrot.lane.b32.xlu0 %v4606, 16
    %v4608 = vpop.permute.xlu0 %4607
    %4610 = vst.msk [vmem:[#allocation5 + $0x2] sm:$0x1] %vm4548, %v4608
    %v4611 = vcombine.high %v4604, %v4604
    %4612 = vrot.lane.b32.xlu0 %v4611, 32
    %v4613 = vpop.permute.xlu0 %4612
    %4615 = vst.msk [vmem:[#allocation5 + $0x2] sm:$0x1] %vm4554, %v4613
    %v4616 = vrot.slane %v4611, 7
    %v4617 = vrot.slane %v4616, 2
    %4618 = vrot.lane.b32.xlu0 %v4617, 48
    %v4619 = vpop.permute.xlu0 %4618
    %4621 = vst.msk [vmem:[#allocation5 + $0x2] sm:$0x1] %vm4561, %v4619
    %v4622 = vcombine.high %v4518, %v4518
    %v4624 = vunpack.c.l.s4 1983009808
    %v4625 = vunpack.c.0.s8 %v4624
    %v4626 = vlaneseq
    %v4627 = vshrl.u32 %v4626, 7
    %v4628 = vsub.s32 %v4625, %v4627
    %v4629 = vrot.slane %v4622, %v4628
    %4630 = vrot.lane.b32.xlu0 %v4629, 64
    %v4631 = vpop.permute.xlu0 %4630
    %4633 = vst.msk [vmem:[#allocation5 + $0x2] sm:$0x1] %vm4574, %v4631
    %v4634 = vrot.slane %v4629, 7
    %v4635 = vrot.slane %v4634, 2
    %4636 = vrot.lane.b32.xlu0 %v4635, 80
    %v4637 = vpop.permute.xlu0 %4636
    %4639 = vst.msk [vmem:[#allocation5 + $0x2] sm:$0x1] %vm4581, %v4637
    %v4640 = vcombine.high %v4629, %v4629
    %4641 = vrot.lane.b32.xlu0 %v4640, 96
    %v4642 = vpop.permute.xlu0 %4641
    %4644 = vst.msk [vmem:[#allocation5 + $0x2] sm:$0x1] %vm4587, %v4642
    %v4645 = vrot.slane %v4640, 7
    %v4646 = vrot.slane %v4645, 2
    %4647 = vrot.lane.b32.xlu0 %v4646, 112
    %v4648 = vpop.permute.xlu0 %4647
    %4650 = vst.msk [vmem:[#allocation5 + $0x2] sm:$0x1] %vm4594, %v4648
    %4651 = vst.msk [vmem:[#allocation5 + $0x4] sm:$0x1] %vm4533, %v4519
    %v4654 = vunpack.c.l.s4 1983009808
    %v4655 = vunpack.c.0.s8 %v4654
    %v4656 = vlaneseq
    %v4657 = vshrl.u32 %v4656, 7
    %v4658 = vsub.s32 %v4655, %v4657
    %v4659 = vrot.slane %v4519, %v4658
    %v4660 = vrot.slane %v4659, 7
    %v4661 = vrot.slane %v4660, 2
    %4662 = vrot.lane.b32.xlu0 %v4661, 16
    %v4663 = vpop.permute.xlu0 %4662
    %4665 = vst.msk [vmem:[#allocation5 + $0x4] sm:$0x1] %vm4548, %v4663
    %v4666 = vcombine.high %v4659, %v4659
    %4667 = vrot.lane.b32.xlu0 %v4666, 32
    %v4668 = vpop.permute.xlu0 %4667
    %4670 = vst.msk [vmem:[#allocation5 + $0x4] sm:$0x1] %vm4554, %v4668
    %v4671 = vrot.slane %v4666, 7
    %v4672 = vrot.slane %v4671, 2
    %4673 = vrot.lane.b32.xlu0 %v4672, 48
    %v4674 = vpop.permute.xlu0 %4673
    %4676 = vst.msk [vmem:[#allocation5 + $0x4] sm:$0x1] %vm4561, %v4674
    %v4677 = vcombine.high %v4519, %v4519
    %v4679 = vunpack.c.l.s4 1983009808
    %v4680 = vunpack.c.0.s8 %v4679
    %v4681 = vlaneseq
    %v4682 = vshrl.u32 %v4681, 7
    %v4683 = vsub.s32 %v4680, %v4682
    %v4684 = vrot.slane %v4677, %v4683
    %4685 = vrot.lane.b32.xlu0 %v4684, 64
    %v4686 = vpop.permute.xlu0 %4685
    %4688 = vst.msk [vmem:[#allocation5 + $0x4] sm:$0x1] %vm4574, %v4686
    %v4689 = vrot.slane %v4684, 7
    %v4690 = vrot.slane %v4689, 2
    %4691 = vrot.lane.b32.xlu0 %v4690, 80
    %v4692 = vpop.permute.xlu0 %4691
    %4694 = vst.msk [vmem:[#allocation5 + $0x4] sm:$0x1] %vm4581, %v4692
    %v4695 = vcombine.high %v4684, %v4684
    %4696 = vrot.lane.b32.xlu0 %v4695, 96
    %v4697 = vpop.permute.xlu0 %4696
    %4699 = vst.msk [vmem:[#allocation5 + $0x4] sm:$0x1] %vm4587, %v4697
    %v4700 = vrot.slane %v4695, 7
    %v4701 = vrot.slane %v4700, 2
    %4702 = vrot.lane.b32.xlu0 %v4701, 112
    %v4703 = vpop.permute.xlu0 %4702
    %4705 = vst.msk [vmem:[#allocation5 + $0x4] sm:$0x1] %vm4594, %v4703
    %4706 = vst.msk [vmem:[#allocation5 + $0x6] sm:$0x1] %vm4533, %v4520
    %v4709 = vunpack.c.l.s4 1983009808
    %v4710 = vunpack.c.0.s8 %v4709
    %v4711 = vlaneseq
    %v4712 = vshrl.u32 %v4711, 7
    %v4713 = vsub.s32 %v4710, %v4712
    %v4714 = vrot.slane %v4520, %v4713
    %v4715 = vrot.slane %v4714, 7
    %v4716 = vrot.slane %v4715, 2
    %4717 = vrot.lane.b32.xlu0 %v4716, 16
    %v4718 = vpop.permute.xlu0 %4717
    %4720 = vst.msk [vmem:[#allocation5 + $0x6] sm:$0x1] %vm4548, %v4718
    %v4721 = vcombine.high %v4714, %v4714
    %4722 = vrot.lane.b32.xlu0 %v4721, 32
    %v4723 = vpop.permute.xlu0 %4722
    %4725 = vst.msk [vmem:[#allocation5 + $0x6] sm:$0x1] %vm4554, %v4723
    %v4726 = vrot.slane %v4721, 7
    %v4727 = vrot.slane %v4726, 2
    %4728 = vrot.lane.b32.xlu0 %v4727, 48
    %v4729 = vpop.permute.xlu0 %4728
    %4731 = vst.msk [vmem:[#allocation5 + $0x6] sm:$0x1] %vm4561, %v4729
    %v4732 = vcombine.high %v4520, %v4520
    %v4734 = vunpack.c.l.s4 1983009808
    %v4735 = vunpack.c.0.s8 %v4734
    %v4736 = vlaneseq
    %v4737 = vshrl.u32 %v4736, 7
    %v4738 = vsub.s32 %v4735, %v4737
    %v4739 = vrot.slane %v4732, %v4738
    %4740 = vrot.lane.b32.xlu0 %v4739, 64
    %v4741 = vpop.permute.xlu0 %4740
    %4743 = vst.msk [vmem:[#allocation5 + $0x6] sm:$0x1] %vm4574, %v4741
    %v4744 = vrot.slane %v4739, 7
    %v4745 = vrot.slane %v4744, 2
    %4746 = vrot.lane.b32.xlu0 %v4745, 80
    %v4747 = vpop.permute.xlu0 %4746
    %4749 = vst.msk [vmem:[#allocation5 + $0x6] sm:$0x1] %vm4581, %v4747
    %v4750 = vcombine.high %v4739, %v4739
    %4751 = vrot.lane.b32.xlu0 %v4750, 96
    %v4752 = vpop.permute.xlu0 %4751
    %4754 = vst.msk [vmem:[#allocation5 + $0x6] sm:$0x1] %vm4587, %v4752
    %v4755 = vrot.slane %v4750, 7
    %v4756 = vrot.slane %v4755, 2
    %4757 = vrot.lane.b32.xlu0 %v4756, 112
    %v4758 = vpop.permute.xlu0 %4757
    %4760 = vst.msk [vmem:[#allocation5 + $0x6] sm:$0x1] %vm4594, %v4758
    %4761 = vrot.lane.b32.xlu0 %v4542, 112
    %v4762 = vpop.permute.xlu0 %4761
    %4764 = vst.msk [vmem:[#allocation5 + $0x1] sm:$0x1] %vm4533, %v4762
    %4766 = vst.msk [vmem:[#allocation5 + $0x1] sm:$0x1] %vm4548, %v4544
    %4767 = vrot.lane.b32.xlu0 %v4550, 16
    %v4768 = vpop.permute.xlu0 %4767
    %4770 = vst.msk [vmem:[#allocation5 + $0x1] sm:$0x1] %vm4554, %v4768
    %4771 = vrot.lane.b32.xlu0 %v4557, 32
    %v4772 = vpop.permute.xlu0 %4771
    %4774 = vst.msk [vmem:[#allocation5 + $0x1] sm:$0x1] %vm4561, %v4772
    %4775 = vrot.lane.b32.xlu0 %v4570, 48
    %v4776 = vpop.permute.xlu0 %4775
    %4778 = vst.msk [vmem:[#allocation5 + $0x1] sm:$0x1] %vm4574, %v4776
    %4779 = vrot.lane.b32.xlu0 %v4577, 64
    %v4780 = vpop.permute.xlu0 %4779
    %4782 = vst.msk [vmem:[#allocation5 + $0x1] sm:$0x1] %vm4581, %v4780
    %4783 = vrot.lane.b32.xlu0 %v4583, 80
    %v4784 = vpop.permute.xlu0 %4783
    %4786 = vst.msk [vmem:[#allocation5 + $0x1] sm:$0x1] %vm4587, %v4784
    %4787 = vrot.lane.b32.xlu0 %v4590, 96
    %v4788 = vpop.permute.xlu0 %4787
    %4790 = vst.msk [vmem:[#allocation5 + $0x1] sm:$0x1] %vm4594, %v4788
    %4791 = vrot.lane.b32.xlu0 %v4604, 112
    %v4792 = vpop.permute.xlu0 %4791
    %4794 = vst.msk [vmem:[#allocation5 + $0x3] sm:$0x1] %vm4533, %v4792
    %4796 = vst.msk [vmem:[#allocation5 + $0x3] sm:$0x1] %vm4548, %v4606
    %4797 = vrot.lane.b32.xlu0 %v4611, 16
    %v4798 = vpop.permute.xlu0 %4797
    %4800 = vst.msk [vmem:[#allocation5 + $0x3] sm:$0x1] %vm4554, %v4798
    %4801 = vrot.lane.b32.xlu0 %v4617, 32
    %v4802 = vpop.permute.xlu0 %4801
    %4804 = vst.msk [vmem:[#allocation5 + $0x3] sm:$0x1] %vm4561, %v4802
    %4805 = vrot.lane.b32.xlu0 %v4629, 48
    %v4806 = vpop.permute.xlu0 %4805
    %4808 = vst.msk [vmem:[#allocation5 + $0x3] sm:$0x1] %vm4574, %v4806
    %4809 = vrot.lane.b32.xlu0 %v4635, 64
    %v4810 = vpop.permute.xlu0 %4809
    %4812 = vst.msk [vmem:[#allocation5 + $0x3] sm:$0x1] %vm4581, %v4810
    %4813 = vrot.lane.b32.xlu0 %v4640, 80
    %v4814 = vpop.permute.xlu0 %4813
    %4816 = vst.msk [vmem:[#allocation5 + $0x3] sm:$0x1] %vm4587, %v4814
    %4817 = vrot.lane.b32.xlu0 %v4646, 96
    %v4818 = vpop.permute.xlu0 %4817
    %4820 = vst.msk [vmem:[#allocation5 + $0x3] sm:$0x1] %vm4594, %v4818
    %4821 = vrot.lane.b32.xlu0 %v4659, 112
    %v4822 = vpop.permute.xlu0 %4821
    %4824 = vst.msk [vmem:[#allocation5 + $0x5] sm:$0x1] %vm4533, %v4822
    %4826 = vst.msk [vmem:[#allocation5 + $0x5] sm:$0x1] %vm4548, %v4661
    %4827 = vrot.lane.b32.xlu0 %v4666, 16
    %v4828 = vpop.permute.xlu0 %4827
    %4830 = vst.msk [vmem:[#allocation5 + $0x5] sm:$0x1] %vm4554, %v4828
    %4831 = vrot.lane.b32.xlu0 %v4672, 32
    %v4832 = vpop.permute.xlu0 %4831
    %4834 = vst.msk [vmem:[#allocation5 + $0x5] sm:$0x1] %vm4561, %v4832
    %4835 = vrot.lane.b32.xlu0 %v4684, 48
    %v4836 = vpop.permute.xlu0 %4835
    %4838 = vst.msk [vmem:[#allocation5 + $0x5] sm:$0x1] %vm4574, %v4836
    %4839 = vrot.lane.b32.xlu0 %v4690, 64
    %v4840 = vpop.permute.xlu0 %4839
    %4842 = vst.msk [vmem:[#allocation5 + $0x5] sm:$0x1] %vm4581, %v4840
    %4843 = vrot.lane.b32.xlu0 %v4695, 80
    %v4844 = vpop.permute.xlu0 %4843
    %4846 = vst.msk [vmem:[#allocation5 + $0x5] sm:$0x1] %vm4587, %v4844
    %4847 = vrot.lane.b32.xlu0 %v4701, 96
    %v4848 = vpop.permute.xlu0 %4847
    %4850 = vst.msk [vmem:[#allocation5 + $0x5] sm:$0x1] %vm4594, %v4848
    %4851 = vrot.lane.b32.xlu0 %v4714, 112
    %v4852 = vpop.permute.xlu0 %4851
    %4854 = vst.msk [vmem:[#allocation5 + $0x7] sm:$0x1] %vm4533, %v4852
    %4856 = vst.msk [vmem:[#allocation5 + $0x7] sm:$0x1] %vm4548, %v4716
    %4857 = vrot.lane.b32.xlu0 %v4721, 16
    %v4858 = vpop.permute.xlu0 %4857
    %4860 = vst.msk [vmem:[#allocation5 + $0x7] sm:$0x1] %vm4554, %v4858
    %4861 = vrot.lane.b32.xlu0 %v4727, 32
    %v4862 = vpop.permute.xlu0 %4861
    %4864 = vst.msk [vmem:[#allocation5 + $0x7] sm:$0x1] %vm4561, %v4862
    %4865 = vrot.lane.b32.xlu0 %v4739, 48
    %v4866 = vpop.permute.xlu0 %4865
    %4868 = vst.msk [vmem:[#allocation5 + $0x7] sm:$0x1] %vm4574, %v4866
    %4869 = vrot.lane.b32.xlu0 %v4745, 64
    %v4870 = vpop.permute.xlu0 %4869
    %4872 = vst.msk [vmem:[#allocation5 + $0x7] sm:$0x1] %vm4581, %v4870
    %4873 = vrot.lane.b32.xlu0 %v4750, 80
    %v4874 = vpop.permute.xlu0 %4873
    %4876 = vst.msk [vmem:[#allocation5 + $0x7] sm:$0x1] %vm4587, %v4874
    %4877 = vrot.lane.b32.xlu0 %v4756, 96
    %v4878 = vpop.permute.xlu0 %4877
    %4880 = vst.msk [vmem:[#allocation5 + $0x7] sm:$0x1] %vm4594, %v4878
    // Predicated region
    $region14: #{encoder_forward.1} parent=1 // pred_check
      _
    $region15: #{encoder_forward.1} parent=1 // pred_check_branch
      %4882 = sbr.rel (0) target = $region17
    $region16: #{encoder_forward.1} parent=1 // pred_region
      %s4884 = ssub.s32 128, 128
      %4885 = vsyncadd [#allocation6], %s4884
      %s4887 = sshll.u32 [#allocation5], 4
      %s4888 = int_to_ptr.vmem [resolvable:$true] %s4887
      %4890 = dma.vmem_to_hbm [thread:$0]  %s4888, 128, %s3, [#allocation6]
    $region17: #{encoder_forward.1} parent=1 // pred_fallthru
      _
    // Predicated region
    $region18: #{encoder_forward.1} parent=1 // pred_check
      _
    $region19: #{encoder_forward.1} parent=1 // pred_check_branch
      %4892 = sbr.rel (0) target = $region21
    $region20: #{encoder_forward.1} parent=1 // pred_region
      %4893 = dma.done [#allocation6], 128
    $region21: #{encoder_forward.1} parent=1 // pred_fallthru
      _
    %4894 = vsyncpa [#allocation6], 1

</llo_original>
